<compile_context>
chip_gen: v5e
topology: v5e:2x2
jax: 0.10.0
libtpu: 0.0.40
codegen_flags: <defaults>
</compile_context>

<pallas_src>
import jax
import jax.numpy as jnp
from jax.experimental import pallas as pl
from jax.experimental.pallas import tpu as pltpu

NEG_SLOPE = 0.1
BN_EPS = 1e-5
NUM_RELATIONS = 50
NUM_RELATIONS_PAD = 64          # padded relation count (lane/sublane friendly)
NUM_MID_LAYERS = 3
NUM_LAYERS = NUM_MID_LAYERS + 2
HIDDEN_DIM = 128


# ----------------------------------------------------------------------------- fused kernel
def _fused_deep_rgcn_kernel(x0_ref, w0_ref, wrest_ref, bias_ref, gamma_ref, beta_ref,
                            srcn_ref, dstt_ref, relt_ref, reler_ref, comp_ref, o_ref):
    H = HIDDEN_DIM
    n_nodes = x0_ref.shape[0]
    inv_n = 1.0 / float(n_nodes)

    # ---- graph aggregation coefficients, built dense on the MXU (no scatter/gather) ----
    dstt = dstt_ref[...]                                     # (N, E)  f32, one-hot dst
    relt = relt_ref[...]                                     # (RP, E) f32, one-hot rel (rows)
    reler = reler_ref[...]                                   # (E, RP) f32, one-hot rel (cols)
    src_bf = srcn_ref[...]                                   # (E, N)  bf16, one-hot src

    degt = jnp.dot(dstt, reler, preferred_element_type=jnp.float32)        # (N, RP)
    inv_deg = 1.0 / jnp.maximum(degt, 1.0)                                  # (N, RP)
    p = jnp.dot(inv_deg, relt, preferred_element_type=jnp.float32)          # (N, E)
    g = dstt * p                                                            # (N, E): 1/deg at row dst_e
    comp_e = jnp.dot(comp_ref[...], relt, preferred_element_type=jnp.float32)  # (L, E)

    biases = bias_ref[...]    # (5, H) f32 (zero-padded classes for last layer)
    gammas = gamma_ref[...]   # (4, H) f32 (norms 1..4; norm 0 unused by reference forward)
    betas = beta_ref[...]     # (4, H) f32

    def bn_lrelu(x, gamma, beta):
        # BatchNorm1d training mode (batch statistics, biased variance), single-pass stats.
        mean = jnp.sum(x, axis=0, keepdims=True) * inv_n
        ex2 = jnp.sum(x * x, axis=0, keepdims=True) * inv_n
        var = ex2 - mean * mean
        y = (x - mean) * jax.lax.rsqrt(var + BN_EPS) * gamma + beta
        return jnp.where(y >= 0, y, NEG_SLOPE * y)

    def conv(layer_idx, h_bf16, w_bf16):
        # y = h @ [base | root]  -> one 256-wide MXU matmul, f32 accumulation.
        y = jnp.dot(h_bf16, w_bf16, preferred_element_type=jnp.float32)     # (N, 2H)
        hb = y[:, :H].astype(jnp.bfloat16)                                  # x @ base
        hr = y[:, H:]                                                       # x @ root
        # per-layer aggregation matrix M_l = (dstT * 1/deg * comp_l[rel]) @ src_onehot
        wdstt = (g * comp_e[layer_idx:layer_idx + 1, :]).astype(jnp.bfloat16)   # (N, E)
        m = jnp.dot(wdstt, src_bf, preferred_element_type=jnp.float32)      # (N, N)
        agg = jnp.dot(m.astype(jnp.bfloat16), hb, preferred_element_type=jnp.float32)
        return agg + hr + biases[layer_idx:layer_idx + 1]

    # layer 0: num_features -> hidden (no preceding norm in the reference forward)
    x = conv(0, x0_ref[...], w0_ref[...])

    # mid layers: norm -> leaky_relu -> conv + residual
    for i in range(NUM_MID_LAYERS):
        h = bn_lrelu(x, gammas[i:i + 1], betas[i:i + 1])
        x = conv(i + 1, h.astype(jnp.bfloat16), wrest_ref[i]) + x

    # final: norm -> leaky_relu -> conv -> leaky_relu (lane-dense 128-wide, padded classes)
    h = bn_lrelu(x, gammas[NUM_MID_LAYERS:NUM_MID_LAYERS + 1],
                 betas[NUM_MID_LAYERS:NUM_MID_LAYERS + 1])
    out = conv(NUM_MID_LAYERS + 1, h.astype(jnp.bfloat16), wrest_ref[NUM_MID_LAYERS])
    o_ref[...] = jnp.where(out >= 0, out, NEG_SLOPE * out)


# ----------------------------------------------------------------------------- params
def _glorot(key, shape):
    fan_in, fan_out = shape[-2], shape[-1]
    limit = (6.0 / (fan_in + fan_out)) ** 0.5
    return jax.random.uniform(key, shape, jnp.float32, -limit, limit)


def init_params(key, num_features, hidden, num_classes, num_relations, num_mid_layers):
    dims = [(num_features, hidden)] + [(hidden, hidden)] * num_mid_layers + [(hidden, num_classes)]
    convs = []
    for fin, fout in dims:
        key, k1, k2, k3 = jax.random.split(key, 4)
        convs.append(
            dict(
                base=_glorot(k1, (fin, fout)),                       # num_bases = 1
                comp=_glorot(k2, (num_relations, 1)).reshape(-1),    # per-relation coeff
                root=_glorot(k3, (fin, fout)),
                bias=jnp.zeros((fout,), jnp.float32),
            )
        )
    # norms[0] is defined by the module but never applied in its forward (kept for parity).
    norm_dims = [num_features] + [hidden] * (num_mid_layers + 1)
    norms = [
        dict(gamma=jnp.ones((f,), jnp.float32), beta=jnp.zeros((f,), jnp.float32))
        for f in norm_dims
    ]
    return dict(convs=convs, norms=norms)


# ----------------------------------------------------------------------------- forward
def deep_rgcn_forward(params, x, edge_index, edge_type, edge_distance):
    del edge_distance  # unused by the reference forward
    n = x.shape[0]
    et = edge_type.reshape(-1).astype(jnp.int32)
    src = edge_index[0].astype(jnp.int32)
    dst = edge_index[1].astype(jnp.int32)
    convs, norms = params["convs"], params["norms"]
    num_classes = convs[-1]["base"].shape[1]
    H = HIDDEN_DIM
    RP = NUM_RELATIONS_PAD

    # --- dense one-hot edge encodings (pure broadcast compares; no scatter / gather) ------
    node_ids = jnp.arange(n, dtype=jnp.int32)
    rel_ids = jnp.arange(RP, dtype=jnp.int32)
    srcn = (src[:, None] == node_ids[None, :]).astype(jnp.bfloat16)   # (E, N)
    dstt = (node_ids[:, None] == dst[None, :]).astype(jnp.float32)    # (N, E)
    relt = (rel_ids[:, None] == et[None, :]).astype(jnp.float32)      # (RP, E)
    reler = (et[:, None] == rel_ids[None, :]).astype(jnp.float32)     # (E, RP)

    comp_all = jnp.stack([c["comp"] for c in convs])                  # (L, R)
    comp_pad = jnp.pad(comp_all, ((0, 0), (0, RP - NUM_RELATIONS))).astype(jnp.float32)

    # --- pack weights: W_l = [base_l | root_l]; last layer zero-padded to H output lanes --
    def pad_cols(w):
        return jnp.pad(w, ((0, 0), (0, H - w.shape[1])))

    w0 = jnp.concatenate([convs[0]["base"], convs[0]["root"]], axis=1).astype(jnp.bfloat16)
    wrest = jnp.stack(
        [jnp.concatenate([pad_cols(c["base"]), pad_cols(c["root"])], axis=1) for c in convs[1:]]
    ).astype(jnp.bfloat16)                                            # (4, H, 2H)

    biases = jnp.stack(
        [jnp.pad(c["bias"], (0, H - c["bias"].shape[0])) for c in convs]
    ).astype(jnp.float32)                                             # (5, H)
    gammas = jnp.stack([g["gamma"] for g in norms[1:]]).astype(jnp.float32)  # (4, H)
    betas = jnp.stack([g["beta"] for g in norms[1:]]).astype(jnp.float32)    # (4, H)

    x0 = x.astype(jnp.bfloat16)

    args = [x0, w0, wrest, biases, gammas, betas, srcn, dstt, relt, reler, comp_pad]
    vmem_spec = pl.BlockSpec(memory_space=pltpu.MemorySpace.VMEM)
    out = pl.pallas_call(
        _fused_deep_rgcn_kernel,
        in_specs=[vmem_spec] * len(args),
        out_specs=vmem_spec,
        out_shape=jax.ShapeDtypeStruct((n, H), jnp.float32),
    )(*args)
    return out[:, :num_classes]


# ----------------------------------------------------------------------------- main
if __name__ == "__main__":
    NUM_FEATURES = 768
    NUM_CLASSES = 9
    N_NODES = 64
    N_EDGES = 256

    key = jax.random.PRNGKey(0)
    kp, kx, ke_src, ke_dst, kt, kd = jax.random.split(key, 6)

    params = init_params(kp, NUM_FEATURES, HIDDEN_DIM, NUM_CLASSES,
                         NUM_RELATIONS, NUM_MID_LAYERS)

    x = jax.random.normal(kx, (N_NODES, NUM_FEATURES), jnp.float32)
    edge_index = jnp.stack(
        [
            jax.random.randint(ke_src, (N_EDGES,), 0, N_NODES),
            jax.random.randint(ke_dst, (N_EDGES,), 0, N_NODES),
        ],
        axis=0,
    ).astype(jnp.int32)
    edge_type = jax.random.randint(kt, (N_EDGES, 1), 0, NUM_RELATIONS).astype(jnp.int32)
    edge_distance = jax.random.normal(kd, (N_EDGES, 2), jnp.float32)

    fwd = jax.jit(deep_rgcn_forward)
    out = fwd(params, x, edge_index, edge_type, edge_distance)
    out = jax.block_until_ready(out)
    assert out.shape == (N_NODES, NUM_CLASSES) and out.dtype == jnp.float32
    assert bool(jnp.all(jnp.isfinite(out)))
    print("KERNEL_OK")
</pallas_src>

<mosaic_0001>
module attributes {stable_mosaic.version = 11 : i64} {
  func.func @_fused_deep_rgcn_kernel(%arg0: memref<64x768xbf16, #tpu.memory_space<vmem>>, %arg1: memref<768x256xbf16, #tpu.memory_space<vmem>>, %arg2: memref<4x128x256xbf16, #tpu.memory_space<vmem>>, %arg3: memref<5x128xf32, #tpu.memory_space<vmem>>, %arg4: memref<4x128xf32, #tpu.memory_space<vmem>>, %arg5: memref<4x128xf32, #tpu.memory_space<vmem>>, %arg6: memref<256x64xbf16, #tpu.memory_space<vmem>>, %arg7: memref<64x256xf32, #tpu.memory_space<vmem>>, %arg8: memref<64x256xf32, #tpu.memory_space<vmem>>, %arg9: memref<256x64xf32, #tpu.memory_space<vmem>>, %arg10: memref<5x64xf32, #tpu.memory_space<vmem>>, %arg11: memref<64x128xf32, #tpu.memory_space<vmem>>) attributes {dimension_semantics = [], scalar_prefetch = 0 : i64, scratch_operands = 0 : i64, tpu.core_type = #tpu.core_type<tc>} {
    %c0 = arith.constant 0 : index
    %c0_0 = arith.constant 0 : index
    %0 = vector.load %arg7[%c0, %c0_0] : memref<64x256xf32, #tpu.memory_space<vmem>>, vector<64x256xf32>
    %c0_1 = arith.constant 0 : index
    %c0_2 = arith.constant 0 : index
    %1 = vector.load %arg8[%c0_1, %c0_2] : memref<64x256xf32, #tpu.memory_space<vmem>>, vector<64x256xf32>
    %c0_3 = arith.constant 0 : index
    %c0_4 = arith.constant 0 : index
    %2 = vector.load %arg9[%c0_3, %c0_4] : memref<256x64xf32, #tpu.memory_space<vmem>>, vector<256x64xf32>
    %c0_5 = arith.constant 0 : index
    %c0_6 = arith.constant 0 : index
    %3 = vector.load %arg6[%c0_5, %c0_6] : memref<256x64xbf16, #tpu.memory_space<vmem>>, vector<256x64xbf16>
    %cst = arith.constant dense<0.000000e+00> : vector<64x64xf32>
    %4 = tpu.matmul %0, %2, %cst {dimension_numbers = #tpu.dot_dimension_numbers<[1], [0], [0], [1], [0, 0, 1, 1], [], []>} : vector<64x256xf32>, vector<256x64xf32>, vector<64x64xf32> -> vector<64x64xf32>
    %cst_7 = arith.constant 1.000000e+00 : f32
    %5 = vector.broadcast %cst_7 : f32 to vector<64x64xf32>
    %6 = arith.maximumf %4, %5 : vector<64x64xf32>
    %cst_8 = arith.constant 1.000000e+00 : f32
    %7 = vector.broadcast %cst_8 : f32 to vector<64x64xf32>
    %8 = arith.divf %7, %6 : vector<64x64xf32>
    %cst_9 = arith.constant dense<0.000000e+00> : vector<64x256xf32>
    %9 = tpu.matmul %8, %1, %cst_9 {dimension_numbers = #tpu.dot_dimension_numbers<[1], [0], [0], [1], [0, 0, 1, 1], [], []>} : vector<64x64xf32>, vector<64x256xf32>, vector<64x256xf32> -> vector<64x256xf32>
    %10 = arith.mulf %0, %9 : vector<64x256xf32>
    %c0_10 = arith.constant 0 : index
    %c0_11 = arith.constant 0 : index
    %11 = vector.load %arg10[%c0_10, %c0_11] : memref<5x64xf32, #tpu.memory_space<vmem>>, vector<5x64xf32>
    %cst_12 = arith.constant dense<0.000000e+00> : vector<5x256xf32>
    %12 = tpu.matmul %11, %1, %cst_12 {dimension_numbers = #tpu.dot_dimension_numbers<[1], [0], [0], [1], [0, 0, 1, 1], [], []>} : vector<5x64xf32>, vector<64x256xf32>, vector<5x256xf32> -> vector<5x256xf32>
    %c0_13 = arith.constant 0 : index
    %c0_14 = arith.constant 0 : index
    %13 = vector.load %arg3[%c0_13, %c0_14] : memref<5x128xf32, #tpu.memory_space<vmem>>, vector<5x128xf32>
    %c0_15 = arith.constant 0 : index
    %c0_16 = arith.constant 0 : index
    %14 = vector.load %arg4[%c0_15, %c0_16] : memref<4x128xf32, #tpu.memory_space<vmem>>, vector<4x128xf32>
    %c0_17 = arith.constant 0 : index
    %c0_18 = arith.constant 0 : index
    %15 = vector.load %arg5[%c0_17, %c0_18] : memref<4x128xf32, #tpu.memory_space<vmem>>, vector<4x128xf32>
    %c0_19 = arith.constant 0 : index
    %c0_20 = arith.constant 0 : index
    %16 = vector.load %arg0[%c0_19, %c0_20] : memref<64x768xbf16, #tpu.memory_space<vmem>>, vector<64x768xbf16>
    %c0_21 = arith.constant 0 : index
    %c0_22 = arith.constant 0 : index
    %17 = vector.load %arg1[%c0_21, %c0_22] : memref<768x256xbf16, #tpu.memory_space<vmem>>, vector<768x256xbf16>
    %cst_23 = arith.constant dense<0.000000e+00> : vector<64x256xf32>
    %18 = tpu.matmul %16, %17, %cst_23 {dimension_numbers = #tpu.dot_dimension_numbers<[1], [0], [0], [1], [0, 0, 1, 1], [], []>} : vector<64x768xbf16>, vector<768x256xbf16>, vector<64x256xf32> -> vector<64x256xf32>
    %19 = vector.extract_strided_slice %18 {offsets = [0, 0], sizes = [64, 128], strides = [1, 1]} : vector<64x256xf32> to vector<64x128xf32>
    %20 = arith.truncf %19 : vector<64x128xf32> to vector<64x128xbf16>
    %21 = vector.extract_strided_slice %18 {offsets = [0, 128], sizes = [64, 128], strides = [1, 1]} : vector<64x256xf32> to vector<64x128xf32>
    %22 = vector.extract_strided_slice %12 {offsets = [0, 0], sizes = [1, 256], strides = [1, 1]} : vector<5x256xf32> to vector<1x256xf32>
    %23 = vector.broadcast %22 : vector<1x256xf32> to vector<64x256xf32>
    %24 = arith.mulf %10, %23 : vector<64x256xf32>
    %25 = arith.truncf %24 : vector<64x256xf32> to vector<64x256xbf16>
    %cst_24 = arith.constant dense<0.000000e+00> : vector<64x64xf32>
    %26 = tpu.matmul %25, %3, %cst_24 {dimension_numbers = #tpu.dot_dimension_numbers<[1], [0], [0], [1], [0, 0, 1, 1], [], []>} : vector<64x256xbf16>, vector<256x64xbf16>, vector<64x64xf32> -> vector<64x64xf32>
    %27 = arith.truncf %26 : vector<64x64xf32> to vector<64x64xbf16>
    %cst_25 = arith.constant dense<0.000000e+00> : vector<64x128xf32>
    %28 = tpu.matmul %27, %20, %cst_25 {dimension_numbers = #tpu.dot_dimension_numbers<[1], [0], [0], [1], [0, 0, 1, 1], [], []>} : vector<64x64xbf16>, vector<64x128xbf16>, vector<64x128xf32> -> vector<64x128xf32>
    %29 = arith.addf %28, %21 : vector<64x128xf32>
    %30 = vector.extract_strided_slice %13 {offsets = [0, 0], sizes = [1, 128], strides = [1, 1]} : vector<5x128xf32> to vector<1x128xf32>
    %31 = vector.broadcast %30 : vector<1x128xf32> to vector<64x128xf32>
    %32 = arith.addf %29, %31 : vector<64x128xf32>
    %33 = vector.extract_strided_slice %14 {offsets = [0, 0], sizes = [1, 128], strides = [1, 1]} : vector<4x128xf32> to vector<1x128xf32>
    %34 = vector.extract_strided_slice %15 {offsets = [0, 0], sizes = [1, 128], strides = [1, 1]} : vector<4x128xf32> to vector<1x128xf32>
    %cst_26 = arith.constant dense<0.000000e+00> : vector<128xf32>
    %35 = vector.multi_reduction <add>, %32, %cst_26 [0] : vector<64x128xf32> to vector<128xf32>
    %36 = vector.shape_cast %35 : vector<128xf32> to vector<1x128xf32>
    %cst_27 = arith.constant 1.562500e-02 : f32
    %37 = vector.broadcast %cst_27 : f32 to vector<1x128xf32>
    %38 = arith.mulf %36, %37 : vector<1x128xf32>
    %39 = arith.mulf %32, %32 : vector<64x128xf32>
    %cst_28 = arith.constant dense<0.000000e+00> : vector<128xf32>
    %40 = vector.multi_reduction <add>, %39, %cst_28 [0] : vector<64x128xf32> to vector<128xf32>
    %41 = vector.shape_cast %40 : vector<128xf32> to vector<1x128xf32>
    %cst_29 = arith.constant 1.562500e-02 : f32
    %42 = vector.broadcast %cst_29 : f32 to vector<1x128xf32>
    %43 = arith.mulf %41, %42 : vector<1x128xf32>
    %44 = arith.mulf %38, %38 : vector<1x128xf32>
    %45 = arith.subf %43, %44 : vector<1x128xf32>
    %46 = vector.broadcast %38 : vector<1x128xf32> to vector<64x128xf32>
    %47 = arith.subf %32, %46 : vector<64x128xf32>
    %cst_30 = arith.constant 9.99999974E-6 : f32
    %48 = vector.broadcast %cst_30 : f32 to vector<1x128xf32>
    %49 = arith.addf %45, %48 : vector<1x128xf32>
    %50 = math.rsqrt %49 : vector<1x128xf32>
    %51 = vector.broadcast %50 : vector<1x128xf32> to vector<64x128xf32>
    %52 = arith.mulf %47, %51 : vector<64x128xf32>
    %53 = vector.broadcast %33 : vector<1x128xf32> to vector<64x128xf32>
    %54 = arith.mulf %52, %53 : vector<64x128xf32>
    %55 = vector.broadcast %34 : vector<1x128xf32> to vector<64x128xf32>
    %56 = arith.addf %54, %55 : vector<64x128xf32>
    %cst_31 = arith.constant 0.000000e+00 : f32
    %57 = vector.broadcast %cst_31 : f32 to vector<64x128xf32>
    %58 = arith.cmpf oge, %56, %57 : vector<64x128xf32>
    %cst_32 = arith.constant 1.000000e-01 : f32
    %59 = vector.broadcast %cst_32 : f32 to vector<64x128xf32>
    %60 = arith.mulf %59, %56 : vector<64x128xf32>
    %61 = arith.select %58, %56, %60 : vector<64x128xi1>, vector<64x128xf32>
    %62 = arith.truncf %61 : vector<64x128xf32> to vector<64x128xbf16>
    %c0_33 = arith.constant 0 : index
    %c0_34 = arith.constant 0 : index
    %c0_35 = arith.constant 0 : index
    %63 = vector.load %arg2[%c0_33, %c0_34, %c0_35] : memref<4x128x256xbf16, #tpu.memory_space<vmem>>, vector<1x128x256xbf16>
    %64 = vector.shape_cast %63 : vector<1x128x256xbf16> to vector<128x256xbf16>
    %cst_36 = arith.constant dense<0.000000e+00> : vector<64x256xf32>
    %65 = tpu.matmul %62, %64, %cst_36 {dimension_numbers = #tpu.dot_dimension_numbers<[1], [0], [0], [1], [0, 0, 1, 1], [], []>} : vector<64x128xbf16>, vector<128x256xbf16>, vector<64x256xf32> -> vector<64x256xf32>
    %66 = vector.extract_strided_slice %65 {offsets = [0, 0], sizes = [64, 128], strides = [1, 1]} : vector<64x256xf32> to vector<64x128xf32>
    %67 = arith.truncf %66 : vector<64x128xf32> to vector<64x128xbf16>
    %68 = vector.extract_strided_slice %65 {offsets = [0, 128], sizes = [64, 128], strides = [1, 1]} : vector<64x256xf32> to vector<64x128xf32>
    %69 = vector.extract_strided_slice %12 {offsets = [1, 0], sizes = [1, 256], strides = [1, 1]} : vector<5x256xf32> to vector<1x256xf32>
    %70 = vector.broadcast %69 : vector<1x256xf32> to vector<64x256xf32>
    %71 = arith.mulf %10, %70 : vector<64x256xf32>
    %72 = arith.truncf %71 : vector<64x256xf32> to vector<64x256xbf16>
    %cst_37 = arith.constant dense<0.000000e+00> : vector<64x64xf32>
    %73 = tpu.matmul %72, %3, %cst_37 {dimension_numbers = #tpu.dot_dimension_numbers<[1], [0], [0], [1], [0, 0, 1, 1], [], []>} : vector<64x256xbf16>, vector<256x64xbf16>, vector<64x64xf32> -> vector<64x64xf32>
    %74 = arith.truncf %73 : vector<64x64xf32> to vector<64x64xbf16>
    %cst_38 = arith.constant dense<0.000000e+00> : vector<64x128xf32>
    %75 = tpu.matmul %74, %67, %cst_38 {dimension_numbers = #tpu.dot_dimension_numbers<[1], [0], [0], [1], [0, 0, 1, 1], [], []>} : vector<64x64xbf16>, vector<64x128xbf16>, vector<64x128xf32> -> vector<64x128xf32>
    %76 = arith.addf %75, %68 : vector<64x128xf32>
    %77 = vector.extract_strided_slice %13 {offsets = [1, 0], sizes = [1, 128], strides = [1, 1]} : vector<5x128xf32> to vector<1x128xf32>
    %78 = vector.broadcast %77 : vector<1x128xf32> to vector<64x128xf32>
    %79 = arith.addf %76, %78 : vector<64x128xf32>
    %80 = arith.addf %79, %32 : vector<64x128xf32>
    %81 = vector.extract_strided_slice %14 {offsets = [1, 0], sizes = [1, 128], strides = [1, 1]} : vector<4x128xf32> to vector<1x128xf32>
    %82 = vector.extract_strided_slice %15 {offsets = [1, 0], sizes = [1, 128], strides = [1, 1]} : vector<4x128xf32> to vector<1x128xf32>
    %cst_39 = arith.constant dense<0.000000e+00> : vector<128xf32>
    %83 = vector.multi_reduction <add>, %80, %cst_39 [0] : vector<64x128xf32> to vector<128xf32>
    %84 = vector.shape_cast %83 : vector<128xf32> to vector<1x128xf32>
    %cst_40 = arith.constant 1.562500e-02 : f32
    %85 = vector.broadcast %cst_40 : f32 to vector<1x128xf32>
    %86 = arith.mulf %84, %85 : vector<1x128xf32>
    %87 = arith.mulf %80, %80 : vector<64x128xf32>
    %cst_41 = arith.constant dense<0.000000e+00> : vector<128xf32>
    %88 = vector.multi_reduction <add>, %87, %cst_41 [0] : vector<64x128xf32> to vector<128xf32>
    %89 = vector.shape_cast %88 : vector<128xf32> to vector<1x128xf32>
    %cst_42 = arith.constant 1.562500e-02 : f32
    %90 = vector.broadcast %cst_42 : f32 to vector<1x128xf32>
    %91 = arith.mulf %89, %90 : vector<1x128xf32>
    %92 = arith.mulf %86, %86 : vector<1x128xf32>
    %93 = arith.subf %91, %92 : vector<1x128xf32>
    %94 = vector.broadcast %86 : vector<1x128xf32> to vector<64x128xf32>
    %95 = arith.subf %80, %94 : vector<64x128xf32>
    %cst_43 = arith.constant 9.99999974E-6 : f32
    %96 = vector.broadcast %cst_43 : f32 to vector<1x128xf32>
    %97 = arith.addf %93, %96 : vector<1x128xf32>
    %98 = math.rsqrt %97 : vector<1x128xf32>
    %99 = vector.broadcast %98 : vector<1x128xf32> to vector<64x128xf32>
    %100 = arith.mulf %95, %99 : vector<64x128xf32>
    %101 = vector.broadcast %81 : vector<1x128xf32> to vector<64x128xf32>
    %102 = arith.mulf %100, %101 : vector<64x128xf32>
    %103 = vector.broadcast %82 : vector<1x128xf32> to vector<64x128xf32>
    %104 = arith.addf %102, %103 : vector<64x128xf32>
    %cst_44 = arith.constant 0.000000e+00 : f32
    %105 = vector.broadcast %cst_44 : f32 to vector<64x128xf32>
    %106 = arith.cmpf oge, %104, %105 : vector<64x128xf32>
    %cst_45 = arith.constant 1.000000e-01 : f32
    %107 = vector.broadcast %cst_45 : f32 to vector<64x128xf32>
    %108 = arith.mulf %107, %104 : vector<64x128xf32>
    %109 = arith.select %106, %104, %108 : vector<64x128xi1>, vector<64x128xf32>
    %110 = arith.truncf %109 : vector<64x128xf32> to vector<64x128xbf16>
    %c1 = arith.constant 1 : index
    %c0_46 = arith.constant 0 : index
    %c0_47 = arith.constant 0 : index
    %111 = vector.load %arg2[%c1, %c0_46, %c0_47] : memref<4x128x256xbf16, #tpu.memory_space<vmem>>, vector<1x128x256xbf16>
    %112 = vector.shape_cast %111 : vector<1x128x256xbf16> to vector<128x256xbf16>
    %cst_48 = arith.constant dense<0.000000e+00> : vector<64x256xf32>
    %113 = tpu.matmul %110, %112, %cst_48 {dimension_numbers = #tpu.dot_dimension_numbers<[1], [0], [0], [1], [0, 0, 1, 1], [], []>} : vector<64x128xbf16>, vector<128x256xbf16>, vector<64x256xf32> -> vector<64x256xf32>
    %114 = vector.extract_strided_slice %113 {offsets = [0, 0], sizes = [64, 128], strides = [1, 1]} : vector<64x256xf32> to vector<64x128xf32>
    %115 = arith.truncf %114 : vector<64x128xf32> to vector<64x128xbf16>
    %116 = vector.extract_strided_slice %113 {offsets = [0, 128], sizes = [64, 128], strides = [1, 1]} : vector<64x256xf32> to vector<64x128xf32>
    %117 = vector.extract_strided_slice %12 {offsets = [2, 0], sizes = [1, 256], strides = [1, 1]} : vector<5x256xf32> to vector<1x256xf32>
    %118 = vector.broadcast %117 : vector<1x256xf32> to vector<64x256xf32>
    %119 = arith.mulf %10, %118 : vector<64x256xf32>
    %120 = arith.truncf %119 : vector<64x256xf32> to vector<64x256xbf16>
    %cst_49 = arith.constant dense<0.000000e+00> : vector<64x64xf32>
    %121 = tpu.matmul %120, %3, %cst_49 {dimension_numbers = #tpu.dot_dimension_numbers<[1], [0], [0], [1], [0, 0, 1, 1], [], []>} : vector<64x256xbf16>, vector<256x64xbf16>, vector<64x64xf32> -> vector<64x64xf32>
    %122 = arith.truncf %121 : vector<64x64xf32> to vector<64x64xbf16>
    %cst_50 = arith.constant dense<0.000000e+00> : vector<64x128xf32>
    %123 = tpu.matmul %122, %115, %cst_50 {dimension_numbers = #tpu.dot_dimension_numbers<[1], [0], [0], [1], [0, 0, 1, 1], [], []>} : vector<64x64xbf16>, vector<64x128xbf16>, vector<64x128xf32> -> vector<64x128xf32>
    %124 = arith.addf %123, %116 : vector<64x128xf32>
    %125 = vector.extract_strided_slice %13 {offsets = [2, 0], sizes = [1, 128], strides = [1, 1]} : vector<5x128xf32> to vector<1x128xf32>
    %126 = vector.broadcast %125 : vector<1x128xf32> to vector<64x128xf32>
    %127 = arith.addf %124, %126 : vector<64x128xf32>
    %128 = arith.addf %127, %80 : vector<64x128xf32>
    %129 = vector.extract_strided_slice %14 {offsets = [2, 0], sizes = [1, 128], strides = [1, 1]} : vector<4x128xf32> to vector<1x128xf32>
    %130 = vector.extract_strided_slice %15 {offsets = [2, 0], sizes = [1, 128], strides = [1, 1]} : vector<4x128xf32> to vector<1x128xf32>
    %cst_51 = arith.constant dense<0.000000e+00> : vector<128xf32>
    %131 = vector.multi_reduction <add>, %128, %cst_51 [0] : vector<64x128xf32> to vector<128xf32>
    %132 = vector.shape_cast %131 : vector<128xf32> to vector<1x128xf32>
    %cst_52 = arith.constant 1.562500e-02 : f32
    %133 = vector.broadcast %cst_52 : f32 to vector<1x128xf32>
    %134 = arith.mulf %132, %133 : vector<1x128xf32>
    %135 = arith.mulf %128, %128 : vector<64x128xf32>
    %cst_53 = arith.constant dense<0.000000e+00> : vector<128xf32>
    %136 = vector.multi_reduction <add>, %135, %cst_53 [0] : vector<64x128xf32> to vector<128xf32>
    %137 = vector.shape_cast %136 : vector<128xf32> to vector<1x128xf32>
    %cst_54 = arith.constant 1.562500e-02 : f32
    %138 = vector.broadcast %cst_54 : f32 to vector<1x128xf32>
    %139 = arith.mulf %137, %138 : vector<1x128xf32>
    %140 = arith.mulf %134, %134 : vector<1x128xf32>
    %141 = arith.subf %139, %140 : vector<1x128xf32>
    %142 = vector.broadcast %134 : vector<1x128xf32> to vector<64x128xf32>
    %143 = arith.subf %128, %142 : vector<64x128xf32>
    %cst_55 = arith.constant 9.99999974E-6 : f32
    %144 = vector.broadcast %cst_55 : f32 to vector<1x128xf32>
    %145 = arith.addf %141, %144 : vector<1x128xf32>
    %146 = math.rsqrt %145 : vector<1x128xf32>
    %147 = vector.broadcast %146 : vector<1x128xf32> to vector<64x128xf32>
    %148 = arith.mulf %143, %147 : vector<64x128xf32>
    %149 = vector.broadcast %129 : vector<1x128xf32> to vector<64x128xf32>
    %150 = arith.mulf %148, %149 : vector<64x128xf32>
    %151 = vector.broadcast %130 : vector<1x128xf32> to vector<64x128xf32>
    %152 = arith.addf %150, %151 : vector<64x128xf32>
    %cst_56 = arith.constant 0.000000e+00 : f32
    %153 = vector.broadcast %cst_56 : f32 to vector<64x128xf32>
    %154 = arith.cmpf oge, %152, %153 : vector<64x128xf32>
    %cst_57 = arith.constant 1.000000e-01 : f32
    %155 = vector.broadcast %cst_57 : f32 to vector<64x128xf32>
    %156 = arith.mulf %155, %152 : vector<64x128xf32>
    %157 = arith.select %154, %152, %156 : vector<64x128xi1>, vector<64x128xf32>
    %158 = arith.truncf %157 : vector<64x128xf32> to vector<64x128xbf16>
    %c2 = arith.constant 2 : index
    %c0_58 = arith.constant 0 : index
    %c0_59 = arith.constant 0 : index
    %159 = vector.load %arg2[%c2, %c0_58, %c0_59] : memref<4x128x256xbf16, #tpu.memory_space<vmem>>, vector<1x128x256xbf16>
    %160 = vector.shape_cast %159 : vector<1x128x256xbf16> to vector<128x256xbf16>
    %cst_60 = arith.constant dense<0.000000e+00> : vector<64x256xf32>
    %161 = tpu.matmul %158, %160, %cst_60 {dimension_numbers = #tpu.dot_dimension_numbers<[1], [0], [0], [1], [0, 0, 1, 1], [], []>} : vector<64x128xbf16>, vector<128x256xbf16>, vector<64x256xf32> -> vector<64x256xf32>
    %162 = vector.extract_strided_slice %161 {offsets = [0, 0], sizes = [64, 128], strides = [1, 1]} : vector<64x256xf32> to vector<64x128xf32>
    %163 = arith.truncf %162 : vector<64x128xf32> to vector<64x128xbf16>
    %164 = vector.extract_strided_slice %161 {offsets = [0, 128], sizes = [64, 128], strides = [1, 1]} : vector<64x256xf32> to vector<64x128xf32>
    %165 = vector.extract_strided_slice %12 {offsets = [3, 0], sizes = [1, 256], strides = [1, 1]} : vector<5x256xf32> to vector<1x256xf32>
    %166 = vector.broadcast %165 : vector<1x256xf32> to vector<64x256xf32>
    %167 = arith.mulf %10, %166 : vector<64x256xf32>
    %168 = arith.truncf %167 : vector<64x256xf32> to vector<64x256xbf16>
    %cst_61 = arith.constant dense<0.000000e+00> : vector<64x64xf32>
    %169 = tpu.matmul %168, %3, %cst_61 {dimension_numbers = #tpu.dot_dimension_numbers<[1], [0], [0], [1], [0, 0, 1, 1], [], []>} : vector<64x256xbf16>, vector<256x64xbf16>, vector<64x64xf32> -> vector<64x64xf32>
    %170 = arith.truncf %169 : vector<64x64xf32> to vector<64x64xbf16>
    %cst_62 = arith.constant dense<0.000000e+00> : vector<64x128xf32>
    %171 = tpu.matmul %170, %163, %cst_62 {dimension_numbers = #tpu.dot_dimension_numbers<[1], [0], [0], [1], [0, 0, 1, 1], [], []>} : vector<64x64xbf16>, vector<64x128xbf16>, vector<64x128xf32> -> vector<64x128xf32>
    %172 = arith.addf %171, %164 : vector<64x128xf32>
    %173 = vector.extract_strided_slice %13 {offsets = [3, 0], sizes = [1, 128], strides = [1, 1]} : vector<5x128xf32> to vector<1x128xf32>
    %174 = vector.broadcast %173 : vector<1x128xf32> to vector<64x128xf32>
    %175 = arith.addf %172, %174 : vector<64x128xf32>
    %176 = arith.addf %175, %128 : vector<64x128xf32>
    %177 = vector.extract_strided_slice %14 {offsets = [3, 0], sizes = [1, 128], strides = [1, 1]} : vector<4x128xf32> to vector<1x128xf32>
    %178 = vector.extract_strided_slice %15 {offsets = [3, 0], sizes = [1, 128], strides = [1, 1]} : vector<4x128xf32> to vector<1x128xf32>
    %cst_63 = arith.constant dense<0.000000e+00> : vector<128xf32>
    %179 = vector.multi_reduction <add>, %176, %cst_63 [0] : vector<64x128xf32> to vector<128xf32>
    %180 = vector.shape_cast %179 : vector<128xf32> to vector<1x128xf32>
    %cst_64 = arith.constant 1.562500e-02 : f32
    %181 = vector.broadcast %cst_64 : f32 to vector<1x128xf32>
    %182 = arith.mulf %180, %181 : vector<1x128xf32>
    %183 = arith.mulf %176, %176 : vector<64x128xf32>
    %cst_65 = arith.constant dense<0.000000e+00> : vector<128xf32>
    %184 = vector.multi_reduction <add>, %183, %cst_65 [0] : vector<64x128xf32> to vector<128xf32>
    %185 = vector.shape_cast %184 : vector<128xf32> to vector<1x128xf32>
    %cst_66 = arith.constant 1.562500e-02 : f32
    %186 = vector.broadcast %cst_66 : f32 to vector<1x128xf32>
    %187 = arith.mulf %185, %186 : vector<1x128xf32>
    %188 = arith.mulf %182, %182 : vector<1x128xf32>
    %189 = arith.subf %187, %188 : vector<1x128xf32>
    %190 = vector.broadcast %182 : vector<1x128xf32> to vector<64x128xf32>
    %191 = arith.subf %176, %190 : vector<64x128xf32>
    %cst_67 = arith.constant 9.99999974E-6 : f32
    %192 = vector.broadcast %cst_67 : f32 to vector<1x128xf32>
    %193 = arith.addf %189, %192 : vector<1x128xf32>
    %194 = math.rsqrt %193 : vector<1x128xf32>
    %195 = vector.broadcast %194 : vector<1x128xf32> to vector<64x128xf32>
    %196 = arith.mulf %191, %195 : vector<64x128xf32>
    %197 = vector.broadcast %177 : vector<1x128xf32> to vector<64x128xf32>
    %198 = arith.mulf %196, %197 : vector<64x128xf32>
    %199 = vector.broadcast %178 : vector<1x128xf32> to vector<64x128xf32>
    %200 = arith.addf %198, %199 : vector<64x128xf32>
    %cst_68 = arith.constant 0.000000e+00 : f32
    %201 = vector.broadcast %cst_68 : f32 to vector<64x128xf32>
    %202 = arith.cmpf oge, %200, %201 : vector<64x128xf32>
    %cst_69 = arith.constant 1.000000e-01 : f32
    %203 = vector.broadcast %cst_69 : f32 to vector<64x128xf32>
    %204 = arith.mulf %203, %200 : vector<64x128xf32>
    %205 = arith.select %202, %200, %204 : vector<64x128xi1>, vector<64x128xf32>
    %206 = arith.truncf %205 : vector<64x128xf32> to vector<64x128xbf16>
    %c3 = arith.constant 3 : index
    %c0_70 = arith.constant 0 : index
    %c0_71 = arith.constant 0 : index
    %207 = vector.load %arg2[%c3, %c0_70, %c0_71] : memref<4x128x256xbf16, #tpu.memory_space<vmem>>, vector<1x128x256xbf16>
    %208 = vector.shape_cast %207 : vector<1x128x256xbf16> to vector<128x256xbf16>
    %cst_72 = arith.constant dense<0.000000e+00> : vector<64x256xf32>
    %209 = tpu.matmul %206, %208, %cst_72 {dimension_numbers = #tpu.dot_dimension_numbers<[1], [0], [0], [1], [0, 0, 1, 1], [], []>} : vector<64x128xbf16>, vector<128x256xbf16>, vector<64x256xf32> -> vector<64x256xf32>
    %210 = vector.extract_strided_slice %209 {offsets = [0, 0], sizes = [64, 128], strides = [1, 1]} : vector<64x256xf32> to vector<64x128xf32>
    %211 = arith.truncf %210 : vector<64x128xf32> to vector<64x128xbf16>
    %212 = vector.extract_strided_slice %209 {offsets = [0, 128], sizes = [64, 128], strides = [1, 1]} : vector<64x256xf32> to vector<64x128xf32>
    %213 = vector.extract_strided_slice %12 {offsets = [4, 0], sizes = [1, 256], strides = [1, 1]} : vector<5x256xf32> to vector<1x256xf32>
    %214 = vector.broadcast %213 : vector<1x256xf32> to vector<64x256xf32>
    %215 = arith.mulf %10, %214 : vector<64x256xf32>
    %216 = arith.truncf %215 : vector<64x256xf32> to vector<64x256xbf16>
    %cst_73 = arith.constant dense<0.000000e+00> : vector<64x64xf32>
    %217 = tpu.matmul %216, %3, %cst_73 {dimension_numbers = #tpu.dot_dimension_numbers<[1], [0], [0], [1], [0, 0, 1, 1], [], []>} : vector<64x256xbf16>, vector<256x64xbf16>, vector<64x64xf32> -> vector<64x64xf32>
    %218 = arith.truncf %217 : vector<64x64xf32> to vector<64x64xbf16>
    %cst_74 = arith.constant dense<0.000000e+00> : vector<64x128xf32>
    %219 = tpu.matmul %218, %211, %cst_74 {dimension_numbers = #tpu.dot_dimension_numbers<[1], [0], [0], [1], [0, 0, 1, 1], [], []>} : vector<64x64xbf16>, vector<64x128xbf16>, vector<64x128xf32> -> vector<64x128xf32>
    %220 = arith.addf %219, %212 : vector<64x128xf32>
    %221 = vector.extract_strided_slice %13 {offsets = [4, 0], sizes = [1, 128], strides = [1, 1]} : vector<5x128xf32> to vector<1x128xf32>
    %222 = vector.broadcast %221 : vector<1x128xf32> to vector<64x128xf32>
    %223 = arith.addf %220, %222 : vector<64x128xf32>
    %cst_75 = arith.constant 0.000000e+00 : f32
    %224 = vector.broadcast %cst_75 : f32 to vector<64x128xf32>
    %225 = arith.cmpf oge, %223, %224 : vector<64x128xf32>
    %cst_76 = arith.constant 1.000000e-01 : f32
    %226 = vector.broadcast %cst_76 : f32 to vector<64x128xf32>
    %227 = arith.mulf %226, %223 : vector<64x128xf32>
    %228 = arith.select %225, %223, %227 : vector<64x128xi1>, vector<64x128xf32>
    %c0_77 = arith.constant 0 : index
    %c0_78 = arith.constant 0 : index
    %229 = vector.load %arg11[%c0_77, %c0_78] : memref<64x128xf32, #tpu.memory_space<vmem>>, vector<64x128xf32>
    tpu.vector_store %arg11[%c0_77, %c0_78], %228 {strides = array<i32>} : memref<64x128xf32, #tpu.memory_space<vmem>>, vector<64x128xf32>,
    return
  }
}

</mosaic_0001>

<llo_original>
// kernel: deep_rgcn_forward.1
$region0: #{deep_rgcn_forward.1}
  #allocation0 [shape = 'u32[]', space=smem, size = 0x4, offset = 0x4, fixed_abs, tag = 'smem constant byte address 0x4 - core index']
  #allocation1 [shape = 'u32[72,128]{1,0:T(1,128)}', space=vmem, size = 0x9000, scoped, tag = 'internal scratch']
  %s0 = inlined_call_operand.vmem [shape: bf16[64,768], index: 0, kind: input, shape index: {}]
  %s1 = inlined_call_operand.vmem [shape: bf16[768,256], index: 1, kind: input, shape index: {}]
  %s2 = inlined_call_operand.vmem [shape: bf16[4,128,256], index: 2, kind: input, shape index: {}]
  %s3 = inlined_call_operand.vmem [shape: f32[5,128], index: 3, kind: input, shape index: {}]
  %s4 = inlined_call_operand.vmem [shape: f32[4,128], index: 4, kind: input, shape index: {}]
  %s5 = inlined_call_operand.vmem [shape: f32[4,128], index: 5, kind: input, shape index: {}]
  %s6 = inlined_call_operand.vmem [shape: bf16[256,64], index: 6, kind: input, shape index: {}]
  %s7 = inlined_call_operand.vmem [shape: f32[64,256], index: 7, kind: input, shape index: {}]
  %s8 = inlined_call_operand.vmem [shape: f32[64,256], index: 8, kind: input, shape index: {}]
  %s9 = inlined_call_operand.vmem [shape: f32[256,64], index: 9, kind: input, shape index: {}]
  %s10 = inlined_call_operand.vmem [shape: f32[5,64], index: 10, kind: input, shape index: {}]
  %s11 = inlined_call_operand.vmem [shape: f32[64,128], index: 11, kind: output, shape index: {}]
  %s12 = sld [smem:[#allocation0]]
  $region54: #{deep_rgcn_forward.1} parent=0
    _
  %s14 = ssub.s32 1, %s12
  %s15 = scalar_select 0, %s14, %s12
  // Predicated region
  $region2: #{deep_rgcn_forward.1} parent=0 // pred_check
    _
  $region3: #{deep_rgcn_forward.1} parent=0 // pred_check_branch
    %17 = sbr.rel (0) target = $region5
  $region4: #{deep_rgcn_forward.1} parent=0 // pred_region
    _
  $region5: #{deep_rgcn_forward.1} parent=0 // pred_fallthru
    _
  // Predicated region
  $region6: #{deep_rgcn_forward.1} parent=0 // pred_check
    _
  $region7: #{deep_rgcn_forward.1} parent=0 // pred_check_branch
    %19 = sbr.rel (0) target = $region9
  $region8: #{deep_rgcn_forward.1} parent=0 // pred_region
    _
  $region9: #{deep_rgcn_forward.1} parent=0 // pred_fallthru
    _
  // Predicated region
  $region10: #{deep_rgcn_forward.1} parent=0 // pred_check
    _
  $region11: #{deep_rgcn_forward.1} parent=0 // pred_check_branch
    %21 = sbr.rel (0) target = $region13
  $region12: #{deep_rgcn_forward.1} parent=0 // pred_region
    _
  $region13: #{deep_rgcn_forward.1} parent=0 // pred_fallthru
    _
  // Predicated region
  $region14: #{deep_rgcn_forward.1} parent=0 // pred_check
    _
  $region15: #{deep_rgcn_forward.1} parent=0 // pred_check_branch
    %23 = sbr.rel (0) target = $region17
  $region16: #{deep_rgcn_forward.1} parent=0 // pred_region
    _
  $region17: #{deep_rgcn_forward.1} parent=0 // pred_fallthru
    _
  // Predicated region
  $region18: #{deep_rgcn_forward.1} parent=0 // pred_check
    _
  $region19: #{deep_rgcn_forward.1} parent=0 // pred_check_branch
    %25 = sbr.rel (0) target = $region21
  $region20: #{deep_rgcn_forward.1} parent=0 // pred_region
    _
  $region21: #{deep_rgcn_forward.1} parent=0 // pred_fallthru
    _
  // Predicated region
  $region22: #{deep_rgcn_forward.1} parent=0 // pred_check
    _
  $region23: #{deep_rgcn_forward.1} parent=0 // pred_check_branch
    %27 = sbr.rel (0) target = $region25
  $region24: #{deep_rgcn_forward.1} parent=0 // pred_region
    _
  $region25: #{deep_rgcn_forward.1} parent=0 // pred_fallthru
    _
  // Predicated region
  $region26: #{deep_rgcn_forward.1} parent=0 // pred_check
    _
  $region27: #{deep_rgcn_forward.1} parent=0 // pred_check_branch
    %29 = sbr.rel (0) target = $region29
  $region28: #{deep_rgcn_forward.1} parent=0 // pred_region
    _
  $region29: #{deep_rgcn_forward.1} parent=0 // pred_fallthru
    _
  // Predicated region
  $region30: #{deep_rgcn_forward.1} parent=0 // pred_check
    _
  $region31: #{deep_rgcn_forward.1} parent=0 // pred_check_branch
    %31 = sbr.rel (0) target = $region33
  $region32: #{deep_rgcn_forward.1} parent=0 // pred_region
    _
  $region33: #{deep_rgcn_forward.1} parent=0 // pred_fallthru
    _
  // Predicated region
  $region34: #{deep_rgcn_forward.1} parent=0 // pred_check
    _
  $region35: #{deep_rgcn_forward.1} parent=0 // pred_check_branch
    %33 = sbr.rel (0) target = $region37
  $region36: #{deep_rgcn_forward.1} parent=0 // pred_region
    _
  $region37: #{deep_rgcn_forward.1} parent=0 // pred_fallthru
    _
  // Predicated region
  $region38: #{deep_rgcn_forward.1} parent=0 // pred_check
    _
  $region39: #{deep_rgcn_forward.1} parent=0 // pred_check_branch
    %35 = sbr.rel (0) target = $region41
  $region40: #{deep_rgcn_forward.1} parent=0 // pred_region
    _
  $region41: #{deep_rgcn_forward.1} parent=0 // pred_fallthru
    _
  // Predicated region
  $region42: #{deep_rgcn_forward.1} parent=0 // pred_check
    _
  $region43: #{deep_rgcn_forward.1} parent=0 // pred_check_branch
    %37 = sbr.rel (0) target = $region45
  $region44: #{deep_rgcn_forward.1} parent=0 // pred_region
    _
  $region45: #{deep_rgcn_forward.1} parent=0 // pred_fallthru
    _
  %v39 = vld [vmem:[%s7] sm:$0xff]
  %v40 = vld [vmem:[%s7 + $0x8] sm:$0xff]
  %v41 = vld [vmem:[%s7 + $0x10] sm:$0xff]
  %v42 = vld [vmem:[%s7 + $0x18] sm:$0xff]
  %v43 = vld [vmem:[%s7 + $0x20] sm:$0xff]
  %v44 = vld [vmem:[%s7 + $0x28] sm:$0xff]
  %v45 = vld [vmem:[%s7 + $0x30] sm:$0xff]
  %v46 = vld [vmem:[%s7 + $0x38] sm:$0xff]
  %v47 = vld [vmem:[%s7 + $0x40] sm:$0xff]
  %v48 = vld [vmem:[%s7 + $0x48] sm:$0xff]
  %v49 = vld [vmem:[%s7 + $0x50] sm:$0xff]
  %v50 = vld [vmem:[%s7 + $0x58] sm:$0xff]
  %v51 = vld [vmem:[%s7 + $0x60] sm:$0xff]
  %v52 = vld [vmem:[%s7 + $0x68] sm:$0xff]
  %v53 = vld [vmem:[%s7 + $0x70] sm:$0xff]
  %v54 = vld [vmem:[%s7 + $0x78] sm:$0xff]
  %v55 = vld [vmem:[%s8] sm:$0xff]
  %v56 = vld [vmem:[%s8 + $0x8] sm:$0xff]
  %v57 = vld [vmem:[%s8 + $0x10] sm:$0xff]
  %v58 = vld [vmem:[%s8 + $0x18] sm:$0xff]
  %v59 = vld [vmem:[%s8 + $0x20] sm:$0xff]
  %v60 = vld [vmem:[%s8 + $0x28] sm:$0xff]
  %v61 = vld [vmem:[%s8 + $0x30] sm:$0xff]
  %v62 = vld [vmem:[%s8 + $0x38] sm:$0xff]
  %v63 = vld [vmem:[%s8 + $0x40] sm:$0xff]
  %v64 = vld [vmem:[%s8 + $0x48] sm:$0xff]
  %v65 = vld [vmem:[%s8 + $0x50] sm:$0xff]
  %v66 = vld [vmem:[%s8 + $0x58] sm:$0xff]
  %v67 = vld [vmem:[%s8 + $0x60] sm:$0xff]
  %v68 = vld [vmem:[%s8 + $0x68] sm:$0xff]
  %v69 = vld [vmem:[%s8 + $0x70] sm:$0xff]
  %v70 = vld [vmem:[%s8 + $0x78] sm:$0xff]
  %v71 = vld [vmem:[%s9] sm:$0xff]
  %v72 = vld [vmem:[%s9 + $0x8] sm:$0xff]
  %v73 = vld [vmem:[%s9 + $0x10] sm:$0xff]
  %v74 = vld [vmem:[%s9 + $0x18] sm:$0xff]
  %v75 = vld [vmem:[%s9 + $0x20] sm:$0xff]
  %v76 = vld [vmem:[%s9 + $0x28] sm:$0xff]
  %v77 = vld [vmem:[%s9 + $0x30] sm:$0xff]
  %v78 = vld [vmem:[%s9 + $0x38] sm:$0xff]
  %v79 = vld [vmem:[%s9 + $0x40] sm:$0xff]
  %v80 = vld [vmem:[%s9 + $0x48] sm:$0xff]
  %v81 = vld [vmem:[%s9 + $0x50] sm:$0xff]
  %v82 = vld [vmem:[%s9 + $0x58] sm:$0xff]
  %v83 = vld [vmem:[%s9 + $0x60] sm:$0xff]
  %v84 = vld [vmem:[%s9 + $0x68] sm:$0xff]
  %v85 = vld [vmem:[%s9 + $0x70] sm:$0xff]
  %v86 = vld [vmem:[%s9 + $0x78] sm:$0xff]
  %v87 = vld [vmem:[%s9 + $0x80] sm:$0xff]
  %v88 = vld [vmem:[%s9 + $0x88] sm:$0xff]
  %v89 = vld [vmem:[%s9 + $0x90] sm:$0xff]
  %v90 = vld [vmem:[%s9 + $0x98] sm:$0xff]
  %v91 = vld [vmem:[%s9 + $0xa0] sm:$0xff]
  %v92 = vld [vmem:[%s9 + $0xa8] sm:$0xff]
  %v93 = vld [vmem:[%s9 + $0xb0] sm:$0xff]
  %v94 = vld [vmem:[%s9 + $0xb8] sm:$0xff]
  %v95 = vld [vmem:[%s9 + $0xc0] sm:$0xff]
  %v96 = vld [vmem:[%s9 + $0xc8] sm:$0xff]
  %v97 = vld [vmem:[%s9 + $0xd0] sm:$0xff]
  %v98 = vld [vmem:[%s9 + $0xd8] sm:$0xff]
  %v99 = vld [vmem:[%s9 + $0xe0] sm:$0xff]
  %v100 = vld [vmem:[%s9 + $0xe8] sm:$0xff]
  %v101 = vld [vmem:[%s9 + $0xf0] sm:$0xff]
  %v102 = vld [vmem:[%s9 + $0xf8] sm:$0xff]
  %v103 = vld [vmem:[%s6] sm:$0xf]
  %v104 = vld [vmem:[%s6 + $0x4] sm:$0xf]
  %v105 = vld [vmem:[%s6 + $0x8] sm:$0xf]
  %v106 = vld [vmem:[%s6 + $0xc] sm:$0xf]
  %v107 = vld [vmem:[%s6 + $0x10] sm:$0xf]
  %v108 = vld [vmem:[%s6 + $0x14] sm:$0xf]
  %v109 = vld [vmem:[%s6 + $0x18] sm:$0xf]
  %v110 = vld [vmem:[%s6 + $0x1c] sm:$0xf]
  %v111 = vld [vmem:[%s6 + $0x20] sm:$0xf]
  %v112 = vld [vmem:[%s6 + $0x24] sm:$0xf]
  %v113 = vld [vmem:[%s6 + $0x28] sm:$0xf]
  %v114 = vld [vmem:[%s6 + $0x2c] sm:$0xf]
  %v115 = vld [vmem:[%s6 + $0x30] sm:$0xf]
  %v116 = vld [vmem:[%s6 + $0x34] sm:$0xf]
  %v117 = vld [vmem:[%s6 + $0x38] sm:$0xf]
  %v118 = vld [vmem:[%s6 + $0x3c] sm:$0xf]
  %v119 = vld [vmem:[%s6 + $0x40] sm:$0xf]
  %v120 = vld [vmem:[%s6 + $0x44] sm:$0xf]
  %v121 = vld [vmem:[%s6 + $0x48] sm:$0xf]
  %v122 = vld [vmem:[%s6 + $0x4c] sm:$0xf]
  %v123 = vld [vmem:[%s6 + $0x50] sm:$0xf]
  %v124 = vld [vmem:[%s6 + $0x54] sm:$0xf]
  %v125 = vld [vmem:[%s6 + $0x58] sm:$0xf]
  %v126 = vld [vmem:[%s6 + $0x5c] sm:$0xf]
  %v127 = vld [vmem:[%s6 + $0x60] sm:$0xf]
  %v128 = vld [vmem:[%s6 + $0x64] sm:$0xf]
  %v129 = vld [vmem:[%s6 + $0x68] sm:$0xf]
  %v130 = vld [vmem:[%s6 + $0x6c] sm:$0xf]
  %v131 = vld [vmem:[%s6 + $0x70] sm:$0xf]
  %v132 = vld [vmem:[%s6 + $0x74] sm:$0xf]
  %v133 = vld [vmem:[%s6 + $0x78] sm:$0xf]
  %v134 = vld [vmem:[%s6 + $0x7c] sm:$0xf]
  %135 = vmatpush.msra.mxu0 %v86
  %136 = vmatpush.msra.mxu0 %v85
  %137 = vmatpush.msra.mxu0 %v84
  %138 = vmatpush.msra.mxu0 %v83
  %139 = vmatpush.msra.mxu0 %v82
  %140 = vmatpush.msra.mxu0 %v81
  %141 = vmatpush.msra.mxu0 %v80
  %142 = vmatpush.msra.mxu0 %v79
  %143 = vmatpush.msra.mxu0 %v78
  %144 = vmatpush.msra.mxu0 %v77
  %145 = vmatpush.msra.mxu0 %v76
  %146 = vmatpush.msra.mxu0 %v75
  %147 = vmatpush.msra.mxu0 %v74
  %148 = vmatpush.msra.mxu0 %v73
  %149 = vmatpush.msra.mxu0 %v72
  %150 = vmatpush.msra.mxu0 %v71
  %151 = vmatmul.f32.gmra.mxu0 %v39
  %v152 = vpop.f32.mrf.mxu0
  %v153 = vadd.f32 0.0, %v152
  %154 = vmatmul.f32.gmra.mxu0 %v41
  %v155 = vpop.f32.mrf.mxu0
  %v156 = vadd.f32 0.0, %v155
  %157 = vmatmul.f32.gmra.mxu0 %v43
  %v158 = vpop.f32.mrf.mxu0
  %v159 = vadd.f32 0.0, %v158
  %160 = vmatmul.f32.gmra.mxu0 %v45
  %v161 = vpop.f32.mrf.mxu0
  %v162 = vadd.f32 0.0, %v161
  %163 = vmatmul.f32.gmra.mxu0 %v47
  %v164 = vpop.f32.mrf.mxu0
  %v165 = vadd.f32 0.0, %v164
  %166 = vmatmul.f32.gmra.mxu0 %v49
  %v167 = vpop.f32.mrf.mxu0
  %v168 = vadd.f32 0.0, %v167
  %169 = vmatmul.f32.gmra.mxu0 %v51
  %v170 = vpop.f32.mrf.mxu0
  %v171 = vadd.f32 0.0, %v170
  %172 = vmatmul.f32.gmra.mxu0 %v53
  %v173 = vpop.f32.mrf.mxu0
  %v174 = vadd.f32 0.0, %v173
  %175 = vdwg.mxu0
  %176 = vmatpush.msra.mxu0 %v102
  %177 = vmatpush.msra.mxu0 %v101
  %178 = vmatpush.msra.mxu0 %v100
  %179 = vmatpush.msra.mxu0 %v99
  %180 = vmatpush.msra.mxu0 %v98
  %181 = vmatpush.msra.mxu0 %v97
  %182 = vmatpush.msra.mxu0 %v96
  %183 = vmatpush.msra.mxu0 %v95
  %184 = vmatpush.msra.mxu0 %v94
  %185 = vmatpush.msra.mxu0 %v93
  %186 = vmatpush.msra.mxu0 %v92
  %187 = vmatpush.msra.mxu0 %v91
  %188 = vmatpush.msra.mxu0 %v90
  %189 = vmatpush.msra.mxu0 %v89
  %190 = vmatpush.msra.mxu0 %v88
  %191 = vmatpush.msra.mxu0 %v87
  %192 = vmatmul.f32.gmra.mxu0 %v40
  %v193 = vpop.f32.mrf.mxu0
  %v194 = vadd.f32 %v153, %v193
  %195 = vmatmul.f32.gmra.mxu0 %v42
  %v196 = vpop.f32.mrf.mxu0
  %v197 = vadd.f32 %v156, %v196
  %198 = vmatmul.f32.gmra.mxu0 %v44
  %v199 = vpop.f32.mrf.mxu0
  %v200 = vadd.f32 %v159, %v199
  %201 = vmatmul.f32.gmra.mxu0 %v46
  %v202 = vpop.f32.mrf.mxu0
  %v203 = vadd.f32 %v162, %v202
  %204 = vmatmul.f32.gmra.mxu0 %v48
  %v205 = vpop.f32.mrf.mxu0
  %v206 = vadd.f32 %v165, %v205
  %207 = vmatmul.f32.gmra.mxu0 %v50
  %v208 = vpop.f32.mrf.mxu0
  %v209 = vadd.f32 %v168, %v208
  %210 = vmatmul.f32.gmra.mxu0 %v52
  %v211 = vpop.f32.mrf.mxu0
  %v212 = vadd.f32 %v171, %v211
  %213 = vmatmul.f32.gmra.mxu0 %v54
  %v214 = vpop.f32.mrf.mxu0
  %v215 = vadd.f32 %v174, %v214
  %216 = vdwg.mxu0
  %v217 = vmax.f32 %v194, 1.0
  %v218 = vmax.f32 %v197, 1.0
  %v219 = vmax.f32 %v200, 1.0
  %v220 = vmax.f32 %v203, 1.0
  %v221 = vmax.f32 %v206, 1.0
  %v222 = vmax.f32 %v209, 1.0
  %v223 = vmax.f32 %v212, 1.0
  %v224 = vmax.f32 %v215, 1.0
  %v225 = vrcp.pop %v217
  %v226 = vmul.f32 %v217, %v225
  %v227 = vsub.f32 1.0, %v226
  %v228 = vmul.f32 %v225, %v227
  %v229 = vadd.f32 %v225, %v228
  %vm230 = vweird.f32 %v217
  %vm231 = vweird.f32 %v225
  %vm232 = vmor %vm230, %vm231
  %v233 = vsel %vm232, %v225, %v229
  %v234 = vand.u32 2147483647, %v217
  %vm235 = vcmp.eq.f32.partialorder %v234, 8.507059e+37
  %v236 = vand.u32 %v217, 2147483648
  %v237 = vor.u32 1.1754944e-38, %v236
  %v238 = vsel %vm235, %v237, %v233
  %v239 = vmul.f32 1.0, %v238
  %v240 = vrcp.pop %v218
  %v241 = vmul.f32 %v218, %v240
  %v242 = vsub.f32 1.0, %v241
  %v243 = vmul.f32 %v240, %v242
  %v244 = vadd.f32 %v240, %v243
  %vm245 = vweird.f32 %v218
  %vm246 = vweird.f32 %v240
  %vm247 = vmor %vm245, %vm246
  %v248 = vsel %vm247, %v240, %v244
  %v249 = vand.u32 2147483647, %v218
  %vm250 = vcmp.eq.f32.partialorder %v249, 8.507059e+37
  %v251 = vand.u32 %v218, 2147483648
  %v252 = vor.u32 1.1754944e-38, %v251
  %v253 = vsel %vm250, %v252, %v248
  %v254 = vmul.f32 1.0, %v253
  %v255 = vrcp.pop %v219
  %v256 = vmul.f32 %v219, %v255
  %v257 = vsub.f32 1.0, %v256
  %v258 = vmul.f32 %v255, %v257
  %v259 = vadd.f32 %v255, %v258
  %vm260 = vweird.f32 %v219
  %vm261 = vweird.f32 %v255
  %vm262 = vmor %vm260, %vm261
  %v263 = vsel %vm262, %v255, %v259
  %v264 = vand.u32 2147483647, %v219
  %vm265 = vcmp.eq.f32.partialorder %v264, 8.507059e+37
  %v266 = vand.u32 %v219, 2147483648
  %v267 = vor.u32 1.1754944e-38, %v266
  %v268 = vsel %vm265, %v267, %v263
  %v269 = vmul.f32 1.0, %v268
  %v270 = vrcp.pop %v220
  %v271 = vmul.f32 %v220, %v270
  %v272 = vsub.f32 1.0, %v271
  %v273 = vmul.f32 %v270, %v272
  %v274 = vadd.f32 %v270, %v273
  %vm275 = vweird.f32 %v220
  %vm276 = vweird.f32 %v270
  %vm277 = vmor %vm275, %vm276
  %v278 = vsel %vm277, %v270, %v274
  %v279 = vand.u32 2147483647, %v220
  %vm280 = vcmp.eq.f32.partialorder %v279, 8.507059e+37
  %v281 = vand.u32 %v220, 2147483648
  %v282 = vor.u32 1.1754944e-38, %v281
  %v283 = vsel %vm280, %v282, %v278
  %v284 = vmul.f32 1.0, %v283
  %v285 = vrcp.pop %v221
  %v286 = vmul.f32 %v221, %v285
  %v287 = vsub.f32 1.0, %v286
  %v288 = vmul.f32 %v285, %v287
  %v289 = vadd.f32 %v285, %v288
  %vm290 = vweird.f32 %v221
  %vm291 = vweird.f32 %v285
  %vm292 = vmor %vm290, %vm291
  %v293 = vsel %vm292, %v285, %v289
  %v294 = vand.u32 2147483647, %v221
  %vm295 = vcmp.eq.f32.partialorder %v294, 8.507059e+37
  %v296 = vand.u32 %v221, 2147483648
  %v297 = vor.u32 1.1754944e-38, %v296
  %v298 = vsel %vm295, %v297, %v293
  %v299 = vmul.f32 1.0, %v298
  %v300 = vrcp.pop %v222
  %v301 = vmul.f32 %v222, %v300
  %v302 = vsub.f32 1.0, %v301
  %v303 = vmul.f32 %v300, %v302
  %v304 = vadd.f32 %v300, %v303
  %vm305 = vweird.f32 %v222
  %vm306 = vweird.f32 %v300
  %vm307 = vmor %vm305, %vm306
  %v308 = vsel %vm307, %v300, %v304
  %v309 = vand.u32 2147483647, %v222
  %vm310 = vcmp.eq.f32.partialorder %v309, 8.507059e+37
  %v311 = vand.u32 %v222, 2147483648
  %v312 = vor.u32 1.1754944e-38, %v311
  %v313 = vsel %vm310, %v312, %v308
  %v314 = vmul.f32 1.0, %v313
  %v315 = vrcp.pop %v223
  %v316 = vmul.f32 %v223, %v315
  %v317 = vsub.f32 1.0, %v316
  %v318 = vmul.f32 %v315, %v317
  %v319 = vadd.f32 %v315, %v318
  %vm320 = vweird.f32 %v223
  %vm321 = vweird.f32 %v315
  %vm322 = vmor %vm320, %vm321
  %v323 = vsel %vm322, %v315, %v319
  %v324 = vand.u32 2147483647, %v223
  %vm325 = vcmp.eq.f32.partialorder %v324, 8.507059e+37
  %v326 = vand.u32 %v223, 2147483648
  %v327 = vor.u32 1.1754944e-38, %v326
  %v328 = vsel %vm325, %v327, %v323
  %v329 = vmul.f32 1.0, %v328
  %v330 = vrcp.pop %v224
  %v331 = vmul.f32 %v224, %v330
  %v332 = vsub.f32 1.0, %v331
  %v333 = vmul.f32 %v330, %v332
  %v334 = vadd.f32 %v330, %v333
  %vm335 = vweird.f32 %v224
  %vm336 = vweird.f32 %v330
  %vm337 = vmor %vm335, %vm336
  %v338 = vsel %vm337, %v330, %v334
  %v339 = vand.u32 2147483647, %v224
  %vm340 = vcmp.eq.f32.partialorder %v339, 8.507059e+37
  %v341 = vand.u32 %v224, 2147483648
  %v342 = vor.u32 1.1754944e-38, %v341
  %v343 = vsel %vm340, %v342, %v338
  %v344 = vmul.f32 1.0, %v343
  %vm345 = vcmask 523264
  %v347 = vsel %vm345, %v239, 0
  %v350 = vsel %vm345, %v254, 0
  %v353 = vsel %vm345, %v269, 0
  %v356 = vsel %vm345, %v284, 0
  %v359 = vsel %vm345, %v299, 0
  %v362 = vsel %vm345, %v314, 0
  %v365 = vsel %vm345, %v329, 0
  %v368 = vsel %vm345, %v344, 0
  %370 = vmatpush.msra.mxu0 0.0
  %371 = vmatpush.msra.mxu0 0.0
  %372 = vmatpush.msra.mxu0 0.0
  %373 = vmatpush.msra.mxu0 0.0
  %374 = vmatpush.msra.mxu0 0.0
  %375 = vmatpush.msra.mxu0 0.0
  %376 = vmatpush.msra.mxu0 0.0
  %377 = vmatpush.msra.mxu0 0.0
  %378 = vmatpush.msra.mxu0 %v69
  %379 = vmatpush.msra.mxu0 %v67
  %380 = vmatpush.msra.mxu0 %v65
  %381 = vmatpush.msra.mxu0 %v63
  %382 = vmatpush.msra.mxu0 %v61
  %383 = vmatpush.msra.mxu0 %v59
  %384 = vmatpush.msra.mxu0 %v57
  %385 = vmatpush.msra.mxu0 %v55
  %386 = vmatmul.f32.gmra.mxu0 %v347
  %v387 = vpop.f32.mrf.mxu0
  %v388 = vadd.f32 0.0, %v387
  %389 = vmatmul.f32.gmra.mxu0 %v350
  %v390 = vpop.f32.mrf.mxu0
  %v391 = vadd.f32 0.0, %v390
  %392 = vmatmul.f32.gmra.mxu0 %v353
  %v393 = vpop.f32.mrf.mxu0
  %v394 = vadd.f32 0.0, %v393
  %395 = vmatmul.f32.gmra.mxu0 %v356
  %v396 = vpop.f32.mrf.mxu0
  %v397 = vadd.f32 0.0, %v396
  %398 = vmatmul.f32.gmra.mxu0 %v359
  %v399 = vpop.f32.mrf.mxu0
  %v400 = vadd.f32 0.0, %v399
  %401 = vmatmul.f32.gmra.mxu0 %v362
  %v402 = vpop.f32.mrf.mxu0
  %v403 = vadd.f32 0.0, %v402
  %404 = vmatmul.f32.gmra.mxu0 %v365
  %v405 = vpop.f32.mrf.mxu0
  %v406 = vadd.f32 0.0, %v405
  %407 = vmatmul.f32.gmra.mxu0 %v368
  %v408 = vpop.f32.mrf.mxu0
  %v409 = vadd.f32 0.0, %v408
  %410 = vdwg.mxu0
  %411 = vmatpush.msra.mxu0 0.0
  %412 = vmatpush.msra.mxu0 0.0
  %413 = vmatpush.msra.mxu0 0.0
  %414 = vmatpush.msra.mxu0 0.0
  %415 = vmatpush.msra.mxu0 0.0
  %416 = vmatpush.msra.mxu0 0.0
  %417 = vmatpush.msra.mxu0 0.0
  %418 = vmatpush.msra.mxu0 0.0
  %419 = vmatpush.msra.mxu0 %v70
  %420 = vmatpush.msra.mxu0 %v68
  %421 = vmatpush.msra.mxu0 %v66
  %422 = vmatpush.msra.mxu0 %v64
  %423 = vmatpush.msra.mxu0 %v62
  %424 = vmatpush.msra.mxu0 %v60
  %425 = vmatpush.msra.mxu0 %v58
  %426 = vmatpush.msra.mxu0 %v56
  %427 = vmatmul.f32.gmra.mxu0 %v347
  %v428 = vpop.f32.mrf.mxu0
  %v429 = vadd.f32 0.0, %v428
  %430 = vmatmul.f32.gmra.mxu0 %v350
  %v431 = vpop.f32.mrf.mxu0
  %v432 = vadd.f32 0.0, %v431
  %433 = vmatmul.f32.gmra.mxu0 %v353
  %v434 = vpop.f32.mrf.mxu0
  %v435 = vadd.f32 0.0, %v434
  %436 = vmatmul.f32.gmra.mxu0 %v356
  %v437 = vpop.f32.mrf.mxu0
  %v438 = vadd.f32 0.0, %v437
  %439 = vmatmul.f32.gmra.mxu0 %v359
  %v440 = vpop.f32.mrf.mxu0
  %v441 = vadd.f32 0.0, %v440
  %442 = vmatmul.f32.gmra.mxu0 %v362
  %v443 = vpop.f32.mrf.mxu0
  %v444 = vadd.f32 0.0, %v443
  %445 = vmatmul.f32.gmra.mxu0 %v365
  %v446 = vpop.f32.mrf.mxu0
  %v447 = vadd.f32 0.0, %v446
  %448 = vmatmul.f32.gmra.mxu0 %v368
  %v449 = vpop.f32.mrf.mxu0
  %v450 = vadd.f32 0.0, %v449
  %451 = vdwg.mxu0
  %v452 = vmul.f32 %v39, %v388
  %v453 = vmul.f32 %v40, %v429
  %v454 = vmul.f32 %v41, %v391
  %v455 = vmul.f32 %v42, %v432
  %v456 = vmul.f32 %v43, %v394
  %v457 = vmul.f32 %v44, %v435
  %v458 = vmul.f32 %v45, %v397
  %v459 = vmul.f32 %v46, %v438
  %v460 = vmul.f32 %v47, %v400
  %v461 = vmul.f32 %v48, %v441
  %v462 = vmul.f32 %v49, %v403
  %v463 = vmul.f32 %v50, %v444
  %v464 = vmul.f32 %v51, %v406
  %v465 = vmul.f32 %v52, %v447
  %v466 = vmul.f32 %v53, %v409
  %v467 = vmul.f32 %v54, %v450
  %v468 = vld [vmem:[%s10] sm:$0x1f]
  %v470 = vsel %vm345, %v468, 0
  %472 = vmatpush.msra.mxu0 0.0
  %473 = vmatpush.msra.mxu0 0.0
  %474 = vmatpush.msra.mxu0 0.0
  %475 = vmatpush.msra.mxu0 0.0
  %476 = vmatpush.msra.mxu0 0.0
  %477 = vmatpush.msra.mxu0 0.0
  %478 = vmatpush.msra.mxu0 0.0
  %479 = vmatpush.msra.mxu0 0.0
  %480 = vmatpush.msra.mxu0 %v69
  %481 = vmatpush.msra.mxu0 %v67
  %482 = vmatpush.msra.mxu0 %v65
  %483 = vmatpush.msra.mxu0 %v63
  %484 = vmatpush.msra.mxu0 %v61
  %485 = vmatpush.msra.mxu0 %v59
  %486 = vmatpush.msra.mxu0 %v57
  %487 = vmatpush.msra.mxu0 %v55
  %488 = vmatmul.f32.gmra.mxu0 %v470
  %v489 = vpop.f32.mrf.mxu0
  %v490 = vadd.f32 0.0, %v489
  %491 = vdwg.mxu0
  %492 = vmatpush.msra.mxu0 0.0
  %493 = vmatpush.msra.mxu0 0.0
  %494 = vmatpush.msra.mxu0 0.0
  %495 = vmatpush.msra.mxu0 0.0
  %496 = vmatpush.msra.mxu0 0.0
  %497 = vmatpush.msra.mxu0 0.0
  %498 = vmatpush.msra.mxu0 0.0
  %499 = vmatpush.msra.mxu0 0.0
  %500 = vmatpush.msra.mxu0 %v70
  %501 = vmatpush.msra.mxu0 %v68
  %502 = vmatpush.msra.mxu0 %v66
  %503 = vmatpush.msra.mxu0 %v64
  %504 = vmatpush.msra.mxu0 %v62
  %505 = vmatpush.msra.mxu0 %v60
  %506 = vmatpush.msra.mxu0 %v58
  %507 = vmatpush.msra.mxu0 %v56
  %508 = vmatmul.f32.gmra.mxu0 %v470
  %v509 = vpop.f32.mrf.mxu0
  %v510 = vadd.f32 0.0, %v509
  %511 = vdwg.mxu0
  %v512 = vld [vmem:[%s3] sm:$0x1f]
  %v513 = vld [vmem:[%s4] sm:$0xf]
  %v514 = vld [vmem:[%s5] sm:$0xf]
  %v515 = vld [vmem:[%s0] sm:$0xff]
  %v516 = vld [vmem:[%s0 + $0x8] sm:$0xff]
  %v517 = vld [vmem:[%s0 + $0x10] sm:$0xff]
  %v518 = vld [vmem:[%s0 + $0x18] sm:$0xff]
  %v519 = vld [vmem:[%s0 + $0x20] sm:$0xff]
  %v520 = vld [vmem:[%s0 + $0x28] sm:$0xff]
  %v521 = vld [vmem:[%s0 + $0x30] sm:$0xff]
  %v522 = vld [vmem:[%s0 + $0x38] sm:$0xff]
  %v523 = vld [vmem:[%s0 + $0x40] sm:$0xff]
  %v524 = vld [vmem:[%s0 + $0x48] sm:$0xff]
  %v525 = vld [vmem:[%s0 + $0x50] sm:$0xff]
  %v526 = vld [vmem:[%s0 + $0x58] sm:$0xff]
  %v527 = vld [vmem:[%s0 + $0x60] sm:$0xff]
  %v528 = vld [vmem:[%s0 + $0x68] sm:$0xff]
  %v529 = vld [vmem:[%s0 + $0x70] sm:$0xff]
  %v530 = vld [vmem:[%s0 + $0x78] sm:$0xff]
  %v531 = vld [vmem:[%s0 + $0x80] sm:$0xff]
  %v532 = vld [vmem:[%s0 + $0x88] sm:$0xff]
  %v533 = vld [vmem:[%s0 + $0x90] sm:$0xff]
  %v534 = vld [vmem:[%s0 + $0x98] sm:$0xff]
  %v535 = vld [vmem:[%s0 + $0xa0] sm:$0xff]
  %v536 = vld [vmem:[%s0 + $0xa8] sm:$0xff]
  %v537 = vld [vmem:[%s0 + $0xb0] sm:$0xff]
  %v538 = vld [vmem:[%s0 + $0xb8] sm:$0xff]
  %v539 = vld [vmem:[%s1] sm:$0xff]
  %v540 = vld [vmem:[%s1 + $0x8] sm:$0xff]
  %v541 = vld [vmem:[%s1 + $0x10] sm:$0xff]
  %v542 = vld [vmem:[%s1 + $0x18] sm:$0xff]
  %v543 = vld [vmem:[%s1 + $0x20] sm:$0xff]
  %v544 = vld [vmem:[%s1 + $0x28] sm:$0xff]
  %v545 = vld [vmem:[%s1 + $0x30] sm:$0xff]
  %v546 = vld [vmem:[%s1 + $0x38] sm:$0xff]
  %v547 = vld [vmem:[%s1 + $0x40] sm:$0xff]
  %v548 = vld [vmem:[%s1 + $0x48] sm:$0xff]
  %v549 = vld [vmem:[%s1 + $0x50] sm:$0xff]
  %v550 = vld [vmem:[%s1 + $0x58] sm:$0xff]
  %v551 = vld [vmem:[%s1 + $0x60] sm:$0xff]
  %v552 = vld [vmem:[%s1 + $0x68] sm:$0xff]
  %v553 = vld [vmem:[%s1 + $0x70] sm:$0xff]
  %v554 = vld [vmem:[%s1 + $0x78] sm:$0xff]
  %v555 = vld [vmem:[%s1 + $0x80] sm:$0xff]
  %v556 = vld [vmem:[%s1 + $0x88] sm:$0xff]
  %v557 = vld [vmem:[%s1 + $0x90] sm:$0xff]
  %v558 = vld [vmem:[%s1 + $0x98] sm:$0xff]
  %v559 = vld [vmem:[%s1 + $0xa0] sm:$0xff]
  %v560 = vld [vmem:[%s1 + $0xa8] sm:$0xff]
  %v561 = vld [vmem:[%s1 + $0xb0] sm:$0xff]
  %v562 = vld [vmem:[%s1 + $0xb8] sm:$0xff]
  %v563 = vld [vmem:[%s1 + $0xc0] sm:$0xff]
  %v564 = vld [vmem:[%s1 + $0xc8] sm:$0xff]
  %v565 = vld [vmem:[%s1 + $0xd0] sm:$0xff]
  %v566 = vld [vmem:[%s1 + $0xd8] sm:$0xff]
  %v567 = vld [vmem:[%s1 + $0xe0] sm:$0xff]
  %v568 = vld [vmem:[%s1 + $0xe8] sm:$0xff]
  %v569 = vld [vmem:[%s1 + $0xf0] sm:$0xff]
  %v570 = vld [vmem:[%s1 + $0xf8] sm:$0xff]
  %v571 = vld [vmem:[%s1 + $0x100] sm:$0xff]
  %v572 = vld [vmem:[%s1 + $0x108] sm:$0xff]
  %v573 = vld [vmem:[%s1 + $0x110] sm:$0xff]
  %v574 = vld [vmem:[%s1 + $0x118] sm:$0xff]
  %v575 = vld [vmem:[%s1 + $0x120] sm:$0xff]
  %v576 = vld [vmem:[%s1 + $0x128] sm:$0xff]
  %v577 = vld [vmem:[%s1 + $0x130] sm:$0xff]
  %v578 = vld [vmem:[%s1 + $0x138] sm:$0xff]
  %v579 = vld [vmem:[%s1 + $0x140] sm:$0xff]
  %v580 = vld [vmem:[%s1 + $0x148] sm:$0xff]
  %v581 = vld [vmem:[%s1 + $0x150] sm:$0xff]
  %v582 = vld [vmem:[%s1 + $0x158] sm:$0xff]
  %v583 = vld [vmem:[%s1 + $0x160] sm:$0xff]
  %v584 = vld [vmem:[%s1 + $0x168] sm:$0xff]
  %v585 = vld [vmem:[%s1 + $0x170] sm:$0xff]
  %v586 = vld [vmem:[%s1 + $0x178] sm:$0xff]
  %v587 = vld [vmem:[%s1 + $0x180] sm:$0xff]
  %v588 = vld [vmem:[%s1 + $0x188] sm:$0xff]
  %v589 = vld [vmem:[%s1 + $0x190] sm:$0xff]
  %v590 = vld [vmem:[%s1 + $0x198] sm:$0xff]
  %v591 = vld [vmem:[%s1 + $0x1a0] sm:$0xff]
  %v592 = vld [vmem:[%s1 + $0x1a8] sm:$0xff]
  %v593 = vld [vmem:[%s1 + $0x1b0] sm:$0xff]
  %v594 = vld [vmem:[%s1 + $0x1b8] sm:$0xff]
  %v595 = vld [vmem:[%s1 + $0x1c0] sm:$0xff]
  %v596 = vld [vmem:[%s1 + $0x1c8] sm:$0xff]
  %v597 = vld [vmem:[%s1 + $0x1d0] sm:$0xff]
  %v598 = vld [vmem:[%s1 + $0x1d8] sm:$0xff]
  %v599 = vld [vmem:[%s1 + $0x1e0] sm:$0xff]
  %v600 = vld [vmem:[%s1 + $0x1e8] sm:$0xff]
  %v601 = vld [vmem:[%s1 + $0x1f0] sm:$0xff]
  %v602 = vld [vmem:[%s1 + $0x1f8] sm:$0xff]
  %v603 = vld [vmem:[%s1 + $0x200] sm:$0xff]
  %v604 = vld [vmem:[%s1 + $0x208] sm:$0xff]
  %v605 = vld [vmem:[%s1 + $0x210] sm:$0xff]
  %v606 = vld [vmem:[%s1 + $0x218] sm:$0xff]
  %v607 = vld [vmem:[%s1 + $0x220] sm:$0xff]
  %v608 = vld [vmem:[%s1 + $0x228] sm:$0xff]
  %v609 = vld [vmem:[%s1 + $0x230] sm:$0xff]
  %v610 = vld [vmem:[%s1 + $0x238] sm:$0xff]
  %v611 = vld [vmem:[%s1 + $0x240] sm:$0xff]
  %v612 = vld [vmem:[%s1 + $0x248] sm:$0xff]
  %v613 = vld [vmem:[%s1 + $0x250] sm:$0xff]
  %v614 = vld [vmem:[%s1 + $0x258] sm:$0xff]
  %v615 = vld [vmem:[%s1 + $0x260] sm:$0xff]
  %v616 = vld [vmem:[%s1 + $0x268] sm:$0xff]
  %v617 = vld [vmem:[%s1 + $0x270] sm:$0xff]
  %v618 = vld [vmem:[%s1 + $0x278] sm:$0xff]
  %v619 = vld [vmem:[%s1 + $0x280] sm:$0xff]
  %v620 = vld [vmem:[%s1 + $0x288] sm:$0xff]
  %v621 = vld [vmem:[%s1 + $0x290] sm:$0xff]
  %v622 = vld [vmem:[%s1 + $0x298] sm:$0xff]
  %v623 = vld [vmem:[%s1 + $0x2a0] sm:$0xff]
  %v624 = vld [vmem:[%s1 + $0x2a8] sm:$0xff]
  %v625 = vld [vmem:[%s1 + $0x2b0] sm:$0xff]
  %v626 = vld [vmem:[%s1 + $0x2b8] sm:$0xff]
  %v627 = vld [vmem:[%s1 + $0x2c0] sm:$0xff]
  %v628 = vld [vmem:[%s1 + $0x2c8] sm:$0xff]
  %v629 = vld [vmem:[%s1 + $0x2d0] sm:$0xff]
  %v630 = vld [vmem:[%s1 + $0x2d8] sm:$0xff]
  %v631 = vld [vmem:[%s1 + $0x2e0] sm:$0xff]
  %v632 = vld [vmem:[%s1 + $0x2e8] sm:$0xff]
  %v633 = vld [vmem:[%s1 + $0x2f0] sm:$0xff]
  %v634 = vld [vmem:[%s1 + $0x2f8] sm:$0xff]
  %v659 = vunpack.c.l.b16 %v515
  %v660 = vunpack.c.h.b16 %v515
  %v661 = vunpack.c.l.b16 %v516
  %v662 = vunpack.c.h.b16 %v516
  %v663 = vunpack.c.l.b16 %v517
  %v664 = vunpack.c.h.b16 %v517
  %v665 = vunpack.c.l.b16 %v518
  %v666 = vunpack.c.h.b16 %v518
  %v667 = vunpack.c.l.b16 %v519
  %v668 = vunpack.c.h.b16 %v519
  %v669 = vunpack.c.l.b16 %v520
  %v670 = vunpack.c.h.b16 %v520
  %v671 = vunpack.c.l.b16 %v521
  %v672 = vunpack.c.h.b16 %v521
  %v673 = vunpack.c.l.b16 %v522
  %v674 = vunpack.c.h.b16 %v522
  %v675 = vunpack.c.l.b16 %v523
  %v676 = vunpack.c.h.b16 %v523
  %v677 = vunpack.c.l.b16 %v524
  %v678 = vunpack.c.h.b16 %v524
  %v679 = vunpack.c.l.b16 %v525
  %v680 = vunpack.c.h.b16 %v525
  %v681 = vunpack.c.l.b16 %v526
  %v682 = vunpack.c.h.b16 %v526
  %v683 = vunpack.c.l.b16 %v527
  %v684 = vunpack.c.h.b16 %v527
  %v685 = vunpack.c.l.b16 %v528
  %v686 = vunpack.c.h.b16 %v528
  %v687 = vunpack.c.l.b16 %v529
  %v688 = vunpack.c.h.b16 %v529
  %v689 = vunpack.c.l.b16 %v530
  %v690 = vunpack.c.h.b16 %v530
  %v691 = vunpack.c.l.b16 %v531
  %v692 = vunpack.c.h.b16 %v531
  %v693 = vunpack.c.l.b16 %v532
  %v694 = vunpack.c.h.b16 %v532
  %v695 = vunpack.c.l.b16 %v533
  %v696 = vunpack.c.h.b16 %v533
  %v697 = vunpack.c.l.b16 %v534
  %v698 = vunpack.c.h.b16 %v534
  %v699 = vunpack.c.l.b16 %v535
  %v700 = vunpack.c.h.b16 %v535
  %v701 = vunpack.c.l.b16 %v536
  %v702 = vunpack.c.h.b16 %v536
  %v703 = vunpack.c.l.b16 %v537
  %v704 = vunpack.c.h.b16 %v537
  %v705 = vunpack.c.l.b16 %v538
  %v706 = vunpack.c.h.b16 %v538
  %v707 = vpack.c.b16 %v665, %v659
  %v708 = vpack.c.b16 %v666, %v660
  %v709 = vpack.c.b16 %v667, %v661
  %v710 = vpack.c.b16 %v668, %v662
  %v711 = vpack.c.b16 %v669, %v663
  %v712 = vpack.c.b16 %v670, %v664
  %v713 = vpack.c.b16 %v677, %v671
  %v714 = vpack.c.b16 %v678, %v672
  %v715 = vpack.c.b16 %v679, %v673
  %v716 = vpack.c.b16 %v680, %v674
  %v717 = vpack.c.b16 %v681, %v675
  %v718 = vpack.c.b16 %v682, %v676
  %v719 = vpack.c.b16 %v689, %v683
  %v720 = vpack.c.b16 %v690, %v684
  %v721 = vpack.c.b16 %v691, %v685
  %v722 = vpack.c.b16 %v692, %v686
  %v723 = vpack.c.b16 %v693, %v687
  %v724 = vpack.c.b16 %v694, %v688
  %v725 = vpack.c.b16 %v701, %v695
  %v726 = vpack.c.b16 %v702, %v696
  %v727 = vpack.c.b16 %v703, %v697
  %v728 = vpack.c.b16 %v704, %v698
  %v729 = vpack.c.b16 %v705, %v699
  %v730 = vpack.c.b16 %v706, %v700
  %v851 = vunpack.c.l.b16 %v539
  %v852 = vunpack.c.h.b16 %v539
  %v853 = vunpack.c.l.b16 %v540
  %v854 = vunpack.c.h.b16 %v540
  %v855 = vunpack.c.l.b16 %v541
  %v856 = vunpack.c.h.b16 %v541
  %v857 = vunpack.c.l.b16 %v542
  %v858 = vunpack.c.h.b16 %v542
  %v859 = vunpack.c.l.b16 %v543
  %v860 = vunpack.c.h.b16 %v543
  %v861 = vunpack.c.l.b16 %v544
  %v862 = vunpack.c.h.b16 %v544
  %v863 = vunpack.c.l.b16 %v545
  %v864 = vunpack.c.h.b16 %v545
  %v865 = vunpack.c.l.b16 %v546
  %v866 = vunpack.c.h.b16 %v546
  %v867 = vunpack.c.l.b16 %v547
  %v868 = vunpack.c.h.b16 %v547
  %v869 = vunpack.c.l.b16 %v548
  %v870 = vunpack.c.h.b16 %v548
  %v871 = vunpack.c.l.b16 %v549
  %v872 = vunpack.c.h.b16 %v549
  %v873 = vunpack.c.l.b16 %v550
  %v874 = vunpack.c.h.b16 %v550
  %v875 = vunpack.c.l.b16 %v551
  %v876 = vunpack.c.h.b16 %v551
  %v877 = vunpack.c.l.b16 %v552
  %v878 = vunpack.c.h.b16 %v552
  %v879 = vunpack.c.l.b16 %v553
  %v880 = vunpack.c.h.b16 %v553
  %v881 = vunpack.c.l.b16 %v554
  %v882 = vunpack.c.h.b16 %v554
  %v883 = vunpack.c.l.b16 %v555
  %v884 = vunpack.c.h.b16 %v555
  %v885 = vunpack.c.l.b16 %v556
  %v886 = vunpack.c.h.b16 %v556
  %v887 = vunpack.c.l.b16 %v557
  %v888 = vunpack.c.h.b16 %v557
  %v889 = vunpack.c.l.b16 %v558
  %v890 = vunpack.c.h.b16 %v558
  %v891 = vunpack.c.l.b16 %v559
  %v892 = vunpack.c.h.b16 %v559
  %v893 = vunpack.c.l.b16 %v560
  %v894 = vunpack.c.h.b16 %v560
  %v895 = vunpack.c.l.b16 %v561
  %v896 = vunpack.c.h.b16 %v561
  %v897 = vunpack.c.l.b16 %v562
  %v898 = vunpack.c.h.b16 %v562
  %v899 = vunpack.c.l.b16 %v563
  %v900 = vunpack.c.h.b16 %v563
  %v901 = vunpack.c.l.b16 %v564
  %v902 = vunpack.c.h.b16 %v564
  %v903 = vunpack.c.l.b16 %v565
  %v904 = vunpack.c.h.b16 %v565
  %v905 = vunpack.c.l.b16 %v566
  %v906 = vunpack.c.h.b16 %v566
  %v907 = vunpack.c.l.b16 %v567
  %v908 = vunpack.c.h.b16 %v567
  %v909 = vunpack.c.l.b16 %v568
  %v910 = vunpack.c.h.b16 %v568
  %v911 = vunpack.c.l.b16 %v569
  %v912 = vunpack.c.h.b16 %v569
  %v913 = vunpack.c.l.b16 %v570
  %v914 = vunpack.c.h.b16 %v570
  %v915 = vunpack.c.l.b16 %v571
  %v916 = vunpack.c.h.b16 %v571
  %v917 = vunpack.c.l.b16 %v572
  %v918 = vunpack.c.h.b16 %v572
  %v919 = vunpack.c.l.b16 %v573
  %v920 = vunpack.c.h.b16 %v573
  %v921 = vunpack.c.l.b16 %v574
  %v922 = vunpack.c.h.b16 %v574
  %v923 = vunpack.c.l.b16 %v575
  %v924 = vunpack.c.h.b16 %v575
  %v925 = vunpack.c.l.b16 %v576
  %v926 = vunpack.c.h.b16 %v576
  %v927 = vunpack.c.l.b16 %v577
  %v928 = vunpack.c.h.b16 %v577
  %v929 = vunpack.c.l.b16 %v578
  %v930 = vunpack.c.h.b16 %v578
  %v931 = vunpack.c.l.b16 %v579
  %v932 = vunpack.c.h.b16 %v579
  %v933 = vunpack.c.l.b16 %v580
  %v934 = vunpack.c.h.b16 %v580
  %v935 = vunpack.c.l.b16 %v581
  %v936 = vunpack.c.h.b16 %v581
  %v937 = vunpack.c.l.b16 %v582
  %v938 = vunpack.c.h.b16 %v582
  %v939 = vunpack.c.l.b16 %v583
  %v940 = vunpack.c.h.b16 %v583
  %v941 = vunpack.c.l.b16 %v584
  %v942 = vunpack.c.h.b16 %v584
  %v943 = vunpack.c.l.b16 %v585
  %v944 = vunpack.c.h.b16 %v585
  %v945 = vunpack.c.l.b16 %v586
  %v946 = vunpack.c.h.b16 %v586
  %v947 = vunpack.c.l.b16 %v587
  %v948 = vunpack.c.h.b16 %v587
  %v949 = vunpack.c.l.b16 %v588
  %v950 = vunpack.c.h.b16 %v588
  %v951 = vunpack.c.l.b16 %v589
  %v952 = vunpack.c.h.b16 %v589
  %v953 = vunpack.c.l.b16 %v590
  %v954 = vunpack.c.h.b16 %v590
  %v955 = vunpack.c.l.b16 %v591
  %v956 = vunpack.c.h.b16 %v591
  %v957 = vunpack.c.l.b16 %v592
  %v958 = vunpack.c.h.b16 %v592
  %v959 = vunpack.c.l.b16 %v593
  %v960 = vunpack.c.h.b16 %v593
  %v961 = vunpack.c.l.b16 %v594
  %v962 = vunpack.c.h.b16 %v594
  %v963 = vunpack.c.l.b16 %v595
  %v964 = vunpack.c.h.b16 %v595
  %v965 = vunpack.c.l.b16 %v596
  %v966 = vunpack.c.h.b16 %v596
  %v967 = vunpack.c.l.b16 %v597
  %v968 = vunpack.c.h.b16 %v597
  %v969 = vunpack.c.l.b16 %v598
  %v970 = vunpack.c.h.b16 %v598
  %v971 = vunpack.c.l.b16 %v599
  %v972 = vunpack.c.h.b16 %v599
  %v973 = vunpack.c.l.b16 %v600
  %v974 = vunpack.c.h.b16 %v600
  %v975 = vunpack.c.l.b16 %v601
  %v976 = vunpack.c.h.b16 %v601
  %v977 = vunpack.c.l.b16 %v602
  %v978 = vunpack.c.h.b16 %v602
  %v979 = vunpack.c.l.b16 %v603
  %v980 = vunpack.c.h.b16 %v603
  %v981 = vunpack.c.l.b16 %v604
  %v982 = vunpack.c.h.b16 %v604
  %v983 = vunpack.c.l.b16 %v605
  %v984 = vunpack.c.h.b16 %v605
  %v985 = vunpack.c.l.b16 %v606
  %v986 = vunpack.c.h.b16 %v606
  %v987 = vunpack.c.l.b16 %v607
  %v988 = vunpack.c.h.b16 %v607
  %v989 = vunpack.c.l.b16 %v608
  %v990 = vunpack.c.h.b16 %v608
  %v991 = vunpack.c.l.b16 %v609
  %v992 = vunpack.c.h.b16 %v609
  %v993 = vunpack.c.l.b16 %v610
  %v994 = vunpack.c.h.b16 %v610
  %v995 = vunpack.c.l.b16 %v611
  %v996 = vunpack.c.h.b16 %v611
  %v997 = vunpack.c.l.b16 %v612
  %v998 = vunpack.c.h.b16 %v612
  %v999 = vunpack.c.l.b16 %v613
  %v1000 = vunpack.c.h.b16 %v613
  %v1001 = vunpack.c.l.b16 %v614
  %v1002 = vunpack.c.h.b16 %v614
  %v1003 = vunpack.c.l.b16 %v615
  %v1004 = vunpack.c.h.b16 %v615
  %v1005 = vunpack.c.l.b16 %v616
  %v1006 = vunpack.c.h.b16 %v616
  %v1007 = vunpack.c.l.b16 %v617
  %v1008 = vunpack.c.h.b16 %v617
  %v1009 = vunpack.c.l.b16 %v618
  %v1010 = vunpack.c.h.b16 %v618
  %v1011 = vunpack.c.l.b16 %v619
  %v1012 = vunpack.c.h.b16 %v619
  %v1013 = vunpack.c.l.b16 %v620
  %v1014 = vunpack.c.h.b16 %v620
  %v1015 = vunpack.c.l.b16 %v621
  %v1016 = vunpack.c.h.b16 %v621
  %v1017 = vunpack.c.l.b16 %v622
  %v1018 = vunpack.c.h.b16 %v622
  %v1019 = vunpack.c.l.b16 %v623
  %v1020 = vunpack.c.h.b16 %v623
  %v1021 = vunpack.c.l.b16 %v624
  %v1022 = vunpack.c.h.b16 %v624
  %v1023 = vunpack.c.l.b16 %v625
  %v1024 = vunpack.c.h.b16 %v625
  %v1025 = vunpack.c.l.b16 %v626
  %v1026 = vunpack.c.h.b16 %v626
  %v1027 = vunpack.c.l.b16 %v627
  %v1028 = vunpack.c.h.b16 %v627
  %v1029 = vunpack.c.l.b16 %v628
  %v1030 = vunpack.c.h.b16 %v628
  %v1031 = vunpack.c.l.b16 %v629
  %v1032 = vunpack.c.h.b16 %v629
  %v1033 = vunpack.c.l.b16 %v630
  %v1034 = vunpack.c.h.b16 %v630
  %v1035 = vunpack.c.l.b16 %v631
  %v1036 = vunpack.c.h.b16 %v631
  %v1037 = vunpack.c.l.b16 %v632
  %v1038 = vunpack.c.h.b16 %v632
  %v1039 = vunpack.c.l.b16 %v633
  %v1040 = vunpack.c.h.b16 %v633
  %v1041 = vunpack.c.l.b16 %v634
  %v1042 = vunpack.c.h.b16 %v634
  %v1043 = vpack.c.b16 %v853, %v851
  %v1044 = vpack.c.b16 %v854, %v852
  %v1045 = vpack.c.b16 %v857, %v855
  %v1046 = vpack.c.b16 %v858, %v856
  %v1047 = vpack.c.b16 %v861, %v859
  %v1048 = vpack.c.b16 %v862, %v860
  %v1049 = vpack.c.b16 %v865, %v863
  %v1050 = vpack.c.b16 %v866, %v864
  %v1051 = vpack.c.b16 %v869, %v867
  %v1052 = vpack.c.b16 %v870, %v868
  %v1053 = vpack.c.b16 %v873, %v871
  %v1054 = vpack.c.b16 %v874, %v872
  %v1055 = vpack.c.b16 %v877, %v875
  %v1056 = vpack.c.b16 %v878, %v876
  %v1057 = vpack.c.b16 %v881, %v879
  %v1058 = vpack.c.b16 %v882, %v880
  %v1059 = vpack.c.b16 %v885, %v883
  %v1060 = vpack.c.b16 %v886, %v884
  %v1061 = vpack.c.b16 %v889, %v887
  %v1062 = vpack.c.b16 %v890, %v888
  %v1063 = vpack.c.b16 %v893, %v891
  %v1064 = vpack.c.b16 %v894, %v892
  %v1065 = vpack.c.b16 %v897, %v895
  %v1066 = vpack.c.b16 %v898, %v896
  %v1067 = vpack.c.b16 %v901, %v899
  %v1068 = vpack.c.b16 %v902, %v900
  %v1069 = vpack.c.b16 %v905, %v903
  %v1070 = vpack.c.b16 %v906, %v904
  %v1071 = vpack.c.b16 %v909, %v907
  %v1072 = vpack.c.b16 %v910, %v908
  %v1073 = vpack.c.b16 %v913, %v911
  %v1074 = vpack.c.b16 %v914, %v912
  %v1075 = vpack.c.b16 %v917, %v915
  %v1076 = vpack.c.b16 %v918, %v916
  %v1077 = vpack.c.b16 %v921, %v919
  %v1078 = vpack.c.b16 %v922, %v920
  %v1079 = vpack.c.b16 %v925, %v923
  %v1080 = vpack.c.b16 %v926, %v924
  %v1081 = vpack.c.b16 %v929, %v927
  %v1082 = vpack.c.b16 %v930, %v928
  %v1083 = vpack.c.b16 %v933, %v931
  %v1084 = vpack.c.b16 %v934, %v932
  %v1085 = vpack.c.b16 %v937, %v935
  %v1086 = vpack.c.b16 %v938, %v936
  %v1087 = vpack.c.b16 %v941, %v939
  %v1088 = vpack.c.b16 %v942, %v940
  %v1089 = vpack.c.b16 %v945, %v943
  %v1090 = vpack.c.b16 %v946, %v944
  %v1091 = vpack.c.b16 %v949, %v947
  %v1092 = vpack.c.b16 %v950, %v948
  %v1093 = vpack.c.b16 %v953, %v951
  %v1094 = vpack.c.b16 %v954, %v952
  %v1095 = vpack.c.b16 %v957, %v955
  %v1096 = vpack.c.b16 %v958, %v956
  %v1097 = vpack.c.b16 %v961, %v959
  %v1098 = vpack.c.b16 %v962, %v960
  %v1099 = vpack.c.b16 %v965, %v963
  %v1100 = vpack.c.b16 %v966, %v964
  %v1101 = vpack.c.b16 %v969, %v967
  %v1102 = vpack.c.b16 %v970, %v968
  %v1103 = vpack.c.b16 %v973, %v971
  %v1104 = vpack.c.b16 %v974, %v972
  %v1105 = vpack.c.b16 %v977, %v975
  %v1106 = vpack.c.b16 %v978, %v976
  %v1107 = vpack.c.b16 %v981, %v979
  %v1108 = vpack.c.b16 %v982, %v980
  %v1109 = vpack.c.b16 %v985, %v983
  %v1110 = vpack.c.b16 %v986, %v984
  %v1111 = vpack.c.b16 %v989, %v987
  %v1112 = vpack.c.b16 %v990, %v988
  %v1113 = vpack.c.b16 %v993, %v991
  %v1114 = vpack.c.b16 %v994, %v992
  %v1115 = vpack.c.b16 %v997, %v995
  %v1116 = vpack.c.b16 %v998, %v996
  %v1117 = vpack.c.b16 %v1001, %v999
  %v1118 = vpack.c.b16 %v1002, %v1000
  %v1119 = vpack.c.b16 %v1005, %v1003
  %v1120 = vpack.c.b16 %v1006, %v1004
  %v1121 = vpack.c.b16 %v1009, %v1007
  %v1122 = vpack.c.b16 %v1010, %v1008
  %v1123 = vpack.c.b16 %v1013, %v1011
  %v1124 = vpack.c.b16 %v1014, %v1012
  %v1125 = vpack.c.b16 %v1017, %v1015
  %v1126 = vpack.c.b16 %v1018, %v1016
  %v1127 = vpack.c.b16 %v1021, %v1019
  %v1128 = vpack.c.b16 %v1022, %v1020
  %v1129 = vpack.c.b16 %v1025, %v1023
  %v1130 = vpack.c.b16 %v1026, %v1024
  %v1131 = vpack.c.b16 %v1029, %v1027
  %v1132 = vpack.c.b16 %v1030, %v1028
  %v1133 = vpack.c.b16 %v1033, %v1031
  %v1134 = vpack.c.b16 %v1034, %v1032
  %v1135 = vpack.c.b16 %v1037, %v1035
  %v1136 = vpack.c.b16 %v1038, %v1036
  %v1137 = vpack.c.b16 %v1041, %v1039
  %v1138 = vpack.c.b16 %v1042, %v1040
  %1235 = vmatpush.bf16.msra.mxu0 %v1057
  %1236 = vmatpush.bf16.msra.mxu0 %v1055
  %1237 = vmatpush.bf16.msra.mxu0 %v1053
  %1238 = vmatpush.bf16.msra.mxu0 %v1051
  %1239 = vmatpush.bf16.msra.mxu0 %v1049
  %1240 = vmatpush.bf16.msra.mxu0 %v1047
  %1241 = vmatpush.bf16.msra.mxu0 %v1045
  %1242 = vmatpush.bf16.msra.mxu0 %v1043
  %1243 = vmatmul.bf16.gmra.mxu0 %v707
  %v1244 = vpop.f32.mrf.mxu0
  %v1245 = vadd.f32 0.0, %v1244
  %v1246 = vpop.f32.mrf.mxu0
  %v1247 = vadd.f32 0.0, %v1246
  %1248 = vmatmul.bf16.gmra.mxu0 %v713
  %v1249 = vpop.f32.mrf.mxu0
  %v1250 = vadd.f32 0.0, %v1249
  %v1251 = vpop.f32.mrf.mxu0
  %v1252 = vadd.f32 0.0, %v1251
  %1253 = vmatmul.bf16.gmra.mxu0 %v719
  %v1254 = vpop.f32.mrf.mxu0
  %v1255 = vadd.f32 0.0, %v1254
  %v1256 = vpop.f32.mrf.mxu0
  %v1257 = vadd.f32 0.0, %v1256
  %1258 = vmatmul.bf16.gmra.mxu0 %v725
  %v1259 = vpop.f32.mrf.mxu0
  %v1260 = vadd.f32 0.0, %v1259
  %v1261 = vpop.f32.mrf.mxu0
  %v1262 = vadd.f32 0.0, %v1261
  %1263 = vdwg.mxu0
  %1264 = vmatpush.bf16.msra.mxu0 %v1073
  %1265 = vmatpush.bf16.msra.mxu0 %v1071
  %1266 = vmatpush.bf16.msra.mxu0 %v1069
  %1267 = vmatpush.bf16.msra.mxu0 %v1067
  %1268 = vmatpush.bf16.msra.mxu0 %v1065
  %1269 = vmatpush.bf16.msra.mxu0 %v1063
  %1270 = vmatpush.bf16.msra.mxu0 %v1061
  %1271 = vmatpush.bf16.msra.mxu0 %v1059
  %1272 = vmatmul.bf16.gmra.mxu0 %v708
  %v1273 = vpop.f32.mrf.mxu0
  %v1274 = vadd.f32 %v1245, %v1273
  %v1275 = vpop.f32.mrf.mxu0
  %v1276 = vadd.f32 %v1247, %v1275
  %1277 = vmatmul.bf16.gmra.mxu0 %v714
  %v1278 = vpop.f32.mrf.mxu0
  %v1279 = vadd.f32 %v1250, %v1278
  %v1280 = vpop.f32.mrf.mxu0
  %v1281 = vadd.f32 %v1252, %v1280
  %1282 = vmatmul.bf16.gmra.mxu0 %v720
  %v1283 = vpop.f32.mrf.mxu0
  %v1284 = vadd.f32 %v1255, %v1283
  %v1285 = vpop.f32.mrf.mxu0
  %v1286 = vadd.f32 %v1257, %v1285
  %1287 = vmatmul.bf16.gmra.mxu0 %v726
  %v1288 = vpop.f32.mrf.mxu0
  %v1289 = vadd.f32 %v1260, %v1288
  %v1290 = vpop.f32.mrf.mxu0
  %v1291 = vadd.f32 %v1262, %v1290
  %1292 = vdwg.mxu0
  %1293 = vmatpush.bf16.msra.mxu0 %v1089
  %1294 = vmatpush.bf16.msra.mxu0 %v1087
  %1295 = vmatpush.bf16.msra.mxu0 %v1085
  %1296 = vmatpush.bf16.msra.mxu0 %v1083
  %1297 = vmatpush.bf16.msra.mxu0 %v1081
  %1298 = vmatpush.bf16.msra.mxu0 %v1079
  %1299 = vmatpush.bf16.msra.mxu0 %v1077
  %1300 = vmatpush.bf16.msra.mxu0 %v1075
  %1301 = vmatmul.bf16.gmra.mxu0 %v709
  %v1302 = vpop.f32.mrf.mxu0
  %v1303 = vadd.f32 %v1274, %v1302
  %v1304 = vpop.f32.mrf.mxu0
  %v1305 = vadd.f32 %v1276, %v1304
  %1306 = vmatmul.bf16.gmra.mxu0 %v715
  %v1307 = vpop.f32.mrf.mxu0
  %v1308 = vadd.f32 %v1279, %v1307
  %v1309 = vpop.f32.mrf.mxu0
  %v1310 = vadd.f32 %v1281, %v1309
  %1311 = vmatmul.bf16.gmra.mxu0 %v721
  %v1312 = vpop.f32.mrf.mxu0
  %v1313 = vadd.f32 %v1284, %v1312
  %v1314 = vpop.f32.mrf.mxu0
  %v1315 = vadd.f32 %v1286, %v1314
  %1316 = vmatmul.bf16.gmra.mxu0 %v727
  %v1317 = vpop.f32.mrf.mxu0
  %v1318 = vadd.f32 %v1289, %v1317
  %v1319 = vpop.f32.mrf.mxu0
  %v1320 = vadd.f32 %v1291, %v1319
  %1321 = vdwg.mxu0
  %1322 = vmatpush.bf16.msra.mxu0 %v1105
  %1323 = vmatpush.bf16.msra.mxu0 %v1103
  %1324 = vmatpush.bf16.msra.mxu0 %v1101
  %1325 = vmatpush.bf16.msra.mxu0 %v1099
  %1326 = vmatpush.bf16.msra.mxu0 %v1097
  %1327 = vmatpush.bf16.msra.mxu0 %v1095
  %1328 = vmatpush.bf16.msra.mxu0 %v1093
  %1329 = vmatpush.bf16.msra.mxu0 %v1091
  %1330 = vmatmul.bf16.gmra.mxu0 %v710
  %v1331 = vpop.f32.mrf.mxu0
  %v1332 = vadd.f32 %v1303, %v1331
  %v1333 = vpop.f32.mrf.mxu0
  %v1334 = vadd.f32 %v1305, %v1333
  %1335 = vmatmul.bf16.gmra.mxu0 %v716
  %v1336 = vpop.f32.mrf.mxu0
  %v1337 = vadd.f32 %v1308, %v1336
  %v1338 = vpop.f32.mrf.mxu0
  %v1339 = vadd.f32 %v1310, %v1338
  %1340 = vmatmul.bf16.gmra.mxu0 %v722
  %v1341 = vpop.f32.mrf.mxu0
  %v1342 = vadd.f32 %v1313, %v1341
  %v1343 = vpop.f32.mrf.mxu0
  %v1344 = vadd.f32 %v1315, %v1343
  %1345 = vmatmul.bf16.gmra.mxu0 %v728
  %v1346 = vpop.f32.mrf.mxu0
  %v1347 = vadd.f32 %v1318, %v1346
  %v1348 = vpop.f32.mrf.mxu0
  %v1349 = vadd.f32 %v1320, %v1348
  %1350 = vdwg.mxu0
  %1351 = vmatpush.bf16.msra.mxu0 %v1121
  %1352 = vmatpush.bf16.msra.mxu0 %v1119
  %1353 = vmatpush.bf16.msra.mxu0 %v1117
  %1354 = vmatpush.bf16.msra.mxu0 %v1115
  %1355 = vmatpush.bf16.msra.mxu0 %v1113
  %1356 = vmatpush.bf16.msra.mxu0 %v1111
  %1357 = vmatpush.bf16.msra.mxu0 %v1109
  %1358 = vmatpush.bf16.msra.mxu0 %v1107
  %1359 = vmatmul.bf16.gmra.mxu0 %v711
  %v1360 = vpop.f32.mrf.mxu0
  %v1361 = vadd.f32 %v1332, %v1360
  %v1362 = vpop.f32.mrf.mxu0
  %v1363 = vadd.f32 %v1334, %v1362
  %1364 = vmatmul.bf16.gmra.mxu0 %v717
  %v1365 = vpop.f32.mrf.mxu0
  %v1366 = vadd.f32 %v1337, %v1365
  %v1367 = vpop.f32.mrf.mxu0
  %v1368 = vadd.f32 %v1339, %v1367
  %1369 = vmatmul.bf16.gmra.mxu0 %v723
  %v1370 = vpop.f32.mrf.mxu0
  %v1371 = vadd.f32 %v1342, %v1370
  %v1372 = vpop.f32.mrf.mxu0
  %v1373 = vadd.f32 %v1344, %v1372
  %1374 = vmatmul.bf16.gmra.mxu0 %v729
  %v1375 = vpop.f32.mrf.mxu0
  %v1376 = vadd.f32 %v1347, %v1375
  %v1377 = vpop.f32.mrf.mxu0
  %v1378 = vadd.f32 %v1349, %v1377
  %1379 = vdwg.mxu0
  %1380 = vmatpush.bf16.msra.mxu0 %v1137
  %1381 = vmatpush.bf16.msra.mxu0 %v1135
  %1382 = vmatpush.bf16.msra.mxu0 %v1133
  %1383 = vmatpush.bf16.msra.mxu0 %v1131
  %1384 = vmatpush.bf16.msra.mxu0 %v1129
  %1385 = vmatpush.bf16.msra.mxu0 %v1127
  %1386 = vmatpush.bf16.msra.mxu0 %v1125
  %1387 = vmatpush.bf16.msra.mxu0 %v1123
  %1388 = vmatmul.bf16.gmra.mxu0 %v712
  %v1389 = vpop.f32.mrf.mxu0
  %v1390 = vadd.f32 %v1361, %v1389
  %v1391 = vpop.f32.mrf.mxu0
  %v1392 = vadd.f32 %v1363, %v1391
  %1393 = vmatmul.bf16.gmra.mxu0 %v718
  %v1394 = vpop.f32.mrf.mxu0
  %v1395 = vadd.f32 %v1366, %v1394
  %v1396 = vpop.f32.mrf.mxu0
  %v1397 = vadd.f32 %v1368, %v1396
  %1398 = vmatmul.bf16.gmra.mxu0 %v724
  %v1399 = vpop.f32.mrf.mxu0
  %v1400 = vadd.f32 %v1371, %v1399
  %v1401 = vpop.f32.mrf.mxu0
  %v1402 = vadd.f32 %v1373, %v1401
  %1403 = vmatmul.bf16.gmra.mxu0 %v730
  %v1404 = vpop.f32.mrf.mxu0
  %v1405 = vadd.f32 %v1376, %v1404
  %v1406 = vpop.f32.mrf.mxu0
  %v1407 = vadd.f32 %v1378, %v1406
  %1408 = vdwg.mxu0
  %1409 = vmatpush.bf16.msra.mxu0 %v1058
  %1410 = vmatpush.bf16.msra.mxu0 %v1056
  %1411 = vmatpush.bf16.msra.mxu0 %v1054
  %1412 = vmatpush.bf16.msra.mxu0 %v1052
  %1413 = vmatpush.bf16.msra.mxu0 %v1050
  %1414 = vmatpush.bf16.msra.mxu0 %v1048
  %1415 = vmatpush.bf16.msra.mxu0 %v1046
  %1416 = vmatpush.bf16.msra.mxu0 %v1044
  %1417 = vmatmul.bf16.gmra.mxu0 %v707
  %v1418 = vpop.f32.mrf.mxu0
  %v1419 = vadd.f32 0.0, %v1418
  %v1420 = vpop.f32.mrf.mxu0
  %v1421 = vadd.f32 0.0, %v1420
  %1422 = vmatmul.bf16.gmra.mxu0 %v713
  %v1423 = vpop.f32.mrf.mxu0
  %v1424 = vadd.f32 0.0, %v1423
  %v1425 = vpop.f32.mrf.mxu0
  %v1426 = vadd.f32 0.0, %v1425
  %1427 = vmatmul.bf16.gmra.mxu0 %v719
  %v1428 = vpop.f32.mrf.mxu0
  %v1429 = vadd.f32 0.0, %v1428
  %v1430 = vpop.f32.mrf.mxu0
  %v1431 = vadd.f32 0.0, %v1430
  %1432 = vmatmul.bf16.gmra.mxu0 %v725
  %v1433 = vpop.f32.mrf.mxu0
  %v1434 = vadd.f32 0.0, %v1433
  %v1435 = vpop.f32.mrf.mxu0
  %v1436 = vadd.f32 0.0, %v1435
  %1437 = vdwg.mxu0
  %1438 = vmatpush.bf16.msra.mxu0 %v1074
  %1439 = vmatpush.bf16.msra.mxu0 %v1072
  %1440 = vmatpush.bf16.msra.mxu0 %v1070
  %1441 = vmatpush.bf16.msra.mxu0 %v1068
  %1442 = vmatpush.bf16.msra.mxu0 %v1066
  %1443 = vmatpush.bf16.msra.mxu0 %v1064
  %1444 = vmatpush.bf16.msra.mxu0 %v1062
  %1445 = vmatpush.bf16.msra.mxu0 %v1060
  %1446 = vmatmul.bf16.gmra.mxu0 %v708
  %v1447 = vpop.f32.mrf.mxu0
  %v1448 = vadd.f32 %v1419, %v1447
  %v1449 = vpop.f32.mrf.mxu0
  %v1450 = vadd.f32 %v1421, %v1449
  %1451 = vmatmul.bf16.gmra.mxu0 %v714
  %v1452 = vpop.f32.mrf.mxu0
  %v1453 = vadd.f32 %v1424, %v1452
  %v1454 = vpop.f32.mrf.mxu0
  %v1455 = vadd.f32 %v1426, %v1454
  %1456 = vmatmul.bf16.gmra.mxu0 %v720
  %v1457 = vpop.f32.mrf.mxu0
  %v1458 = vadd.f32 %v1429, %v1457
  %v1459 = vpop.f32.mrf.mxu0
  %v1460 = vadd.f32 %v1431, %v1459
  %1461 = vmatmul.bf16.gmra.mxu0 %v726
  %v1462 = vpop.f32.mrf.mxu0
  %v1463 = vadd.f32 %v1434, %v1462
  %v1464 = vpop.f32.mrf.mxu0
  %v1465 = vadd.f32 %v1436, %v1464
  %1466 = vdwg.mxu0
  %1467 = vmatpush.bf16.msra.mxu0 %v1090
  %1468 = vmatpush.bf16.msra.mxu0 %v1088
  %1469 = vmatpush.bf16.msra.mxu0 %v1086
  %1470 = vmatpush.bf16.msra.mxu0 %v1084
  %1471 = vmatpush.bf16.msra.mxu0 %v1082
  %1472 = vmatpush.bf16.msra.mxu0 %v1080
  %1473 = vmatpush.bf16.msra.mxu0 %v1078
  %1474 = vmatpush.bf16.msra.mxu0 %v1076
  %1475 = vmatmul.bf16.gmra.mxu0 %v709
  %v1476 = vpop.f32.mrf.mxu0
  %v1477 = vadd.f32 %v1448, %v1476
  %v1478 = vpop.f32.mrf.mxu0
  %v1479 = vadd.f32 %v1450, %v1478
  %1480 = vmatmul.bf16.gmra.mxu0 %v715
  %v1481 = vpop.f32.mrf.mxu0
  %v1482 = vadd.f32 %v1453, %v1481
  %v1483 = vpop.f32.mrf.mxu0
  %v1484 = vadd.f32 %v1455, %v1483
  %1485 = vmatmul.bf16.gmra.mxu0 %v721
  %v1486 = vpop.f32.mrf.mxu0
  %v1487 = vadd.f32 %v1458, %v1486
  %v1488 = vpop.f32.mrf.mxu0
  %v1489 = vadd.f32 %v1460, %v1488
  %1490 = vmatmul.bf16.gmra.mxu0 %v727
  %v1491 = vpop.f32.mrf.mxu0
  %v1492 = vadd.f32 %v1463, %v1491
  %v1493 = vpop.f32.mrf.mxu0
  %v1494 = vadd.f32 %v1465, %v1493
  %1495 = vdwg.mxu0
  %1496 = vmatpush.bf16.msra.mxu0 %v1106
  %1497 = vmatpush.bf16.msra.mxu0 %v1104
  %1498 = vmatpush.bf16.msra.mxu0 %v1102
  %1499 = vmatpush.bf16.msra.mxu0 %v1100
  %1500 = vmatpush.bf16.msra.mxu0 %v1098
  %1501 = vmatpush.bf16.msra.mxu0 %v1096
  %1502 = vmatpush.bf16.msra.mxu0 %v1094
  %1503 = vmatpush.bf16.msra.mxu0 %v1092
  %1504 = vmatmul.bf16.gmra.mxu0 %v710
  %v1505 = vpop.f32.mrf.mxu0
  %v1506 = vadd.f32 %v1477, %v1505
  %v1507 = vpop.f32.mrf.mxu0
  %v1508 = vadd.f32 %v1479, %v1507
  %1509 = vmatmul.bf16.gmra.mxu0 %v716
  %v1510 = vpop.f32.mrf.mxu0
  %v1511 = vadd.f32 %v1482, %v1510
  %v1512 = vpop.f32.mrf.mxu0
  %v1513 = vadd.f32 %v1484, %v1512
  %1514 = vmatmul.bf16.gmra.mxu0 %v722
  %v1515 = vpop.f32.mrf.mxu0
  %v1516 = vadd.f32 %v1487, %v1515
  %v1517 = vpop.f32.mrf.mxu0
  %v1518 = vadd.f32 %v1489, %v1517
  %1519 = vmatmul.bf16.gmra.mxu0 %v728
  %v1520 = vpop.f32.mrf.mxu0
  %v1521 = vadd.f32 %v1492, %v1520
  %v1522 = vpop.f32.mrf.mxu0
  %v1523 = vadd.f32 %v1494, %v1522
  %1524 = vdwg.mxu0
  %1525 = vmatpush.bf16.msra.mxu0 %v1122
  %1526 = vmatpush.bf16.msra.mxu0 %v1120
  %1527 = vmatpush.bf16.msra.mxu0 %v1118
  %1528 = vmatpush.bf16.msra.mxu0 %v1116
  %1529 = vmatpush.bf16.msra.mxu0 %v1114
  %1530 = vmatpush.bf16.msra.mxu0 %v1112
  %1531 = vmatpush.bf16.msra.mxu0 %v1110
  %1532 = vmatpush.bf16.msra.mxu0 %v1108
  %1533 = vmatmul.bf16.gmra.mxu0 %v711
  %v1534 = vpop.f32.mrf.mxu0
  %v1535 = vadd.f32 %v1506, %v1534
  %v1536 = vpop.f32.mrf.mxu0
  %v1537 = vadd.f32 %v1508, %v1536
  %1538 = vmatmul.bf16.gmra.mxu0 %v717
  %v1539 = vpop.f32.mrf.mxu0
  %v1540 = vadd.f32 %v1511, %v1539
  %v1541 = vpop.f32.mrf.mxu0
  %v1542 = vadd.f32 %v1513, %v1541
  %1543 = vmatmul.bf16.gmra.mxu0 %v723
  %v1544 = vpop.f32.mrf.mxu0
  %v1545 = vadd.f32 %v1516, %v1544
  %v1546 = vpop.f32.mrf.mxu0
  %v1547 = vadd.f32 %v1518, %v1546
  %1548 = vmatmul.bf16.gmra.mxu0 %v729
  %v1549 = vpop.f32.mrf.mxu0
  %v1550 = vadd.f32 %v1521, %v1549
  %v1551 = vpop.f32.mrf.mxu0
  %v1552 = vadd.f32 %v1523, %v1551
  %1553 = vdwg.mxu0
  %1554 = vmatpush.bf16.msra.mxu0 %v1138
  %1555 = vmatpush.bf16.msra.mxu0 %v1136
  %1556 = vmatpush.bf16.msra.mxu0 %v1134
  %1557 = vmatpush.bf16.msra.mxu0 %v1132
  %1558 = vmatpush.bf16.msra.mxu0 %v1130
  %1559 = vmatpush.bf16.msra.mxu0 %v1128
  %1560 = vmatpush.bf16.msra.mxu0 %v1126
  %1561 = vmatpush.bf16.msra.mxu0 %v1124
  %1562 = vmatmul.bf16.gmra.mxu0 %v712
  %v1563 = vpop.f32.mrf.mxu0
  %v1564 = vadd.f32 %v1535, %v1563
  %v1565 = vpop.f32.mrf.mxu0
  %v1566 = vadd.f32 %v1537, %v1565
  %1567 = vmatmul.bf16.gmra.mxu0 %v718
  %v1568 = vpop.f32.mrf.mxu0
  %v1569 = vadd.f32 %v1540, %v1568
  %v1570 = vpop.f32.mrf.mxu0
  %v1571 = vadd.f32 %v1542, %v1570
  %1572 = vmatmul.bf16.gmra.mxu0 %v724
  %v1573 = vpop.f32.mrf.mxu0
  %v1574 = vadd.f32 %v1545, %v1573
  %v1575 = vpop.f32.mrf.mxu0
  %v1576 = vadd.f32 %v1547, %v1575
  %1577 = vmatmul.bf16.gmra.mxu0 %v730
  %v1578 = vpop.f32.mrf.mxu0
  %v1579 = vadd.f32 %v1550, %v1578
  %v1580 = vpop.f32.mrf.mxu0
  %v1581 = vadd.f32 %v1552, %v1580
  %1582 = vdwg.mxu0
  %v1583 = vpack.c.bf16 %v1392, %v1390
  %v1584 = vpack.c.bf16 %v1397, %v1395
  %v1585 = vpack.c.bf16 %v1402, %v1400
  %v1586 = vpack.c.bf16 %v1407, %v1405
  %v1587 = vperm.slane %v490, 0
  %v1588 = vperm.slane %v510, 0
  %v1589 = vmul.f32 %v452, %v1587
  %v1590 = vmul.f32 %v453, %v1588
  %v1591 = vmul.f32 %v454, %v1587
  %v1592 = vmul.f32 %v455, %v1588
  %v1593 = vmul.f32 %v456, %v1587
  %v1594 = vmul.f32 %v457, %v1588
  %v1595 = vmul.f32 %v458, %v1587
  %v1596 = vmul.f32 %v459, %v1588
  %v1597 = vmul.f32 %v460, %v1587
  %v1598 = vmul.f32 %v461, %v1588
  %v1599 = vmul.f32 %v462, %v1587
  %v1600 = vmul.f32 %v463, %v1588
  %v1601 = vmul.f32 %v464, %v1587
  %v1602 = vmul.f32 %v465, %v1588
  %v1603 = vmul.f32 %v466, %v1587
  %v1604 = vmul.f32 %v467, %v1588
  %v1605 = vpack.c.bf16 %v1591, %v1589
  %v1606 = vpack.c.bf16 %v1592, %v1590
  %v1607 = vpack.c.bf16 %v1595, %v1593
  %v1608 = vpack.c.bf16 %v1596, %v1594
  %v1609 = vpack.c.bf16 %v1599, %v1597
  %v1610 = vpack.c.bf16 %v1600, %v1598
  %v1611 = vpack.c.bf16 %v1603, %v1601
  %v1612 = vpack.c.bf16 %v1604, %v1602
  %v1645 = vunpack.c.l.b16 %v103
  %v1646 = vunpack.c.l.b16 %v104
  %v1647 = vunpack.c.l.b16 %v105
  %v1648 = vunpack.c.l.b16 %v106
  %v1649 = vunpack.c.l.b16 %v107
  %v1650 = vunpack.c.l.b16 %v108
  %v1651 = vunpack.c.l.b16 %v109
  %v1652 = vunpack.c.l.b16 %v110
  %v1653 = vunpack.c.l.b16 %v111
  %v1654 = vunpack.c.l.b16 %v112
  %v1655 = vunpack.c.l.b16 %v113
  %v1656 = vunpack.c.l.b16 %v114
  %v1657 = vunpack.c.l.b16 %v115
  %v1658 = vunpack.c.l.b16 %v116
  %v1659 = vunpack.c.l.b16 %v117
  %v1660 = vunpack.c.l.b16 %v118
  %v1661 = vunpack.c.l.b16 %v119
  %v1662 = vunpack.c.l.b16 %v120
  %v1663 = vunpack.c.l.b16 %v121
  %v1664 = vunpack.c.l.b16 %v122
  %v1665 = vunpack.c.l.b16 %v123
  %v1666 = vunpack.c.l.b16 %v124
  %v1667 = vunpack.c.l.b16 %v125
  %v1668 = vunpack.c.l.b16 %v126
  %v1669 = vunpack.c.l.b16 %v127
  %v1670 = vunpack.c.l.b16 %v128
  %v1671 = vunpack.c.l.b16 %v129
  %v1672 = vunpack.c.l.b16 %v130
  %v1673 = vunpack.c.l.b16 %v131
  %v1674 = vunpack.c.l.b16 %v132
  %v1675 = vunpack.c.l.b16 %v133
  %v1676 = vunpack.c.l.b16 %v134
  %v1677 = vpack.c.b16 %v1646, %v1645
  %v1678 = vpack.c.b16 %v1648, %v1647
  %v1679 = vpack.c.b16 %v1650, %v1649
  %v1680 = vpack.c.b16 %v1652, %v1651
  %v1681 = vpack.c.b16 %v1654, %v1653
  %v1682 = vpack.c.b16 %v1656, %v1655
  %v1683 = vpack.c.b16 %v1658, %v1657
  %v1684 = vpack.c.b16 %v1660, %v1659
  %v1685 = vpack.c.b16 %v1662, %v1661
  %v1686 = vpack.c.b16 %v1664, %v1663
  %v1687 = vpack.c.b16 %v1666, %v1665
  %v1688 = vpack.c.b16 %v1668, %v1667
  %v1689 = vpack.c.b16 %v1670, %v1669
  %v1690 = vpack.c.b16 %v1672, %v1671
  %v1691 = vpack.c.b16 %v1674, %v1673
  %v1692 = vpack.c.b16 %v1676, %v1675
  %1709 = vmatpush.bf16.msra.mxu0 %v1684
  %1710 = vmatpush.bf16.msra.mxu0 %v1683
  %1711 = vmatpush.bf16.msra.mxu0 %v1682
  %1712 = vmatpush.bf16.msra.mxu0 %v1681
  %1713 = vmatpush.bf16.msra.mxu0 %v1680
  %1714 = vmatpush.bf16.msra.mxu0 %v1679
  %1715 = vmatpush.bf16.msra.mxu0 %v1678
  %1716 = vmatpush.bf16.msra.mxu0 %v1677
  %1717 = vmatmul.bf16.gmra.mxu0 %v1605
  %v1718 = vpop.f32.mrf.mxu0
  %v1719 = vadd.f32 0.0, %v1718
  %v1720 = vpop.f32.mrf.mxu0
  %v1721 = vadd.f32 0.0, %v1720
  %1722 = vmatmul.bf16.gmra.mxu0 %v1607
  %v1723 = vpop.f32.mrf.mxu0
  %v1724 = vadd.f32 0.0, %v1723
  %v1725 = vpop.f32.mrf.mxu0
  %v1726 = vadd.f32 0.0, %v1725
  %1727 = vmatmul.bf16.gmra.mxu0 %v1609
  %v1728 = vpop.f32.mrf.mxu0
  %v1729 = vadd.f32 0.0, %v1728
  %v1730 = vpop.f32.mrf.mxu0
  %v1731 = vadd.f32 0.0, %v1730
  %1732 = vmatmul.bf16.gmra.mxu0 %v1611
  %v1733 = vpop.f32.mrf.mxu0
  %v1734 = vadd.f32 0.0, %v1733
  %v1735 = vpop.f32.mrf.mxu0
  %v1736 = vadd.f32 0.0, %v1735
  %1737 = vdwg.mxu0
  %1738 = vmatpush.bf16.msra.mxu0 %v1692
  %1739 = vmatpush.bf16.msra.mxu0 %v1691
  %1740 = vmatpush.bf16.msra.mxu0 %v1690
  %1741 = vmatpush.bf16.msra.mxu0 %v1689
  %1742 = vmatpush.bf16.msra.mxu0 %v1688
  %1743 = vmatpush.bf16.msra.mxu0 %v1687
  %1744 = vmatpush.bf16.msra.mxu0 %v1686
  %1745 = vmatpush.bf16.msra.mxu0 %v1685
  %1746 = vmatmul.bf16.gmra.mxu0 %v1606
  %v1747 = vpop.f32.mrf.mxu0
  %v1748 = vadd.f32 %v1719, %v1747
  %v1749 = vpop.f32.mrf.mxu0
  %v1750 = vadd.f32 %v1721, %v1749
  %1751 = vmatmul.bf16.gmra.mxu0 %v1608
  %v1752 = vpop.f32.mrf.mxu0
  %v1753 = vadd.f32 %v1724, %v1752
  %v1754 = vpop.f32.mrf.mxu0
  %v1755 = vadd.f32 %v1726, %v1754
  %1756 = vmatmul.bf16.gmra.mxu0 %v1610
  %v1757 = vpop.f32.mrf.mxu0
  %v1758 = vadd.f32 %v1729, %v1757
  %v1759 = vpop.f32.mrf.mxu0
  %v1760 = vadd.f32 %v1731, %v1759
  %1761 = vmatmul.bf16.gmra.mxu0 %v1612
  %v1762 = vpop.f32.mrf.mxu0
  %v1763 = vadd.f32 %v1734, %v1762
  %v1764 = vpop.f32.mrf.mxu0
  %v1765 = vadd.f32 %v1736, %v1764
  %1766 = vdwg.mxu0
  %v1767 = vpack.c.bf16 %v1750, %v1748
  %v1768 = vpack.c.bf16 %v1755, %v1753
  %v1769 = vpack.c.bf16 %v1760, %v1758
  %v1770 = vpack.c.bf16 %v1765, %v1763
  %v1772 = vsel %vm345, %v1767, 0
  %v1775 = vsel %vm345, %v1768, 0
  %v1778 = vsel %vm345, %v1769, 0
  %v1781 = vsel %vm345, %v1770, 0
  %1783 = vmatpush.bf16.msra.mxu0 0
  %1784 = vmatpush.bf16.msra.mxu0 0
  %1785 = vmatpush.bf16.msra.mxu0 0
  %1786 = vmatpush.bf16.msra.mxu0 0
  %1787 = vmatpush.bf16.msra.mxu0 %v1586
  %1788 = vmatpush.bf16.msra.mxu0 %v1585
  %1789 = vmatpush.bf16.msra.mxu0 %v1584
  %1790 = vmatpush.bf16.msra.mxu0 %v1583
  %1791 = vmatmul.bf16.gmra.mxu0 %v1772
  %v1792 = vpop.f32.mrf.mxu0
  %v1793 = vadd.f32 %v1564, %v1792
  %v1794 = vpop.f32.mrf.mxu0
  %v1795 = vadd.f32 %v1566, %v1794
  %1796 = vmatmul.bf16.gmra.mxu0 %v1775
  %v1797 = vpop.f32.mrf.mxu0
  %v1798 = vadd.f32 %v1569, %v1797
  %v1799 = vpop.f32.mrf.mxu0
  %v1800 = vadd.f32 %v1571, %v1799
  %1801 = vmatmul.bf16.gmra.mxu0 %v1778
  %v1802 = vpop.f32.mrf.mxu0
  %v1803 = vadd.f32 %v1574, %v1802
  %v1804 = vpop.f32.mrf.mxu0
  %v1805 = vadd.f32 %v1576, %v1804
  %1806 = vmatmul.bf16.gmra.mxu0 %v1781
  %v1807 = vpop.f32.mrf.mxu0
  %v1808 = vadd.f32 %v1579, %v1807
  %v1809 = vpop.f32.mrf.mxu0
  %v1810 = vadd.f32 %v1581, %v1809
  %1811 = vdwg.mxu0
  %v1812 = vperm.slane %v512, 0
  %v1813 = vadd.f32 %v1793, %v1812
  %v1814 = vadd.f32 %v1795, %v1812
  %v1815 = vadd.f32 %v1798, %v1812
  %v1816 = vadd.f32 %v1800, %v1812
  %v1817 = vadd.f32 %v1803, %v1812
  %v1818 = vadd.f32 %v1805, %v1812
  %v1819 = vadd.f32 %v1808, %v1812
  %v1820 = vadd.f32 %v1810, %v1812
  %v1821 = vadd.f32 %v1813, %v1814
  %v1822 = vadd.f32 %v1821, %v1815
  %v1823 = vadd.f32 %v1822, %v1816
  %v1824 = vadd.f32 %v1823, %v1817
  %v1825 = vadd.f32 %v1824, %v1818
  %v1826 = vadd.f32 %v1825, %v1819
  %v1827 = vadd.f32 %v1826, %v1820
  %v1828 = vrot.slane %v1827, 4
  %v1829 = vadd.f32 %v1827, %v1828
  %v1830 = vrot.slane %v1829, 2
  %v1831 = vadd.f32 %v1829, %v1830
  %v1832 = vrot.slane %v1831, 1
  %v1833 = vadd.f32 %v1831, %v1832
  %v1834 = vmul.f32 %v1833, 0.015625
  %v1835 = vmul.f32 %v1813, %v1813
  %v1836 = vmul.f32 %v1814, %v1814
  %v1837 = vmul.f32 %v1815, %v1815
  %v1838 = vmul.f32 %v1816, %v1816
  %v1839 = vmul.f32 %v1817, %v1817
  %v1840 = vmul.f32 %v1818, %v1818
  %v1841 = vmul.f32 %v1819, %v1819
  %v1842 = vmul.f32 %v1820, %v1820
  %v1843 = vadd.f32 %v1835, %v1836
  %v1844 = vadd.f32 %v1843, %v1837
  %v1845 = vadd.f32 %v1844, %v1838
  %v1846 = vadd.f32 %v1845, %v1839
  %v1847 = vadd.f32 %v1846, %v1840
  %v1848 = vadd.f32 %v1847, %v1841
  %v1849 = vadd.f32 %v1848, %v1842
  %v1850 = vrot.slane %v1849, 4
  %v1851 = vadd.f32 %v1849, %v1850
  %v1852 = vrot.slane %v1851, 2
  %v1853 = vadd.f32 %v1851, %v1852
  %v1854 = vrot.slane %v1853, 1
  %v1855 = vadd.f32 %v1853, %v1854
  %v1856 = vmul.f32 %v1855, 0.015625
  %v1857 = vmul.f32 %v1834, %v1834
  %v1858 = vsub.f32 %v1856, %v1857
  %v1859 = vsub.f32 %v1813, %v1834
  %v1860 = vsub.f32 %v1814, %v1834
  %v1861 = vsub.f32 %v1815, %v1834
  %v1862 = vsub.f32 %v1816, %v1834
  %v1863 = vsub.f32 %v1817, %v1834
  %v1864 = vsub.f32 %v1818, %v1834
  %v1865 = vsub.f32 %v1819, %v1834
  %v1866 = vsub.f32 %v1820, %v1834
  %v1867 = vadd.f32 %v1858, 1e-05
  %v1868 = vrsqrt.pop %v1867
  %v1869 = vmul.f32 %v1868, %v1867
  %v1870 = vmul.f32 %v1869, %v1868
  %v1871 = vmul.f32 0.5, %v1870
  %v1872 = vsub.f32 1.5, %v1871
  %v1873 = vmul.f32 %v1868, %v1872
  %vm1874 = vweird.f32 %v1867
  %vm1875 = vweird.f32 %v1868
  %vm1876 = vmor %vm1874, %vm1875
  %v1877 = vsel %vm1876, %v1868, %v1873
  %v1878 = vmul.f32 %v1859, %v1877
  %v1879 = vmul.f32 %v1860, %v1877
  %v1880 = vmul.f32 %v1861, %v1877
  %v1881 = vmul.f32 %v1862, %v1877
  %v1882 = vmul.f32 %v1863, %v1877
  %v1883 = vmul.f32 %v1864, %v1877
  %v1884 = vmul.f32 %v1865, %v1877
  %v1885 = vmul.f32 %v1866, %v1877
  %v1886 = vperm.slane %v513, 0
  %v1887 = vmul.f32 %v1878, %v1886
  %v1888 = vmul.f32 %v1879, %v1886
  %v1889 = vmul.f32 %v1880, %v1886
  %v1890 = vmul.f32 %v1881, %v1886
  %v1891 = vmul.f32 %v1882, %v1886
  %v1892 = vmul.f32 %v1883, %v1886
  %v1893 = vmul.f32 %v1884, %v1886
  %v1894 = vmul.f32 %v1885, %v1886
  %v1895 = vperm.slane %v514, 0
  %v1896 = vadd.f32 %v1887, %v1895
  %v1897 = vadd.f32 %v1888, %v1895
  %v1898 = vadd.f32 %v1889, %v1895
  %v1899 = vadd.f32 %v1890, %v1895
  %v1900 = vadd.f32 %v1891, %v1895
  %v1901 = vadd.f32 %v1892, %v1895
  %v1902 = vadd.f32 %v1893, %v1895
  %v1903 = vadd.f32 %v1894, %v1895
  %vm1904 = vcmp.ge.f32.partialorder %v1896, 0.0
  %vm1905 = vcmp.ge.f32.partialorder %v1897, 0.0
  %vm1906 = vcmp.ge.f32.partialorder %v1898, 0.0
  %vm1907 = vcmp.ge.f32.partialorder %v1899, 0.0
  %vm1908 = vcmp.ge.f32.partialorder %v1900, 0.0
  %vm1909 = vcmp.ge.f32.partialorder %v1901, 0.0
  %vm1910 = vcmp.ge.f32.partialorder %v1902, 0.0
  %vm1911 = vcmp.ge.f32.partialorder %v1903, 0.0
  %v1912 = vmul.f32 %v1896, 0.1
  %v1913 = vmul.f32 %v1897, 0.1
  %v1914 = vmul.f32 %v1898, 0.1
  %v1915 = vmul.f32 %v1899, 0.1
  %v1916 = vmul.f32 %v1900, 0.1
  %v1917 = vmul.f32 %v1901, 0.1
  %v1918 = vmul.f32 %v1902, 0.1
  %v1919 = vmul.f32 %v1903, 0.1
  %v1920 = vsel %vm1904, %v1896, %v1912
  %v1921 = vsel %vm1905, %v1897, %v1913
  %v1922 = vsel %vm1906, %v1898, %v1914
  %v1923 = vsel %vm1907, %v1899, %v1915
  %v1924 = vsel %vm1908, %v1900, %v1916
  %v1925 = vsel %vm1909, %v1901, %v1917
  %v1926 = vsel %vm1910, %v1902, %v1918
  %v1927 = vsel %vm1911, %v1903, %v1919
  %v1928 = vpack.c.bf16 %v1921, %v1920
  %v1929 = vpack.c.bf16 %v1923, %v1922
  %v1930 = vpack.c.bf16 %v1925, %v1924
  %v1931 = vpack.c.bf16 %v1927, %v1926
  %v1932 = vld [vmem:[%s2] sm:$0xff]
  %v1933 = vld [vmem:[%s2 + $0x8] sm:$0xff]
  %v1934 = vld [vmem:[%s2 + $0x10] sm:$0xff]
  %v1935 = vld [vmem:[%s2 + $0x18] sm:$0xff]
  %v1936 = vld [vmem:[%s2 + $0x20] sm:$0xff]
  %v1937 = vld [vmem:[%s2 + $0x28] sm:$0xff]
  %v1938 = vld [vmem:[%s2 + $0x30] sm:$0xff]
  %v1939 = vld [vmem:[%s2 + $0x38] sm:$0xff]
  %v1940 = vld [vmem:[%s2 + $0x40] sm:$0xff]
  %v1941 = vld [vmem:[%s2 + $0x48] sm:$0xff]
  %v1942 = vld [vmem:[%s2 + $0x50] sm:$0xff]
  %v1943 = vld [vmem:[%s2 + $0x58] sm:$0xff]
  %v1944 = vld [vmem:[%s2 + $0x60] sm:$0xff]
  %v1945 = vld [vmem:[%s2 + $0x68] sm:$0xff]
  %v1946 = vld [vmem:[%s2 + $0x70] sm:$0xff]
  %v1947 = vld [vmem:[%s2 + $0x78] sm:$0xff]
  %v1964 = vunpack.c.l.b16 %v1932
  %v1965 = vunpack.c.h.b16 %v1932
  %v1966 = vunpack.c.l.b16 %v1933
  %v1967 = vunpack.c.h.b16 %v1933
  %v1968 = vunpack.c.l.b16 %v1934
  %v1969 = vunpack.c.h.b16 %v1934
  %v1970 = vunpack.c.l.b16 %v1935
  %v1971 = vunpack.c.h.b16 %v1935
  %v1972 = vunpack.c.l.b16 %v1936
  %v1973 = vunpack.c.h.b16 %v1936
  %v1974 = vunpack.c.l.b16 %v1937
  %v1975 = vunpack.c.h.b16 %v1937
  %v1976 = vunpack.c.l.b16 %v1938
  %v1977 = vunpack.c.h.b16 %v1938
  %v1978 = vunpack.c.l.b16 %v1939
  %v1979 = vunpack.c.h.b16 %v1939
  %v1980 = vunpack.c.l.b16 %v1940
  %v1981 = vunpack.c.h.b16 %v1940
  %v1982 = vunpack.c.l.b16 %v1941
  %v1983 = vunpack.c.h.b16 %v1941
  %v1984 = vunpack.c.l.b16 %v1942
  %v1985 = vunpack.c.h.b16 %v1942
  %v1986 = vunpack.c.l.b16 %v1943
  %v1987 = vunpack.c.h.b16 %v1943
  %v1988 = vunpack.c.l.b16 %v1944
  %v1989 = vunpack.c.h.b16 %v1944
  %v1990 = vunpack.c.l.b16 %v1945
  %v1991 = vunpack.c.h.b16 %v1945
  %v1992 = vunpack.c.l.b16 %v1946
  %v1993 = vunpack.c.h.b16 %v1946
  %v1994 = vunpack.c.l.b16 %v1947
  %v1995 = vunpack.c.h.b16 %v1947
  %v1996 = vpack.c.b16 %v1966, %v1964
  %v1997 = vpack.c.b16 %v1967, %v1965
  %v1998 = vpack.c.b16 %v1970, %v1968
  %v1999 = vpack.c.b16 %v1971, %v1969
  %v2000 = vpack.c.b16 %v1974, %v1972
  %v2001 = vpack.c.b16 %v1975, %v1973
  %v2002 = vpack.c.b16 %v1978, %v1976
  %v2003 = vpack.c.b16 %v1979, %v1977
  %v2004 = vpack.c.b16 %v1982, %v1980
  %v2005 = vpack.c.b16 %v1983, %v1981
  %v2006 = vpack.c.b16 %v1986, %v1984
  %v2007 = vpack.c.b16 %v1987, %v1985
  %v2008 = vpack.c.b16 %v1990, %v1988
  %v2009 = vpack.c.b16 %v1991, %v1989
  %v2010 = vpack.c.b16 %v1994, %v1992
  %v2011 = vpack.c.b16 %v1995, %v1993
  %2028 = vmatpush.bf16.msra.mxu0 %v2010
  %2029 = vmatpush.bf16.msra.mxu0 %v2008
  %2030 = vmatpush.bf16.msra.mxu0 %v2006
  %2031 = vmatpush.bf16.msra.mxu0 %v2004
  %2032 = vmatpush.bf16.msra.mxu0 %v2002
  %2033 = vmatpush.bf16.msra.mxu0 %v2000
  %2034 = vmatpush.bf16.msra.mxu0 %v1998
  %2035 = vmatpush.bf16.msra.mxu0 %v1996
  %2036 = vmatmul.bf16.gmra.mxu0 %v1928
  %v2037 = vpop.f32.mrf.mxu0
  %v2038 = vadd.f32 0.0, %v2037
  %v2039 = vpop.f32.mrf.mxu0
  %v2040 = vadd.f32 0.0, %v2039
  %2041 = vmatmul.bf16.gmra.mxu0 %v1929
  %v2042 = vpop.f32.mrf.mxu0
  %v2043 = vadd.f32 0.0, %v2042
  %v2044 = vpop.f32.mrf.mxu0
  %v2045 = vadd.f32 0.0, %v2044
  %2046 = vmatmul.bf16.gmra.mxu0 %v1930
  %v2047 = vpop.f32.mrf.mxu0
  %v2048 = vadd.f32 0.0, %v2047
  %v2049 = vpop.f32.mrf.mxu0
  %v2050 = vadd.f32 0.0, %v2049
  %2051 = vmatmul.bf16.gmra.mxu0 %v1931
  %v2052 = vpop.f32.mrf.mxu0
  %v2053 = vadd.f32 0.0, %v2052
  %v2054 = vpop.f32.mrf.mxu0
  %v2055 = vadd.f32 0.0, %v2054
  %2056 = vdwg.mxu0
  %2057 = vmatpush.bf16.msra.mxu0 %v2011
  %2058 = vmatpush.bf16.msra.mxu0 %v2009
  %2059 = vmatpush.bf16.msra.mxu0 %v2007
  %2060 = vmatpush.bf16.msra.mxu0 %v2005
  %2061 = vmatpush.bf16.msra.mxu0 %v2003
  %2062 = vmatpush.bf16.msra.mxu0 %v2001
  %2063 = vmatpush.bf16.msra.mxu0 %v1999
  %2064 = vmatpush.bf16.msra.mxu0 %v1997
  %2065 = vmatmul.bf16.gmra.mxu0 %v1928
  %v2066 = vpop.f32.mrf.mxu0
  %v2067 = vadd.f32 0.0, %v2066
  %v2068 = vpop.f32.mrf.mxu0
  %v2069 = vadd.f32 0.0, %v2068
  %2070 = vmatmul.bf16.gmra.mxu0 %v1929
  %v2071 = vpop.f32.mrf.mxu0
  %v2072 = vadd.f32 0.0, %v2071
  %v2073 = vpop.f32.mrf.mxu0
  %v2074 = vadd.f32 0.0, %v2073
  %2075 = vmatmul.bf16.gmra.mxu0 %v1930
  %v2076 = vpop.f32.mrf.mxu0
  %v2077 = vadd.f32 0.0, %v2076
  %v2078 = vpop.f32.mrf.mxu0
  %v2079 = vadd.f32 0.0, %v2078
  %2080 = vmatmul.bf16.gmra.mxu0 %v1931
  %v2081 = vpop.f32.mrf.mxu0
  %v2082 = vadd.f32 0.0, %v2081
  %v2083 = vpop.f32.mrf.mxu0
  %v2084 = vadd.f32 0.0, %v2083
  %2085 = vdwg.mxu0
  %v2086 = vpack.c.bf16 %v2040, %v2038
  %v2087 = vpack.c.bf16 %v2045, %v2043
  %v2088 = vpack.c.bf16 %v2050, %v2048
  %v2089 = vpack.c.bf16 %v2055, %v2053
  %v2090 = vperm.slane %v490, 1
  %v2091 = vperm.slane %v510, 1
  %v2092 = vmul.f32 %v452, %v2090
  %v2093 = vmul.f32 %v453, %v2091
  %v2094 = vmul.f32 %v454, %v2090
  %v2095 = vmul.f32 %v455, %v2091
  %v2096 = vmul.f32 %v456, %v2090
  %v2097 = vmul.f32 %v457, %v2091
  %v2098 = vmul.f32 %v458, %v2090
  %v2099 = vmul.f32 %v459, %v2091
  %v2100 = vmul.f32 %v460, %v2090
  %v2101 = vmul.f32 %v461, %v2091
  %v2102 = vmul.f32 %v462, %v2090
  %v2103 = vmul.f32 %v463, %v2091
  %v2104 = vmul.f32 %v464, %v2090
  %v2105 = vmul.f32 %v465, %v2091
  %v2106 = vmul.f32 %v466, %v2090
  %v2107 = vmul.f32 %v467, %v2091
  %v2108 = vpack.c.bf16 %v2094, %v2092
  %v2109 = vpack.c.bf16 %v2095, %v2093
  %v2110 = vpack.c.bf16 %v2098, %v2096
  %v2111 = vpack.c.bf16 %v2099, %v2097
  %v2112 = vpack.c.bf16 %v2102, %v2100
  %v2113 = vpack.c.bf16 %v2103, %v2101
  %v2114 = vpack.c.bf16 %v2106, %v2104
  %v2115 = vpack.c.bf16 %v2107, %v2105
  %2116 = vmatpush.bf16.msra.mxu0 %v1684
  %2117 = vmatpush.bf16.msra.mxu0 %v1683
  %2118 = vmatpush.bf16.msra.mxu0 %v1682
  %2119 = vmatpush.bf16.msra.mxu0 %v1681
  %2120 = vmatpush.bf16.msra.mxu0 %v1680
  %2121 = vmatpush.bf16.msra.mxu0 %v1679
  %2122 = vmatpush.bf16.msra.mxu0 %v1678
  %2123 = vmatpush.bf16.msra.mxu0 %v1677
  %2124 = vmatmul.bf16.gmra.mxu0 %v2108
  %v2125 = vpop.f32.mrf.mxu0
  %v2126 = vadd.f32 0.0, %v2125
  %v2127 = vpop.f32.mrf.mxu0
  %v2128 = vadd.f32 0.0, %v2127
  %2129 = vmatmul.bf16.gmra.mxu0 %v2110
  %v2130 = vpop.f32.mrf.mxu0
  %v2131 = vadd.f32 0.0, %v2130
  %v2132 = vpop.f32.mrf.mxu0
  %v2133 = vadd.f32 0.0, %v2132
  %2134 = vmatmul.bf16.gmra.mxu0 %v2112
  %v2135 = vpop.f32.mrf.mxu0
  %v2136 = vadd.f32 0.0, %v2135
  %v2137 = vpop.f32.mrf.mxu0
  %v2138 = vadd.f32 0.0, %v2137
  %2139 = vmatmul.bf16.gmra.mxu0 %v2114
  %v2140 = vpop.f32.mrf.mxu0
  %v2141 = vadd.f32 0.0, %v2140
  %v2142 = vpop.f32.mrf.mxu0
  %v2143 = vadd.f32 0.0, %v2142
  %2144 = vdwg.mxu0
  %2145 = vmatpush.bf16.msra.mxu0 %v1692
  %2146 = vmatpush.bf16.msra.mxu0 %v1691
  %2147 = vmatpush.bf16.msra.mxu0 %v1690
  %2148 = vmatpush.bf16.msra.mxu0 %v1689
  %2149 = vmatpush.bf16.msra.mxu0 %v1688
  %2150 = vmatpush.bf16.msra.mxu0 %v1687
  %2151 = vmatpush.bf16.msra.mxu0 %v1686
  %2152 = vmatpush.bf16.msra.mxu0 %v1685
  %2153 = vmatmul.bf16.gmra.mxu0 %v2109
  %v2154 = vpop.f32.mrf.mxu0
  %v2155 = vadd.f32 %v2126, %v2154
  %v2156 = vpop.f32.mrf.mxu0
  %v2157 = vadd.f32 %v2128, %v2156
  %2158 = vmatmul.bf16.gmra.mxu0 %v2111
  %v2159 = vpop.f32.mrf.mxu0
  %v2160 = vadd.f32 %v2131, %v2159
  %v2161 = vpop.f32.mrf.mxu0
  %v2162 = vadd.f32 %v2133, %v2161
  %2163 = vmatmul.bf16.gmra.mxu0 %v2113
  %v2164 = vpop.f32.mrf.mxu0
  %v2165 = vadd.f32 %v2136, %v2164
  %v2166 = vpop.f32.mrf.mxu0
  %v2167 = vadd.f32 %v2138, %v2166
  %2168 = vmatmul.bf16.gmra.mxu0 %v2115
  %v2169 = vpop.f32.mrf.mxu0
  %v2170 = vadd.f32 %v2141, %v2169
  %v2171 = vpop.f32.mrf.mxu0
  %v2172 = vadd.f32 %v2143, %v2171
  %2173 = vdwg.mxu0
  %v2174 = vpack.c.bf16 %v2157, %v2155
  %v2175 = vpack.c.bf16 %v2162, %v2160
  %v2176 = vpack.c.bf16 %v2167, %v2165
  %v2177 = vpack.c.bf16 %v2172, %v2170
  %v2179 = vsel %vm345, %v2174, 0
  %v2182 = vsel %vm345, %v2175, 0
  %v2185 = vsel %vm345, %v2176, 0
  %v2188 = vsel %vm345, %v2177, 0
  %2190 = vmatpush.bf16.msra.mxu0 0
  %2191 = vmatpush.bf16.msra.mxu0 0
  %2192 = vmatpush.bf16.msra.mxu0 0
  %2193 = vmatpush.bf16.msra.mxu0 0
  %2194 = vmatpush.bf16.msra.mxu0 %v2089
  %2195 = vmatpush.bf16.msra.mxu0 %v2088
  %2196 = vmatpush.bf16.msra.mxu0 %v2087
  %2197 = vmatpush.bf16.msra.mxu0 %v2086
  %2198 = vmatmul.bf16.gmra.mxu0 %v2179
  %v2199 = vpop.f32.mrf.mxu0
  %v2200 = vadd.f32 %v2067, %v2199
  %v2201 = vpop.f32.mrf.mxu0
  %v2202 = vadd.f32 %v2069, %v2201
  %2203 = vmatmul.bf16.gmra.mxu0 %v2182
  %v2204 = vpop.f32.mrf.mxu0
  %v2205 = vadd.f32 %v2072, %v2204
  %v2206 = vpop.f32.mrf.mxu0
  %v2207 = vadd.f32 %v2074, %v2206
  %2208 = vmatmul.bf16.gmra.mxu0 %v2185
  %v2209 = vpop.f32.mrf.mxu0
  %v2210 = vadd.f32 %v2077, %v2209
  %v2211 = vpop.f32.mrf.mxu0
  %v2212 = vadd.f32 %v2079, %v2211
  %2213 = vmatmul.bf16.gmra.mxu0 %v2188
  %v2214 = vpop.f32.mrf.mxu0
  %v2215 = vadd.f32 %v2082, %v2214
  %v2216 = vpop.f32.mrf.mxu0
  %v2217 = vadd.f32 %v2084, %v2216
  %2218 = vdwg.mxu0
  %v2219 = vperm.slane %v512, 1
  %v2220 = vadd.f32 %v2200, %v2219
  %v2221 = vadd.f32 %v2202, %v2219
  %v2222 = vadd.f32 %v2205, %v2219
  %v2223 = vadd.f32 %v2207, %v2219
  %v2224 = vadd.f32 %v2210, %v2219
  %v2225 = vadd.f32 %v2212, %v2219
  %v2226 = vadd.f32 %v2215, %v2219
  %v2227 = vadd.f32 %v2217, %v2219
  %v2228 = vadd.f32 %v2220, %v1813
  %v2229 = vadd.f32 %v2221, %v1814
  %v2230 = vadd.f32 %v2222, %v1815
  %v2231 = vadd.f32 %v2223, %v1816
  %v2232 = vadd.f32 %v2224, %v1817
  %v2233 = vadd.f32 %v2225, %v1818
  %v2234 = vadd.f32 %v2226, %v1819
  %v2235 = vadd.f32 %v2227, %v1820
  %v2236 = vadd.f32 %v2228, %v2229
  %v2237 = vadd.f32 %v2236, %v2230
  %v2238 = vadd.f32 %v2237, %v2231
  %v2239 = vadd.f32 %v2238, %v2232
  %v2240 = vadd.f32 %v2239, %v2233
  %v2241 = vadd.f32 %v2240, %v2234
  %v2242 = vadd.f32 %v2241, %v2235
  %v2243 = vrot.slane %v2242, 4
  %v2244 = vadd.f32 %v2242, %v2243
  %v2245 = vrot.slane %v2244, 2
  %v2246 = vadd.f32 %v2244, %v2245
  %v2247 = vrot.slane %v2246, 1
  %v2248 = vadd.f32 %v2246, %v2247
  %v2249 = vmul.f32 %v2248, 0.015625
  %v2250 = vmul.f32 %v2228, %v2228
  %v2251 = vmul.f32 %v2229, %v2229
  %v2252 = vmul.f32 %v2230, %v2230
  %v2253 = vmul.f32 %v2231, %v2231
  %v2254 = vmul.f32 %v2232, %v2232
  %v2255 = vmul.f32 %v2233, %v2233
  %v2256 = vmul.f32 %v2234, %v2234
  %v2257 = vmul.f32 %v2235, %v2235
  %v2258 = vadd.f32 %v2250, %v2251
  %v2259 = vadd.f32 %v2258, %v2252
  %v2260 = vadd.f32 %v2259, %v2253
  %v2261 = vadd.f32 %v2260, %v2254
  %v2262 = vadd.f32 %v2261, %v2255
  %v2263 = vadd.f32 %v2262, %v2256
  %v2264 = vadd.f32 %v2263, %v2257
  %v2265 = vrot.slane %v2264, 4
  %v2266 = vadd.f32 %v2264, %v2265
  %v2267 = vrot.slane %v2266, 2
  %v2268 = vadd.f32 %v2266, %v2267
  %v2269 = vrot.slane %v2268, 1
  %v2270 = vadd.f32 %v2268, %v2269
  %v2271 = vmul.f32 %v2270, 0.015625
  %v2272 = vmul.f32 %v2249, %v2249
  %v2273 = vsub.f32 %v2271, %v2272
  %v2274 = vsub.f32 %v2228, %v2249
  %v2275 = vsub.f32 %v2229, %v2249
  %v2276 = vsub.f32 %v2230, %v2249
  %v2277 = vsub.f32 %v2231, %v2249
  %v2278 = vsub.f32 %v2232, %v2249
  %v2279 = vsub.f32 %v2233, %v2249
  %v2280 = vsub.f32 %v2234, %v2249
  %v2281 = vsub.f32 %v2235, %v2249
  %v2282 = vadd.f32 %v2273, 1e-05
  %v2283 = vrsqrt.pop %v2282
  %v2284 = vmul.f32 %v2283, %v2282
  %v2285 = vmul.f32 %v2284, %v2283
  %v2286 = vmul.f32 0.5, %v2285
  %v2287 = vsub.f32 1.5, %v2286
  %v2288 = vmul.f32 %v2283, %v2287
  %vm2289 = vweird.f32 %v2282
  %vm2290 = vweird.f32 %v2283
  %vm2291 = vmor %vm2289, %vm2290
  %v2292 = vsel %vm2291, %v2283, %v2288
  %v2293 = vmul.f32 %v2274, %v2292
  %v2294 = vmul.f32 %v2275, %v2292
  %v2295 = vmul.f32 %v2276, %v2292
  %v2296 = vmul.f32 %v2277, %v2292
  %v2297 = vmul.f32 %v2278, %v2292
  %v2298 = vmul.f32 %v2279, %v2292
  %v2299 = vmul.f32 %v2280, %v2292
  %v2300 = vmul.f32 %v2281, %v2292
  %v2301 = vperm.slane %v513, 1
  %v2302 = vmul.f32 %v2293, %v2301
  %v2303 = vmul.f32 %v2294, %v2301
  %v2304 = vmul.f32 %v2295, %v2301
  %v2305 = vmul.f32 %v2296, %v2301
  %v2306 = vmul.f32 %v2297, %v2301
  %v2307 = vmul.f32 %v2298, %v2301
  %v2308 = vmul.f32 %v2299, %v2301
  %v2309 = vmul.f32 %v2300, %v2301
  %v2310 = vperm.slane %v514, 1
  %v2311 = vadd.f32 %v2302, %v2310
  %v2312 = vadd.f32 %v2303, %v2310
  %v2313 = vadd.f32 %v2304, %v2310
  %v2314 = vadd.f32 %v2305, %v2310
  %v2315 = vadd.f32 %v2306, %v2310
  %v2316 = vadd.f32 %v2307, %v2310
  %v2317 = vadd.f32 %v2308, %v2310
  %v2318 = vadd.f32 %v2309, %v2310
  %vm2319 = vcmp.ge.f32.partialorder %v2311, 0.0
  %vm2320 = vcmp.ge.f32.partialorder %v2312, 0.0
  %vm2321 = vcmp.ge.f32.partialorder %v2313, 0.0
  %vm2322 = vcmp.ge.f32.partialorder %v2314, 0.0
  %vm2323 = vcmp.ge.f32.partialorder %v2315, 0.0
  %vm2324 = vcmp.ge.f32.partialorder %v2316, 0.0
  %vm2325 = vcmp.ge.f32.partialorder %v2317, 0.0
  %vm2326 = vcmp.ge.f32.partialorder %v2318, 0.0
  %v2327 = vmul.f32 %v2311, 0.1
  %v2328 = vmul.f32 %v2312, 0.1
  %v2329 = vmul.f32 %v2313, 0.1
  %v2330 = vmul.f32 %v2314, 0.1
  %v2331 = vmul.f32 %v2315, 0.1
  %v2332 = vmul.f32 %v2316, 0.1
  %v2333 = vmul.f32 %v2317, 0.1
  %v2334 = vmul.f32 %v2318, 0.1
  %v2335 = vsel %vm2319, %v2311, %v2327
  %v2336 = vsel %vm2320, %v2312, %v2328
  %v2337 = vsel %vm2321, %v2313, %v2329
  %v2338 = vsel %vm2322, %v2314, %v2330
  %v2339 = vsel %vm2323, %v2315, %v2331
  %v2340 = vsel %vm2324, %v2316, %v2332
  %v2341 = vsel %vm2325, %v2317, %v2333
  %v2342 = vsel %vm2326, %v2318, %v2334
  %v2343 = vpack.c.bf16 %v2336, %v2335
  %v2344 = vpack.c.bf16 %v2338, %v2337
  %v2345 = vpack.c.bf16 %v2340, %v2339
  %v2346 = vpack.c.bf16 %v2342, %v2341
  %s2347 = scalar_lea.vmem %s2, 128
  %v2348 = vld [vmem:[%s2347] sm:$0xff]
  %v2349 = vld [vmem:[%s2347 + $0x8] sm:$0xff]
  %v2350 = vld [vmem:[%s2347 + $0x10] sm:$0xff]
  %v2351 = vld [vmem:[%s2347 + $0x18] sm:$0xff]
  %v2352 = vld [vmem:[%s2347 + $0x20] sm:$0xff]
  %v2353 = vld [vmem:[%s2347 + $0x28] sm:$0xff]
  %v2354 = vld [vmem:[%s2347 + $0x30] sm:$0xff]
  %v2355 = vld [vmem:[%s2347 + $0x38] sm:$0xff]
  %v2356 = vld [vmem:[%s2347 + $0x40] sm:$0xff]
  %v2357 = vld [vmem:[%s2347 + $0x48] sm:$0xff]
  %v2358 = vld [vmem:[%s2347 + $0x50] sm:$0xff]
  %v2359 = vld [vmem:[%s2347 + $0x58] sm:$0xff]
  %v2360 = vld [vmem:[%s2347 + $0x60] sm:$0xff]
  %v2361 = vld [vmem:[%s2347 + $0x68] sm:$0xff]
  %v2362 = vld [vmem:[%s2347 + $0x70] sm:$0xff]
  %v2363 = vld [vmem:[%s2347 + $0x78] sm:$0xff]
  %v2380 = vunpack.c.l.b16 %v2348
  %v2381 = vunpack.c.h.b16 %v2348
  %v2382 = vunpack.c.l.b16 %v2349
  %v2383 = vunpack.c.h.b16 %v2349
  %v2384 = vunpack.c.l.b16 %v2350
  %v2385 = vunpack.c.h.b16 %v2350
  %v2386 = vunpack.c.l.b16 %v2351
  %v2387 = vunpack.c.h.b16 %v2351
  %v2388 = vunpack.c.l.b16 %v2352
  %v2389 = vunpack.c.h.b16 %v2352
  %v2390 = vunpack.c.l.b16 %v2353
  %v2391 = vunpack.c.h.b16 %v2353
  %v2392 = vunpack.c.l.b16 %v2354
  %v2393 = vunpack.c.h.b16 %v2354
  %v2394 = vunpack.c.l.b16 %v2355
  %v2395 = vunpack.c.h.b16 %v2355
  %v2396 = vunpack.c.l.b16 %v2356
  %v2397 = vunpack.c.h.b16 %v2356
  %v2398 = vunpack.c.l.b16 %v2357
  %v2399 = vunpack.c.h.b16 %v2357
  %v2400 = vunpack.c.l.b16 %v2358
  %v2401 = vunpack.c.h.b16 %v2358
  %v2402 = vunpack.c.l.b16 %v2359
  %v2403 = vunpack.c.h.b16 %v2359
  %v2404 = vunpack.c.l.b16 %v2360
  %v2405 = vunpack.c.h.b16 %v2360
  %v2406 = vunpack.c.l.b16 %v2361
  %v2407 = vunpack.c.h.b16 %v2361
  %v2408 = vunpack.c.l.b16 %v2362
  %v2409 = vunpack.c.h.b16 %v2362
  %v2410 = vunpack.c.l.b16 %v2363
  %v2411 = vunpack.c.h.b16 %v2363
  %v2412 = vpack.c.b16 %v2382, %v2380
  %v2413 = vpack.c.b16 %v2383, %v2381
  %v2414 = vpack.c.b16 %v2386, %v2384
  %v2415 = vpack.c.b16 %v2387, %v2385
  %v2416 = vpack.c.b16 %v2390, %v2388
  %v2417 = vpack.c.b16 %v2391, %v2389
  %v2418 = vpack.c.b16 %v2394, %v2392
  %v2419 = vpack.c.b16 %v2395, %v2393
  %v2420 = vpack.c.b16 %v2398, %v2396
  %v2421 = vpack.c.b16 %v2399, %v2397
  %v2422 = vpack.c.b16 %v2402, %v2400
  %v2423 = vpack.c.b16 %v2403, %v2401
  %v2424 = vpack.c.b16 %v2406, %v2404
  %v2425 = vpack.c.b16 %v2407, %v2405
  %v2426 = vpack.c.b16 %v2410, %v2408
  %v2427 = vpack.c.b16 %v2411, %v2409
  %2444 = vmatpush.bf16.msra.mxu0 %v2426
  %2445 = vmatpush.bf16.msra.mxu0 %v2424
  %2446 = vmatpush.bf16.msra.mxu0 %v2422
  %2447 = vmatpush.bf16.msra.mxu0 %v2420
  %2448 = vmatpush.bf16.msra.mxu0 %v2418
  %2449 = vmatpush.bf16.msra.mxu0 %v2416
  %2450 = vmatpush.bf16.msra.mxu0 %v2414
  %2451 = vmatpush.bf16.msra.mxu0 %v2412
  %2452 = vmatmul.bf16.gmra.mxu0 %v2343
  %v2453 = vpop.f32.mrf.mxu0
  %v2454 = vadd.f32 0.0, %v2453
  %v2455 = vpop.f32.mrf.mxu0
  %v2456 = vadd.f32 0.0, %v2455
  %2457 = vmatmul.bf16.gmra.mxu0 %v2344
  %v2458 = vpop.f32.mrf.mxu0
  %v2459 = vadd.f32 0.0, %v2458
  %v2460 = vpop.f32.mrf.mxu0
  %v2461 = vadd.f32 0.0, %v2460
  %2462 = vmatmul.bf16.gmra.mxu0 %v2345
  %v2463 = vpop.f32.mrf.mxu0
  %v2464 = vadd.f32 0.0, %v2463
  %v2465 = vpop.f32.mrf.mxu0
  %v2466 = vadd.f32 0.0, %v2465
  %2467 = vmatmul.bf16.gmra.mxu0 %v2346
  %v2468 = vpop.f32.mrf.mxu0
  %v2469 = vadd.f32 0.0, %v2468
  %v2470 = vpop.f32.mrf.mxu0
  %v2471 = vadd.f32 0.0, %v2470
  %2472 = vdwg.mxu0
  %2473 = vmatpush.bf16.msra.mxu0 %v2427
  %2474 = vmatpush.bf16.msra.mxu0 %v2425
  %2475 = vmatpush.bf16.msra.mxu0 %v2423
  %2476 = vmatpush.bf16.msra.mxu0 %v2421
  %2477 = vmatpush.bf16.msra.mxu0 %v2419
  %2478 = vmatpush.bf16.msra.mxu0 %v2417
  %2479 = vmatpush.bf16.msra.mxu0 %v2415
  %2480 = vmatpush.bf16.msra.mxu0 %v2413
  %2481 = vmatmul.bf16.gmra.mxu0 %v2343
  %v2482 = vpop.f32.mrf.mxu0
  %v2483 = vadd.f32 0.0, %v2482
  %v2484 = vpop.f32.mrf.mxu0
  %v2485 = vadd.f32 0.0, %v2484
  %2486 = vmatmul.bf16.gmra.mxu0 %v2344
  %v2487 = vpop.f32.mrf.mxu0
  %v2488 = vadd.f32 0.0, %v2487
  %v2489 = vpop.f32.mrf.mxu0
  %v2490 = vadd.f32 0.0, %v2489
  %2491 = vmatmul.bf16.gmra.mxu0 %v2345
  %v2492 = vpop.f32.mrf.mxu0
  %v2493 = vadd.f32 0.0, %v2492
  %v2494 = vpop.f32.mrf.mxu0
  %v2495 = vadd.f32 0.0, %v2494
  %2496 = vmatmul.bf16.gmra.mxu0 %v2346
  %v2497 = vpop.f32.mrf.mxu0
  %v2498 = vadd.f32 0.0, %v2497
  %v2499 = vpop.f32.mrf.mxu0
  %v2500 = vadd.f32 0.0, %v2499
  %2501 = vdwg.mxu0
  %v2502 = vpack.c.bf16 %v2456, %v2454
  %v2503 = vpack.c.bf16 %v2461, %v2459
  %v2504 = vpack.c.bf16 %v2466, %v2464
  %v2505 = vpack.c.bf16 %v2471, %v2469
  %v2506 = vperm.slane %v490, 2
  %v2507 = vperm.slane %v510, 2
  %v2508 = vmul.f32 %v452, %v2506
  %v2509 = vmul.f32 %v453, %v2507
  %v2510 = vmul.f32 %v454, %v2506
  %v2511 = vmul.f32 %v455, %v2507
  %v2512 = vmul.f32 %v456, %v2506
  %v2513 = vmul.f32 %v457, %v2507
  %v2514 = vmul.f32 %v458, %v2506
  %v2515 = vmul.f32 %v459, %v2507
  %v2516 = vmul.f32 %v460, %v2506
  %v2517 = vmul.f32 %v461, %v2507
  %v2518 = vmul.f32 %v462, %v2506
  %v2519 = vmul.f32 %v463, %v2507
  %v2520 = vmul.f32 %v464, %v2506
  %v2521 = vmul.f32 %v465, %v2507
  %v2522 = vmul.f32 %v466, %v2506
  %v2523 = vmul.f32 %v467, %v2507
  %v2524 = vpack.c.bf16 %v2510, %v2508
  %v2525 = vpack.c.bf16 %v2511, %v2509
  %v2526 = vpack.c.bf16 %v2514, %v2512
  %v2527 = vpack.c.bf16 %v2515, %v2513
  %v2528 = vpack.c.bf16 %v2518, %v2516
  %v2529 = vpack.c.bf16 %v2519, %v2517
  %v2530 = vpack.c.bf16 %v2522, %v2520
  %v2531 = vpack.c.bf16 %v2523, %v2521
  %2532 = vmatpush.bf16.msra.mxu0 %v1684
  %2533 = vmatpush.bf16.msra.mxu0 %v1683
  %2534 = vmatpush.bf16.msra.mxu0 %v1682
  %2535 = vmatpush.bf16.msra.mxu0 %v1681
  %2536 = vmatpush.bf16.msra.mxu0 %v1680
  %2537 = vmatpush.bf16.msra.mxu0 %v1679
  %2538 = vmatpush.bf16.msra.mxu0 %v1678
  %2539 = vmatpush.bf16.msra.mxu0 %v1677
  %2540 = vmatmul.bf16.gmra.mxu0 %v2524
  %v2541 = vpop.f32.mrf.mxu0
  %v2542 = vadd.f32 0.0, %v2541
  %v2543 = vpop.f32.mrf.mxu0
  %v2544 = vadd.f32 0.0, %v2543
  %2545 = vmatmul.bf16.gmra.mxu0 %v2526
  %v2546 = vpop.f32.mrf.mxu0
  %v2547 = vadd.f32 0.0, %v2546
  %v2548 = vpop.f32.mrf.mxu0
  %v2549 = vadd.f32 0.0, %v2548
  %2550 = vmatmul.bf16.gmra.mxu0 %v2528
  %v2551 = vpop.f32.mrf.mxu0
  %v2552 = vadd.f32 0.0, %v2551
  %v2553 = vpop.f32.mrf.mxu0
  %v2554 = vadd.f32 0.0, %v2553
  %2555 = vmatmul.bf16.gmra.mxu0 %v2530
  %v2556 = vpop.f32.mrf.mxu0
  %v2557 = vadd.f32 0.0, %v2556
  %v2558 = vpop.f32.mrf.mxu0
  %v2559 = vadd.f32 0.0, %v2558
  %2560 = vdwg.mxu0
  %2561 = vmatpush.bf16.msra.mxu0 %v1692
  %2562 = vmatpush.bf16.msra.mxu0 %v1691
  %2563 = vmatpush.bf16.msra.mxu0 %v1690
  %2564 = vmatpush.bf16.msra.mxu0 %v1689
  %2565 = vmatpush.bf16.msra.mxu0 %v1688
  %2566 = vmatpush.bf16.msra.mxu0 %v1687
  %2567 = vmatpush.bf16.msra.mxu0 %v1686
  %2568 = vmatpush.bf16.msra.mxu0 %v1685
  %2569 = vmatmul.bf16.gmra.mxu0 %v2525
  %v2570 = vpop.f32.mrf.mxu0
  %v2571 = vadd.f32 %v2542, %v2570
  %v2572 = vpop.f32.mrf.mxu0
  %v2573 = vadd.f32 %v2544, %v2572
  %2574 = vmatmul.bf16.gmra.mxu0 %v2527
  %v2575 = vpop.f32.mrf.mxu0
  %v2576 = vadd.f32 %v2547, %v2575
  %v2577 = vpop.f32.mrf.mxu0
  %v2578 = vadd.f32 %v2549, %v2577
  %2579 = vmatmul.bf16.gmra.mxu0 %v2529
  %v2580 = vpop.f32.mrf.mxu0
  %v2581 = vadd.f32 %v2552, %v2580
  %v2582 = vpop.f32.mrf.mxu0
  %v2583 = vadd.f32 %v2554, %v2582
  %2584 = vmatmul.bf16.gmra.mxu0 %v2531
  %v2585 = vpop.f32.mrf.mxu0
  %v2586 = vadd.f32 %v2557, %v2585
  %v2587 = vpop.f32.mrf.mxu0
  %v2588 = vadd.f32 %v2559, %v2587
  %2589 = vdwg.mxu0
  %v2590 = vpack.c.bf16 %v2573, %v2571
  %v2591 = vpack.c.bf16 %v2578, %v2576
  %v2592 = vpack.c.bf16 %v2583, %v2581
  %v2593 = vpack.c.bf16 %v2588, %v2586
  %v2595 = vsel %vm345, %v2590, 0
  %v2598 = vsel %vm345, %v2591, 0
  %v2601 = vsel %vm345, %v2592, 0
  %v2604 = vsel %vm345, %v2593, 0
  %2606 = vmatpush.bf16.msra.mxu0 0
  %2607 = vmatpush.bf16.msra.mxu0 0
  %2608 = vmatpush.bf16.msra.mxu0 0
  %2609 = vmatpush.bf16.msra.mxu0 0
  %2610 = vmatpush.bf16.msra.mxu0 %v2505
  %2611 = vmatpush.bf16.msra.mxu0 %v2504
  %2612 = vmatpush.bf16.msra.mxu0 %v2503
  %2613 = vmatpush.bf16.msra.mxu0 %v2502
  %2614 = vmatmul.bf16.gmra.mxu0 %v2595
  %v2615 = vpop.f32.mrf.mxu0
  %v2616 = vadd.f32 %v2483, %v2615
  %v2617 = vpop.f32.mrf.mxu0
  %v2618 = vadd.f32 %v2485, %v2617
  %2619 = vmatmul.bf16.gmra.mxu0 %v2598
  %v2620 = vpop.f32.mrf.mxu0
  %v2621 = vadd.f32 %v2488, %v2620
  %v2622 = vpop.f32.mrf.mxu0
  %v2623 = vadd.f32 %v2490, %v2622
  %2624 = vmatmul.bf16.gmra.mxu0 %v2601
  %v2625 = vpop.f32.mrf.mxu0
  %v2626 = vadd.f32 %v2493, %v2625
  %v2627 = vpop.f32.mrf.mxu0
  %v2628 = vadd.f32 %v2495, %v2627
  %2629 = vmatmul.bf16.gmra.mxu0 %v2604
  %v2630 = vpop.f32.mrf.mxu0
  %v2631 = vadd.f32 %v2498, %v2630
  %v2632 = vpop.f32.mrf.mxu0
  %v2633 = vadd.f32 %v2500, %v2632
  %2634 = vdwg.mxu0
  %v2635 = vperm.slane %v512, 2
  %v2636 = vadd.f32 %v2616, %v2635
  %v2637 = vadd.f32 %v2618, %v2635
  %v2638 = vadd.f32 %v2621, %v2635
  %v2639 = vadd.f32 %v2623, %v2635
  %v2640 = vadd.f32 %v2626, %v2635
  %v2641 = vadd.f32 %v2628, %v2635
  %v2642 = vadd.f32 %v2631, %v2635
  %v2643 = vadd.f32 %v2633, %v2635
  %v2644 = vadd.f32 %v2636, %v2228
  %v2645 = vadd.f32 %v2637, %v2229
  %v2646 = vadd.f32 %v2638, %v2230
  %v2647 = vadd.f32 %v2639, %v2231
  %v2648 = vadd.f32 %v2640, %v2232
  %v2649 = vadd.f32 %v2641, %v2233
  %v2650 = vadd.f32 %v2642, %v2234
  %v2651 = vadd.f32 %v2643, %v2235
  %v2652 = vadd.f32 %v2644, %v2645
  %v2653 = vadd.f32 %v2652, %v2646
  %v2654 = vadd.f32 %v2653, %v2647
  %v2655 = vadd.f32 %v2654, %v2648
  %v2656 = vadd.f32 %v2655, %v2649
  %v2657 = vadd.f32 %v2656, %v2650
  %v2658 = vadd.f32 %v2657, %v2651
  %v2659 = vrot.slane %v2658, 4
  %v2660 = vadd.f32 %v2658, %v2659
  %v2661 = vrot.slane %v2660, 2
  %v2662 = vadd.f32 %v2660, %v2661
  %v2663 = vrot.slane %v2662, 1
  %v2664 = vadd.f32 %v2662, %v2663
  %v2665 = vmul.f32 %v2664, 0.015625
  %v2666 = vmul.f32 %v2644, %v2644
  %v2667 = vmul.f32 %v2645, %v2645
  %v2668 = vmul.f32 %v2646, %v2646
  %v2669 = vmul.f32 %v2647, %v2647
  %v2670 = vmul.f32 %v2648, %v2648
  %v2671 = vmul.f32 %v2649, %v2649
  %v2672 = vmul.f32 %v2650, %v2650
  %v2673 = vmul.f32 %v2651, %v2651
  %v2674 = vadd.f32 %v2666, %v2667
  %v2675 = vadd.f32 %v2674, %v2668
  %v2676 = vadd.f32 %v2675, %v2669
  %v2677 = vadd.f32 %v2676, %v2670
  %v2678 = vadd.f32 %v2677, %v2671
  %v2679 = vadd.f32 %v2678, %v2672
  %v2680 = vadd.f32 %v2679, %v2673
  %v2681 = vrot.slane %v2680, 4
  %v2682 = vadd.f32 %v2680, %v2681
  %v2683 = vrot.slane %v2682, 2
  %v2684 = vadd.f32 %v2682, %v2683
  %v2685 = vrot.slane %v2684, 1
  %v2686 = vadd.f32 %v2684, %v2685
  %v2687 = vmul.f32 %v2686, 0.015625
  %v2688 = vmul.f32 %v2665, %v2665
  %v2689 = vsub.f32 %v2687, %v2688
  %v2690 = vsub.f32 %v2644, %v2665
  %v2691 = vsub.f32 %v2645, %v2665
  %v2692 = vsub.f32 %v2646, %v2665
  %v2693 = vsub.f32 %v2647, %v2665
  %v2694 = vsub.f32 %v2648, %v2665
  %v2695 = vsub.f32 %v2649, %v2665
  %v2696 = vsub.f32 %v2650, %v2665
  %v2697 = vsub.f32 %v2651, %v2665
  %v2698 = vadd.f32 %v2689, 1e-05
  %v2699 = vrsqrt.pop %v2698
  %v2700 = vmul.f32 %v2699, %v2698
  %v2701 = vmul.f32 %v2700, %v2699
  %v2702 = vmul.f32 0.5, %v2701
  %v2703 = vsub.f32 1.5, %v2702
  %v2704 = vmul.f32 %v2699, %v2703
  %vm2705 = vweird.f32 %v2698
  %vm2706 = vweird.f32 %v2699
  %vm2707 = vmor %vm2705, %vm2706
  %v2708 = vsel %vm2707, %v2699, %v2704
  %v2709 = vmul.f32 %v2690, %v2708
  %v2710 = vmul.f32 %v2691, %v2708
  %v2711 = vmul.f32 %v2692, %v2708
  %v2712 = vmul.f32 %v2693, %v2708
  %v2713 = vmul.f32 %v2694, %v2708
  %v2714 = vmul.f32 %v2695, %v2708
  %v2715 = vmul.f32 %v2696, %v2708
  %v2716 = vmul.f32 %v2697, %v2708
  %v2717 = vperm.slane %v513, 2
  %v2718 = vmul.f32 %v2709, %v2717
  %v2719 = vmul.f32 %v2710, %v2717
  %v2720 = vmul.f32 %v2711, %v2717
  %v2721 = vmul.f32 %v2712, %v2717
  %v2722 = vmul.f32 %v2713, %v2717
  %v2723 = vmul.f32 %v2714, %v2717
  %v2724 = vmul.f32 %v2715, %v2717
  %v2725 = vmul.f32 %v2716, %v2717
  %v2726 = vperm.slane %v514, 2
  %v2727 = vadd.f32 %v2718, %v2726
  %v2728 = vadd.f32 %v2719, %v2726
  %v2729 = vadd.f32 %v2720, %v2726
  %v2730 = vadd.f32 %v2721, %v2726
  %v2731 = vadd.f32 %v2722, %v2726
  %v2732 = vadd.f32 %v2723, %v2726
  %v2733 = vadd.f32 %v2724, %v2726
  %v2734 = vadd.f32 %v2725, %v2726
  %vm2735 = vcmp.ge.f32.partialorder %v2727, 0.0
  %vm2736 = vcmp.ge.f32.partialorder %v2728, 0.0
  %vm2737 = vcmp.ge.f32.partialorder %v2729, 0.0
  %vm2738 = vcmp.ge.f32.partialorder %v2730, 0.0
  %vm2739 = vcmp.ge.f32.partialorder %v2731, 0.0
  %vm2740 = vcmp.ge.f32.partialorder %v2732, 0.0
  %vm2741 = vcmp.ge.f32.partialorder %v2733, 0.0
  %vm2742 = vcmp.ge.f32.partialorder %v2734, 0.0
  %v2743 = vmul.f32 %v2727, 0.1
  %v2744 = vmul.f32 %v2728, 0.1
  %v2745 = vmul.f32 %v2729, 0.1
  %v2746 = vmul.f32 %v2730, 0.1
  %v2747 = vmul.f32 %v2731, 0.1
  %v2748 = vmul.f32 %v2732, 0.1
  %v2749 = vmul.f32 %v2733, 0.1
  %v2750 = vmul.f32 %v2734, 0.1
  %v2751 = vsel %vm2735, %v2727, %v2743
  %v2752 = vsel %vm2736, %v2728, %v2744
  %v2753 = vsel %vm2737, %v2729, %v2745
  %v2754 = vsel %vm2738, %v2730, %v2746
  %v2755 = vsel %vm2739, %v2731, %v2747
  %v2756 = vsel %vm2740, %v2732, %v2748
  %v2757 = vsel %vm2741, %v2733, %v2749
  %v2758 = vsel %vm2742, %v2734, %v2750
  %v2759 = vpack.c.bf16 %v2752, %v2751
  %v2760 = vpack.c.bf16 %v2754, %v2753
  %v2761 = vpack.c.bf16 %v2756, %v2755
  %v2762 = vpack.c.bf16 %v2758, %v2757
  %s2763 = scalar_lea.vmem %s2, 256
  %v2764 = vld [vmem:[%s2763] sm:$0xff]
  %v2765 = vld [vmem:[%s2763 + $0x8] sm:$0xff]
  %v2766 = vld [vmem:[%s2763 + $0x10] sm:$0xff]
  %v2767 = vld [vmem:[%s2763 + $0x18] sm:$0xff]
  %v2768 = vld [vmem:[%s2763 + $0x20] sm:$0xff]
  %v2769 = vld [vmem:[%s2763 + $0x28] sm:$0xff]
  %v2770 = vld [vmem:[%s2763 + $0x30] sm:$0xff]
  %v2771 = vld [vmem:[%s2763 + $0x38] sm:$0xff]
  %v2772 = vld [vmem:[%s2763 + $0x40] sm:$0xff]
  %v2773 = vld [vmem:[%s2763 + $0x48] sm:$0xff]
  %v2774 = vld [vmem:[%s2763 + $0x50] sm:$0xff]
  %v2775 = vld [vmem:[%s2763 + $0x58] sm:$0xff]
  %v2776 = vld [vmem:[%s2763 + $0x60] sm:$0xff]
  %v2777 = vld [vmem:[%s2763 + $0x68] sm:$0xff]
  %v2778 = vld [vmem:[%s2763 + $0x70] sm:$0xff]
  %v2779 = vld [vmem:[%s2763 + $0x78] sm:$0xff]
  %v2796 = vunpack.c.l.b16 %v2764
  %v2797 = vunpack.c.h.b16 %v2764
  %v2798 = vunpack.c.l.b16 %v2765
  %v2799 = vunpack.c.h.b16 %v2765
  %v2800 = vunpack.c.l.b16 %v2766
  %v2801 = vunpack.c.h.b16 %v2766
  %v2802 = vunpack.c.l.b16 %v2767
  %v2803 = vunpack.c.h.b16 %v2767
  %v2804 = vunpack.c.l.b16 %v2768
  %v2805 = vunpack.c.h.b16 %v2768
  %v2806 = vunpack.c.l.b16 %v2769
  %v2807 = vunpack.c.h.b16 %v2769
  %v2808 = vunpack.c.l.b16 %v2770
  %v2809 = vunpack.c.h.b16 %v2770
  %v2810 = vunpack.c.l.b16 %v2771
  %v2811 = vunpack.c.h.b16 %v2771
  %v2812 = vunpack.c.l.b16 %v2772
  %v2813 = vunpack.c.h.b16 %v2772
  %v2814 = vunpack.c.l.b16 %v2773
  %v2815 = vunpack.c.h.b16 %v2773
  %v2816 = vunpack.c.l.b16 %v2774
  %v2817 = vunpack.c.h.b16 %v2774
  %v2818 = vunpack.c.l.b16 %v2775
  %v2819 = vunpack.c.h.b16 %v2775
  %v2820 = vunpack.c.l.b16 %v2776
  %v2821 = vunpack.c.h.b16 %v2776
  %v2822 = vunpack.c.l.b16 %v2777
  %v2823 = vunpack.c.h.b16 %v2777
  %v2824 = vunpack.c.l.b16 %v2778
  %v2825 = vunpack.c.h.b16 %v2778
  %v2826 = vunpack.c.l.b16 %v2779
  %v2827 = vunpack.c.h.b16 %v2779
  %v2828 = vpack.c.b16 %v2798, %v2796
  %v2829 = vpack.c.b16 %v2799, %v2797
  %v2830 = vpack.c.b16 %v2802, %v2800
  %v2831 = vpack.c.b16 %v2803, %v2801
  %v2832 = vpack.c.b16 %v2806, %v2804
  %v2833 = vpack.c.b16 %v2807, %v2805
  %v2834 = vpack.c.b16 %v2810, %v2808
  %v2835 = vpack.c.b16 %v2811, %v2809
  %v2836 = vpack.c.b16 %v2814, %v2812
  %v2837 = vpack.c.b16 %v2815, %v2813
  %v2838 = vpack.c.b16 %v2818, %v2816
  %v2839 = vpack.c.b16 %v2819, %v2817
  %v2840 = vpack.c.b16 %v2822, %v2820
  %v2841 = vpack.c.b16 %v2823, %v2821
  %v2842 = vpack.c.b16 %v2826, %v2824
  %v2843 = vpack.c.b16 %v2827, %v2825
  %2860 = vmatpush.bf16.msra.mxu0 %v2842
  %2861 = vmatpush.bf16.msra.mxu0 %v2840
  %2862 = vmatpush.bf16.msra.mxu0 %v2838
  %2863 = vmatpush.bf16.msra.mxu0 %v2836
  %2864 = vmatpush.bf16.msra.mxu0 %v2834
  %2865 = vmatpush.bf16.msra.mxu0 %v2832
  %2866 = vmatpush.bf16.msra.mxu0 %v2830
  %2867 = vmatpush.bf16.msra.mxu0 %v2828
  %2868 = vmatmul.bf16.gmra.mxu0 %v2759
  %v2869 = vpop.f32.mrf.mxu0
  %v2870 = vadd.f32 0.0, %v2869
  %v2871 = vpop.f32.mrf.mxu0
  %v2872 = vadd.f32 0.0, %v2871
  %2873 = vmatmul.bf16.gmra.mxu0 %v2760
  %v2874 = vpop.f32.mrf.mxu0
  %v2875 = vadd.f32 0.0, %v2874
  %v2876 = vpop.f32.mrf.mxu0
  %v2877 = vadd.f32 0.0, %v2876
  %2878 = vmatmul.bf16.gmra.mxu0 %v2761
  %v2879 = vpop.f32.mrf.mxu0
  %v2880 = vadd.f32 0.0, %v2879
  %v2881 = vpop.f32.mrf.mxu0
  %v2882 = vadd.f32 0.0, %v2881
  %2883 = vmatmul.bf16.gmra.mxu0 %v2762
  %v2884 = vpop.f32.mrf.mxu0
  %v2885 = vadd.f32 0.0, %v2884
  %v2886 = vpop.f32.mrf.mxu0
  %v2887 = vadd.f32 0.0, %v2886
  %2888 = vdwg.mxu0
  %2889 = vmatpush.bf16.msra.mxu0 %v2843
  %2890 = vmatpush.bf16.msra.mxu0 %v2841
  %2891 = vmatpush.bf16.msra.mxu0 %v2839
  %2892 = vmatpush.bf16.msra.mxu0 %v2837
  %2893 = vmatpush.bf16.msra.mxu0 %v2835
  %2894 = vmatpush.bf16.msra.mxu0 %v2833
  %2895 = vmatpush.bf16.msra.mxu0 %v2831
  %2896 = vmatpush.bf16.msra.mxu0 %v2829
  %2897 = vmatmul.bf16.gmra.mxu0 %v2759
  %v2898 = vpop.f32.mrf.mxu0
  %v2899 = vadd.f32 0.0, %v2898
  %v2900 = vpop.f32.mrf.mxu0
  %v2901 = vadd.f32 0.0, %v2900
  %2902 = vmatmul.bf16.gmra.mxu0 %v2760
  %v2903 = vpop.f32.mrf.mxu0
  %v2904 = vadd.f32 0.0, %v2903
  %v2905 = vpop.f32.mrf.mxu0
  %v2906 = vadd.f32 0.0, %v2905
  %2907 = vmatmul.bf16.gmra.mxu0 %v2761
  %v2908 = vpop.f32.mrf.mxu0
  %v2909 = vadd.f32 0.0, %v2908
  %v2910 = vpop.f32.mrf.mxu0
  %v2911 = vadd.f32 0.0, %v2910
  %2912 = vmatmul.bf16.gmra.mxu0 %v2762
  %v2913 = vpop.f32.mrf.mxu0
  %v2914 = vadd.f32 0.0, %v2913
  %v2915 = vpop.f32.mrf.mxu0
  %v2916 = vadd.f32 0.0, %v2915
  %2917 = vdwg.mxu0
  %v2918 = vpack.c.bf16 %v2872, %v2870
  %v2919 = vpack.c.bf16 %v2877, %v2875
  %v2920 = vpack.c.bf16 %v2882, %v2880
  %v2921 = vpack.c.bf16 %v2887, %v2885
  %v2922 = vperm.slane %v490, 3
  %v2923 = vperm.slane %v510, 3
  %v2924 = vmul.f32 %v452, %v2922
  %v2925 = vmul.f32 %v453, %v2923
  %v2926 = vmul.f32 %v454, %v2922
  %v2927 = vmul.f32 %v455, %v2923
  %v2928 = vmul.f32 %v456, %v2922
  %v2929 = vmul.f32 %v457, %v2923
  %v2930 = vmul.f32 %v458, %v2922
  %v2931 = vmul.f32 %v459, %v2923
  %v2932 = vmul.f32 %v460, %v2922
  %v2933 = vmul.f32 %v461, %v2923
  %v2934 = vmul.f32 %v462, %v2922
  %v2935 = vmul.f32 %v463, %v2923
  %v2936 = vmul.f32 %v464, %v2922
  %v2937 = vmul.f32 %v465, %v2923
  %v2938 = vmul.f32 %v466, %v2922
  %v2939 = vmul.f32 %v467, %v2923
  %v2940 = vpack.c.bf16 %v2926, %v2924
  %v2941 = vpack.c.bf16 %v2927, %v2925
  %v2942 = vpack.c.bf16 %v2930, %v2928
  %v2943 = vpack.c.bf16 %v2931, %v2929
  %v2944 = vpack.c.bf16 %v2934, %v2932
  %v2945 = vpack.c.bf16 %v2935, %v2933
  %v2946 = vpack.c.bf16 %v2938, %v2936
  %v2947 = vpack.c.bf16 %v2939, %v2937
  %2948 = vmatpush.bf16.msra.mxu0 %v1684
  %2949 = vmatpush.bf16.msra.mxu0 %v1683
  %2950 = vmatpush.bf16.msra.mxu0 %v1682
  %2951 = vmatpush.bf16.msra.mxu0 %v1681
  %2952 = vmatpush.bf16.msra.mxu0 %v1680
  %2953 = vmatpush.bf16.msra.mxu0 %v1679
  %2954 = vmatpush.bf16.msra.mxu0 %v1678
  %2955 = vmatpush.bf16.msra.mxu0 %v1677
  %2956 = vmatmul.bf16.gmra.mxu0 %v2940
  %v2957 = vpop.f32.mrf.mxu0
  %v2958 = vadd.f32 0.0, %v2957
  %v2959 = vpop.f32.mrf.mxu0
  %v2960 = vadd.f32 0.0, %v2959
  %2961 = vmatmul.bf16.gmra.mxu0 %v2942
  %v2962 = vpop.f32.mrf.mxu0
  %v2963 = vadd.f32 0.0, %v2962
  %v2964 = vpop.f32.mrf.mxu0
  %v2965 = vadd.f32 0.0, %v2964
  %2966 = vmatmul.bf16.gmra.mxu0 %v2944
  %v2967 = vpop.f32.mrf.mxu0
  %v2968 = vadd.f32 0.0, %v2967
  %v2969 = vpop.f32.mrf.mxu0
  %v2970 = vadd.f32 0.0, %v2969
  %2971 = vmatmul.bf16.gmra.mxu0 %v2946
  %v2972 = vpop.f32.mrf.mxu0
  %v2973 = vadd.f32 0.0, %v2972
  %v2974 = vpop.f32.mrf.mxu0
  %v2975 = vadd.f32 0.0, %v2974
  %2976 = vdwg.mxu0
  %2977 = vmatpush.bf16.msra.mxu0 %v1692
  %2978 = vmatpush.bf16.msra.mxu0 %v1691
  %2979 = vmatpush.bf16.msra.mxu0 %v1690
  %2980 = vmatpush.bf16.msra.mxu0 %v1689
  %2981 = vmatpush.bf16.msra.mxu0 %v1688
  %2982 = vmatpush.bf16.msra.mxu0 %v1687
  %2983 = vmatpush.bf16.msra.mxu0 %v1686
  %2984 = vmatpush.bf16.msra.mxu0 %v1685
  %2985 = vmatmul.bf16.gmra.mxu0 %v2941
  %v2986 = vpop.f32.mrf.mxu0
  %v2987 = vadd.f32 %v2958, %v2986
  %v2988 = vpop.f32.mrf.mxu0
  %v2989 = vadd.f32 %v2960, %v2988
  %2990 = vmatmul.bf16.gmra.mxu0 %v2943
  %v2991 = vpop.f32.mrf.mxu0
  %v2992 = vadd.f32 %v2963, %v2991
  %v2993 = vpop.f32.mrf.mxu0
  %v2994 = vadd.f32 %v2965, %v2993
  %2995 = vmatmul.bf16.gmra.mxu0 %v2945
  %v2996 = vpop.f32.mrf.mxu0
  %v2997 = vadd.f32 %v2968, %v2996
  %v2998 = vpop.f32.mrf.mxu0
  %v2999 = vadd.f32 %v2970, %v2998
  %3000 = vmatmul.bf16.gmra.mxu0 %v2947
  %v3001 = vpop.f32.mrf.mxu0
  %v3002 = vadd.f32 %v2973, %v3001
  %v3003 = vpop.f32.mrf.mxu0
  %v3004 = vadd.f32 %v2975, %v3003
  %3005 = vdwg.mxu0
  %v3006 = vpack.c.bf16 %v2989, %v2987
  %v3007 = vpack.c.bf16 %v2994, %v2992
  %v3008 = vpack.c.bf16 %v2999, %v2997
  %v3009 = vpack.c.bf16 %v3004, %v3002
  %v3011 = vsel %vm345, %v3006, 0
  %v3014 = vsel %vm345, %v3007, 0
  %v3017 = vsel %vm345, %v3008, 0
  %v3020 = vsel %vm345, %v3009, 0
  %3022 = vmatpush.bf16.msra.mxu0 0
  %3023 = vmatpush.bf16.msra.mxu0 0
  %3024 = vmatpush.bf16.msra.mxu0 0
  %3025 = vmatpush.bf16.msra.mxu0 0
  %3026 = vmatpush.bf16.msra.mxu0 %v2921
  %3027 = vmatpush.bf16.msra.mxu0 %v2920
  %3028 = vmatpush.bf16.msra.mxu0 %v2919
  %3029 = vmatpush.bf16.msra.mxu0 %v2918
  %3030 = vmatmul.bf16.gmra.mxu0 %v3011
  %v3031 = vpop.f32.mrf.mxu0
  %v3032 = vadd.f32 %v2899, %v3031
  %v3033 = vpop.f32.mrf.mxu0
  %v3034 = vadd.f32 %v2901, %v3033
  %3035 = vmatmul.bf16.gmra.mxu0 %v3014
  %v3036 = vpop.f32.mrf.mxu0
  %v3037 = vadd.f32 %v2904, %v3036
  %v3038 = vpop.f32.mrf.mxu0
  %v3039 = vadd.f32 %v2906, %v3038
  %3040 = vmatmul.bf16.gmra.mxu0 %v3017
  %v3041 = vpop.f32.mrf.mxu0
  %v3042 = vadd.f32 %v2909, %v3041
  %v3043 = vpop.f32.mrf.mxu0
  %v3044 = vadd.f32 %v2911, %v3043
  %3045 = vmatmul.bf16.gmra.mxu0 %v3020
  %v3046 = vpop.f32.mrf.mxu0
  %v3047 = vadd.f32 %v2914, %v3046
  %v3048 = vpop.f32.mrf.mxu0
  %v3049 = vadd.f32 %v2916, %v3048
  %3050 = vdwg.mxu0
  %v3051 = vperm.slane %v512, 3
  %v3052 = vadd.f32 %v3032, %v3051
  %v3053 = vadd.f32 %v3034, %v3051
  %v3054 = vadd.f32 %v3037, %v3051
  %v3055 = vadd.f32 %v3039, %v3051
  %v3056 = vadd.f32 %v3042, %v3051
  %v3057 = vadd.f32 %v3044, %v3051
  %v3058 = vadd.f32 %v3047, %v3051
  %v3059 = vadd.f32 %v3049, %v3051
  %v3060 = vadd.f32 %v3052, %v2644
  %v3061 = vadd.f32 %v3053, %v2645
  %v3062 = vadd.f32 %v3054, %v2646
  %v3063 = vadd.f32 %v3055, %v2647
  %v3064 = vadd.f32 %v3056, %v2648
  %v3065 = vadd.f32 %v3057, %v2649
  %v3066 = vadd.f32 %v3058, %v2650
  %v3067 = vadd.f32 %v3059, %v2651
  %v3068 = vadd.f32 %v3060, %v3061
  %v3069 = vadd.f32 %v3068, %v3062
  %v3070 = vadd.f32 %v3069, %v3063
  %v3071 = vadd.f32 %v3070, %v3064
  %v3072 = vadd.f32 %v3071, %v3065
  %v3073 = vadd.f32 %v3072, %v3066
  %v3074 = vadd.f32 %v3073, %v3067
  %v3075 = vrot.slane %v3074, 4
  %v3076 = vadd.f32 %v3074, %v3075
  %v3077 = vrot.slane %v3076, 2
  %v3078 = vadd.f32 %v3076, %v3077
  %v3079 = vrot.slane %v3078, 1
  %v3080 = vadd.f32 %v3078, %v3079
  %v3081 = vmul.f32 %v3080, 0.015625
  %v3082 = vmul.f32 %v3060, %v3060
  %v3083 = vmul.f32 %v3061, %v3061
  %v3084 = vmul.f32 %v3062, %v3062
  %v3085 = vmul.f32 %v3063, %v3063
  %v3086 = vmul.f32 %v3064, %v3064
  %v3087 = vmul.f32 %v3065, %v3065
  %v3088 = vmul.f32 %v3066, %v3066
  %v3089 = vmul.f32 %v3067, %v3067
  %v3090 = vadd.f32 %v3082, %v3083
  %v3091 = vadd.f32 %v3090, %v3084
  %v3092 = vadd.f32 %v3091, %v3085
  %v3093 = vadd.f32 %v3092, %v3086
  %v3094 = vadd.f32 %v3093, %v3087
  %v3095 = vadd.f32 %v3094, %v3088
  %v3096 = vadd.f32 %v3095, %v3089
  %v3097 = vrot.slane %v3096, 4
  %v3098 = vadd.f32 %v3096, %v3097
  %v3099 = vrot.slane %v3098, 2
  %v3100 = vadd.f32 %v3098, %v3099
  %v3101 = vrot.slane %v3100, 1
  %v3102 = vadd.f32 %v3100, %v3101
  %v3103 = vmul.f32 %v3102, 0.015625
  %v3104 = vmul.f32 %v3081, %v3081
  %v3105 = vsub.f32 %v3103, %v3104
  %v3106 = vsub.f32 %v3060, %v3081
  %v3107 = vsub.f32 %v3061, %v3081
  %v3108 = vsub.f32 %v3062, %v3081
  %v3109 = vsub.f32 %v3063, %v3081
  %v3110 = vsub.f32 %v3064, %v3081
  %v3111 = vsub.f32 %v3065, %v3081
  %v3112 = vsub.f32 %v3066, %v3081
  %v3113 = vsub.f32 %v3067, %v3081
  %v3114 = vadd.f32 %v3105, 1e-05
  %v3115 = vrsqrt.pop %v3114
  %v3116 = vmul.f32 %v3115, %v3114
  %v3117 = vmul.f32 %v3116, %v3115
  %v3118 = vmul.f32 0.5, %v3117
  %v3119 = vsub.f32 1.5, %v3118
  %v3120 = vmul.f32 %v3115, %v3119
  %vm3121 = vweird.f32 %v3114
  %vm3122 = vweird.f32 %v3115
  %vm3123 = vmor %vm3121, %vm3122
  %v3124 = vsel %vm3123, %v3115, %v3120
  %v3125 = vmul.f32 %v3106, %v3124
  %v3126 = vmul.f32 %v3107, %v3124
  %v3127 = vmul.f32 %v3108, %v3124
  %v3128 = vmul.f32 %v3109, %v3124
  %v3129 = vmul.f32 %v3110, %v3124
  %v3130 = vmul.f32 %v3111, %v3124
  %v3131 = vmul.f32 %v3112, %v3124
  %v3132 = vmul.f32 %v3113, %v3124
  %v3133 = vperm.slane %v513, 3
  %v3134 = vmul.f32 %v3125, %v3133
  %v3135 = vmul.f32 %v3126, %v3133
  %v3136 = vmul.f32 %v3127, %v3133
  %v3137 = vmul.f32 %v3128, %v3133
  %v3138 = vmul.f32 %v3129, %v3133
  %v3139 = vmul.f32 %v3130, %v3133
  %v3140 = vmul.f32 %v3131, %v3133
  %v3141 = vmul.f32 %v3132, %v3133
  %v3142 = vperm.slane %v514, 3
  %v3143 = vadd.f32 %v3134, %v3142
  %v3144 = vadd.f32 %v3135, %v3142
  %v3145 = vadd.f32 %v3136, %v3142
  %v3146 = vadd.f32 %v3137, %v3142
  %v3147 = vadd.f32 %v3138, %v3142
  %v3148 = vadd.f32 %v3139, %v3142
  %v3149 = vadd.f32 %v3140, %v3142
  %v3150 = vadd.f32 %v3141, %v3142
  %vm3151 = vcmp.ge.f32.partialorder %v3143, 0.0
  %vm3152 = vcmp.ge.f32.partialorder %v3144, 0.0
  %vm3153 = vcmp.ge.f32.partialorder %v3145, 0.0
  %vm3154 = vcmp.ge.f32.partialorder %v3146, 0.0
  %vm3155 = vcmp.ge.f32.partialorder %v3147, 0.0
  %vm3156 = vcmp.ge.f32.partialorder %v3148, 0.0
  %vm3157 = vcmp.ge.f32.partialorder %v3149, 0.0
  %vm3158 = vcmp.ge.f32.partialorder %v3150, 0.0
  %v3159 = vmul.f32 %v3143, 0.1
  %v3160 = vmul.f32 %v3144, 0.1
  %v3161 = vmul.f32 %v3145, 0.1
  %v3162 = vmul.f32 %v3146, 0.1
  %v3163 = vmul.f32 %v3147, 0.1
  %v3164 = vmul.f32 %v3148, 0.1
  %v3165 = vmul.f32 %v3149, 0.1
  %v3166 = vmul.f32 %v3150, 0.1
  %v3167 = vsel %vm3151, %v3143, %v3159
  %v3168 = vsel %vm3152, %v3144, %v3160
  %v3169 = vsel %vm3153, %v3145, %v3161
  %v3170 = vsel %vm3154, %v3146, %v3162
  %v3171 = vsel %vm3155, %v3147, %v3163
  %v3172 = vsel %vm3156, %v3148, %v3164
  %v3173 = vsel %vm3157, %v3149, %v3165
  %v3174 = vsel %vm3158, %v3150, %v3166
  %v3175 = vpack.c.bf16 %v3168, %v3167
  %v3176 = vpack.c.bf16 %v3170, %v3169
  %v3177 = vpack.c.bf16 %v3172, %v3171
  %v3178 = vpack.c.bf16 %v3174, %v3173
  %s3179 = scalar_lea.vmem %s2, 384
  %v3180 = vld [vmem:[%s3179] sm:$0xff]
  %v3181 = vld [vmem:[%s3179 + $0x8] sm:$0xff]
  %v3182 = vld [vmem:[%s3179 + $0x10] sm:$0xff]
  %v3183 = vld [vmem:[%s3179 + $0x18] sm:$0xff]
  %v3184 = vld [vmem:[%s3179 + $0x20] sm:$0xff]
  %v3185 = vld [vmem:[%s3179 + $0x28] sm:$0xff]
  %v3186 = vld [vmem:[%s3179 + $0x30] sm:$0xff]
  %v3187 = vld [vmem:[%s3179 + $0x38] sm:$0xff]
  %v3188 = vld [vmem:[%s3179 + $0x40] sm:$0xff]
  %v3189 = vld [vmem:[%s3179 + $0x48] sm:$0xff]
  %v3190 = vld [vmem:[%s3179 + $0x50] sm:$0xff]
  %v3191 = vld [vmem:[%s3179 + $0x58] sm:$0xff]
  %v3192 = vld [vmem:[%s3179 + $0x60] sm:$0xff]
  %v3193 = vld [vmem:[%s3179 + $0x68] sm:$0xff]
  %v3194 = vld [vmem:[%s3179 + $0x70] sm:$0xff]
  %v3195 = vld [vmem:[%s3179 + $0x78] sm:$0xff]
  %v3212 = vunpack.c.l.b16 %v3180
  %v3213 = vunpack.c.h.b16 %v3180
  %v3214 = vunpack.c.l.b16 %v3181
  %v3215 = vunpack.c.h.b16 %v3181
  %v3216 = vunpack.c.l.b16 %v3182
  %v3217 = vunpack.c.h.b16 %v3182
  %v3218 = vunpack.c.l.b16 %v3183
  %v3219 = vunpack.c.h.b16 %v3183
  %v3220 = vunpack.c.l.b16 %v3184
  %v3221 = vunpack.c.h.b16 %v3184
  %v3222 = vunpack.c.l.b16 %v3185
  %v3223 = vunpack.c.h.b16 %v3185
  %v3224 = vunpack.c.l.b16 %v3186
  %v3225 = vunpack.c.h.b16 %v3186
  %v3226 = vunpack.c.l.b16 %v3187
  %v3227 = vunpack.c.h.b16 %v3187
  %v3228 = vunpack.c.l.b16 %v3188
  %v3229 = vunpack.c.h.b16 %v3188
  %v3230 = vunpack.c.l.b16 %v3189
  %v3231 = vunpack.c.h.b16 %v3189
  %v3232 = vunpack.c.l.b16 %v3190
  %v3233 = vunpack.c.h.b16 %v3190
  %v3234 = vunpack.c.l.b16 %v3191
  %v3235 = vunpack.c.h.b16 %v3191
  %v3236 = vunpack.c.l.b16 %v3192
  %v3237 = vunpack.c.h.b16 %v3192
  %v3238 = vunpack.c.l.b16 %v3193
  %v3239 = vunpack.c.h.b16 %v3193
  %v3240 = vunpack.c.l.b16 %v3194
  %v3241 = vunpack.c.h.b16 %v3194
  %v3242 = vunpack.c.l.b16 %v3195
  %v3243 = vunpack.c.h.b16 %v3195
  %v3244 = vpack.c.b16 %v3214, %v3212
  %v3245 = vpack.c.b16 %v3215, %v3213
  %v3246 = vpack.c.b16 %v3218, %v3216
  %v3247 = vpack.c.b16 %v3219, %v3217
  %v3248 = vpack.c.b16 %v3222, %v3220
  %v3249 = vpack.c.b16 %v3223, %v3221
  %v3250 = vpack.c.b16 %v3226, %v3224
  %v3251 = vpack.c.b16 %v3227, %v3225
  %v3252 = vpack.c.b16 %v3230, %v3228
  %v3253 = vpack.c.b16 %v3231, %v3229
  %v3254 = vpack.c.b16 %v3234, %v3232
  %v3255 = vpack.c.b16 %v3235, %v3233
  %v3256 = vpack.c.b16 %v3238, %v3236
  %v3257 = vpack.c.b16 %v3239, %v3237
  %v3258 = vpack.c.b16 %v3242, %v3240
  %v3259 = vpack.c.b16 %v3243, %v3241
  %3276 = vmatpush.bf16.msra.mxu0 %v3258
  %3277 = vmatpush.bf16.msra.mxu0 %v3256
  %3278 = vmatpush.bf16.msra.mxu0 %v3254
  %3279 = vmatpush.bf16.msra.mxu0 %v3252
  %3280 = vmatpush.bf16.msra.mxu0 %v3250
  %3281 = vmatpush.bf16.msra.mxu0 %v3248
  %3282 = vmatpush.bf16.msra.mxu0 %v3246
  %3283 = vmatpush.bf16.msra.mxu0 %v3244
  %3284 = vmatmul.bf16.gmra.mxu0 %v3175
  %v3285 = vpop.f32.mrf.mxu0
  %v3286 = vadd.f32 0.0, %v3285
  %v3287 = vpop.f32.mrf.mxu0
  %v3288 = vadd.f32 0.0, %v3287
  %3289 = vmatmul.bf16.gmra.mxu0 %v3176
  %v3290 = vpop.f32.mrf.mxu0
  %v3291 = vadd.f32 0.0, %v3290
  %v3292 = vpop.f32.mrf.mxu0
  %v3293 = vadd.f32 0.0, %v3292
  %3294 = vmatmul.bf16.gmra.mxu0 %v3177
  %v3295 = vpop.f32.mrf.mxu0
  %v3296 = vadd.f32 0.0, %v3295
  %v3297 = vpop.f32.mrf.mxu0
  %v3298 = vadd.f32 0.0, %v3297
  %3299 = vmatmul.bf16.gmra.mxu0 %v3178
  %v3300 = vpop.f32.mrf.mxu0
  %v3301 = vadd.f32 0.0, %v3300
  %v3302 = vpop.f32.mrf.mxu0
  %v3303 = vadd.f32 0.0, %v3302
  %3304 = vdwg.mxu0
  %3305 = vmatpush.bf16.msra.mxu0 %v3259
  %3306 = vmatpush.bf16.msra.mxu0 %v3257
  %3307 = vmatpush.bf16.msra.mxu0 %v3255
  %3308 = vmatpush.bf16.msra.mxu0 %v3253
  %3309 = vmatpush.bf16.msra.mxu0 %v3251
  %3310 = vmatpush.bf16.msra.mxu0 %v3249
  %3311 = vmatpush.bf16.msra.mxu0 %v3247
  %3312 = vmatpush.bf16.msra.mxu0 %v3245
  %3313 = vmatmul.bf16.gmra.mxu0 %v3175
  %v3314 = vpop.f32.mrf.mxu0
  %v3315 = vadd.f32 0.0, %v3314
  %v3316 = vpop.f32.mrf.mxu0
  %v3317 = vadd.f32 0.0, %v3316
  %3318 = vmatmul.bf16.gmra.mxu0 %v3176
  %v3319 = vpop.f32.mrf.mxu0
  %v3320 = vadd.f32 0.0, %v3319
  %v3321 = vpop.f32.mrf.mxu0
  %v3322 = vadd.f32 0.0, %v3321
  %3323 = vmatmul.bf16.gmra.mxu0 %v3177
  %v3324 = vpop.f32.mrf.mxu0
  %v3325 = vadd.f32 0.0, %v3324
  %v3326 = vpop.f32.mrf.mxu0
  %v3327 = vadd.f32 0.0, %v3326
  %3328 = vmatmul.bf16.gmra.mxu0 %v3178
  %v3329 = vpop.f32.mrf.mxu0
  %v3330 = vadd.f32 0.0, %v3329
  %v3331 = vpop.f32.mrf.mxu0
  %v3332 = vadd.f32 0.0, %v3331
  %3333 = vdwg.mxu0
  %v3334 = vpack.c.bf16 %v3288, %v3286
  %v3335 = vpack.c.bf16 %v3293, %v3291
  %v3336 = vpack.c.bf16 %v3298, %v3296
  %v3337 = vpack.c.bf16 %v3303, %v3301
  %v3338 = vperm.slane %v490, 4
  %v3339 = vperm.slane %v510, 4
  %v3340 = vmul.f32 %v452, %v3338
  %v3341 = vmul.f32 %v453, %v3339
  %v3342 = vmul.f32 %v454, %v3338
  %v3343 = vmul.f32 %v455, %v3339
  %v3344 = vmul.f32 %v456, %v3338
  %v3345 = vmul.f32 %v457, %v3339
  %v3346 = vmul.f32 %v458, %v3338
  %v3347 = vmul.f32 %v459, %v3339
  %v3348 = vmul.f32 %v460, %v3338
  %v3349 = vmul.f32 %v461, %v3339
  %v3350 = vmul.f32 %v462, %v3338
  %v3351 = vmul.f32 %v463, %v3339
  %v3352 = vmul.f32 %v464, %v3338
  %v3353 = vmul.f32 %v465, %v3339
  %v3354 = vmul.f32 %v466, %v3338
  %v3355 = vmul.f32 %v467, %v3339
  %v3356 = vpack.c.bf16 %v3342, %v3340
  %v3357 = vpack.c.bf16 %v3343, %v3341
  %v3358 = vpack.c.bf16 %v3346, %v3344
  %v3359 = vpack.c.bf16 %v3347, %v3345
  %v3360 = vpack.c.bf16 %v3350, %v3348
  %v3361 = vpack.c.bf16 %v3351, %v3349
  %v3362 = vpack.c.bf16 %v3354, %v3352
  %v3363 = vpack.c.bf16 %v3355, %v3353
  %3364 = vmatpush.bf16.msra.mxu0 %v1684
  %3365 = vmatpush.bf16.msra.mxu0 %v1683
  %3366 = vmatpush.bf16.msra.mxu0 %v1682
  %3367 = vmatpush.bf16.msra.mxu0 %v1681
  %3368 = vmatpush.bf16.msra.mxu0 %v1680
  %3369 = vmatpush.bf16.msra.mxu0 %v1679
  %3370 = vmatpush.bf16.msra.mxu0 %v1678
  %3371 = vmatpush.bf16.msra.mxu0 %v1677
  %3372 = vmatmul.bf16.gmra.mxu0 %v3356
  %v3373 = vpop.f32.mrf.mxu0
  %v3374 = vadd.f32 0.0, %v3373
  %v3375 = vpop.f32.mrf.mxu0
  %v3376 = vadd.f32 0.0, %v3375
  %3377 = vmatmul.bf16.gmra.mxu0 %v3358
  %v3378 = vpop.f32.mrf.mxu0
  %v3379 = vadd.f32 0.0, %v3378
  %v3380 = vpop.f32.mrf.mxu0
  %v3381 = vadd.f32 0.0, %v3380
  %3382 = vmatmul.bf16.gmra.mxu0 %v3360
  %v3383 = vpop.f32.mrf.mxu0
  %v3384 = vadd.f32 0.0, %v3383
  %v3385 = vpop.f32.mrf.mxu0
  %v3386 = vadd.f32 0.0, %v3385
  %3387 = vmatmul.bf16.gmra.mxu0 %v3362
  %v3388 = vpop.f32.mrf.mxu0
  %v3389 = vadd.f32 0.0, %v3388
  %v3390 = vpop.f32.mrf.mxu0
  %v3391 = vadd.f32 0.0, %v3390
  %3392 = vdwg.mxu0
  %3393 = vmatpush.bf16.msra.mxu0 %v1692
  %3394 = vmatpush.bf16.msra.mxu0 %v1691
  %3395 = vmatpush.bf16.msra.mxu0 %v1690
  %3396 = vmatpush.bf16.msra.mxu0 %v1689
  %3397 = vmatpush.bf16.msra.mxu0 %v1688
  %3398 = vmatpush.bf16.msra.mxu0 %v1687
  %3399 = vmatpush.bf16.msra.mxu0 %v1686
  %3400 = vmatpush.bf16.msra.mxu0 %v1685
  %3401 = vmatmul.bf16.gmra.mxu0 %v3357
  %v3402 = vpop.f32.mrf.mxu0
  %v3403 = vadd.f32 %v3374, %v3402
  %v3404 = vpop.f32.mrf.mxu0
  %v3405 = vadd.f32 %v3376, %v3404
  %3406 = vmatmul.bf16.gmra.mxu0 %v3359
  %v3407 = vpop.f32.mrf.mxu0
  %v3408 = vadd.f32 %v3379, %v3407
  %v3409 = vpop.f32.mrf.mxu0
  %v3410 = vadd.f32 %v3381, %v3409
  %3411 = vmatmul.bf16.gmra.mxu0 %v3361
  %v3412 = vpop.f32.mrf.mxu0
  %v3413 = vadd.f32 %v3384, %v3412
  %v3414 = vpop.f32.mrf.mxu0
  %v3415 = vadd.f32 %v3386, %v3414
  %3416 = vmatmul.bf16.gmra.mxu0 %v3363
  %v3417 = vpop.f32.mrf.mxu0
  %v3418 = vadd.f32 %v3389, %v3417
  %v3419 = vpop.f32.mrf.mxu0
  %v3420 = vadd.f32 %v3391, %v3419
  %3421 = vdwg.mxu0
  %v3422 = vpack.c.bf16 %v3405, %v3403
  %v3423 = vpack.c.bf16 %v3410, %v3408
  %v3424 = vpack.c.bf16 %v3415, %v3413
  %v3425 = vpack.c.bf16 %v3420, %v3418
  %v3427 = vsel %vm345, %v3422, 0
  %v3430 = vsel %vm345, %v3423, 0
  %v3433 = vsel %vm345, %v3424, 0
  %v3436 = vsel %vm345, %v3425, 0
  %3438 = vmatpush.bf16.msra.mxu0 0
  %3439 = vmatpush.bf16.msra.mxu0 0
  %3440 = vmatpush.bf16.msra.mxu0 0
  %3441 = vmatpush.bf16.msra.mxu0 0
  %3442 = vmatpush.bf16.msra.mxu0 %v3337
  %3443 = vmatpush.bf16.msra.mxu0 %v3336
  %3444 = vmatpush.bf16.msra.mxu0 %v3335
  %3445 = vmatpush.bf16.msra.mxu0 %v3334
  %3446 = vmatmul.bf16.gmra.mxu0 %v3427
  %v3447 = vpop.f32.mrf.mxu0
  %v3448 = vadd.f32 %v3315, %v3447
  %v3449 = vpop.f32.mrf.mxu0
  %v3450 = vadd.f32 %v3317, %v3449
  %3451 = vmatmul.bf16.gmra.mxu0 %v3430
  %v3452 = vpop.f32.mrf.mxu0
  %v3453 = vadd.f32 %v3320, %v3452
  %v3454 = vpop.f32.mrf.mxu0
  %v3455 = vadd.f32 %v3322, %v3454
  %3456 = vmatmul.bf16.gmra.mxu0 %v3433
  %v3457 = vpop.f32.mrf.mxu0
  %v3458 = vadd.f32 %v3325, %v3457
  %v3459 = vpop.f32.mrf.mxu0
  %v3460 = vadd.f32 %v3327, %v3459
  %3461 = vmatmul.bf16.gmra.mxu0 %v3436
  %v3462 = vpop.f32.mrf.mxu0
  %v3463 = vadd.f32 %v3330, %v3462
  %v3464 = vpop.f32.mrf.mxu0
  %v3465 = vadd.f32 %v3332, %v3464
  %3466 = vdwg.mxu0
  %v3467 = vperm.slane %v512, 4
  %v3468 = vadd.f32 %v3448, %v3467
  %v3469 = vadd.f32 %v3450, %v3467
  %v3470 = vadd.f32 %v3453, %v3467
  %v3471 = vadd.f32 %v3455, %v3467
  %v3472 = vadd.f32 %v3458, %v3467
  %v3473 = vadd.f32 %v3460, %v3467
  %v3474 = vadd.f32 %v3463, %v3467
  %v3475 = vadd.f32 %v3465, %v3467
  %vm3476 = vcmp.ge.f32.partialorder %v3468, 0.0
  %vm3477 = vcmp.ge.f32.partialorder %v3469, 0.0
  %vm3478 = vcmp.ge.f32.partialorder %v3470, 0.0
  %vm3479 = vcmp.ge.f32.partialorder %v3471, 0.0
  %vm3480 = vcmp.ge.f32.partialorder %v3472, 0.0
  %vm3481 = vcmp.ge.f32.partialorder %v3473, 0.0
  %vm3482 = vcmp.ge.f32.partialorder %v3474, 0.0
  %vm3483 = vcmp.ge.f32.partialorder %v3475, 0.0
  %v3484 = vmul.f32 %v3468, 0.1
  %v3485 = vmul.f32 %v3469, 0.1
  %v3486 = vmul.f32 %v3470, 0.1
  %v3487 = vmul.f32 %v3471, 0.1
  %v3488 = vmul.f32 %v3472, 0.1
  %v3489 = vmul.f32 %v3473, 0.1
  %v3490 = vmul.f32 %v3474, 0.1
  %v3491 = vmul.f32 %v3475, 0.1
  %v3492 = vsel %vm3476, %v3468, %v3484
  %v3493 = vsel %vm3477, %v3469, %v3485
  %v3494 = vsel %vm3478, %v3470, %v3486
  %v3495 = vsel %vm3479, %v3471, %v3487
  %v3496 = vsel %vm3480, %v3472, %v3488
  %v3497 = vsel %vm3481, %v3473, %v3489
  %v3498 = vsel %vm3482, %v3474, %v3490
  %v3499 = vsel %vm3483, %v3475, %v3491
  %3500 = vst [vmem:[%s11] sm:$0xff] %v3492
  %3501 = vst [vmem:[%s11 + $0x8] sm:$0xff] %v3493
  %3502 = vst [vmem:[%s11 + $0x10] sm:$0xff] %v3494
  %3503 = vst [vmem:[%s11 + $0x18] sm:$0xff] %v3495
  %3504 = vst [vmem:[%s11 + $0x20] sm:$0xff] %v3496
  %3505 = vst [vmem:[%s11 + $0x28] sm:$0xff] %v3497
  %3506 = vst [vmem:[%s11 + $0x30] sm:$0xff] %v3498
  %3507 = vst [vmem:[%s11 + $0x38] sm:$0xff] %v3499
  // Predicated region
  $region46: #{deep_rgcn_forward.1} parent=0 // pred_check
    _
  $region47: #{deep_rgcn_forward.1} parent=0 // pred_check_branch
    %3509 = sbr.rel (0) target = $region49
  $region48: #{deep_rgcn_forward.1} parent=0 // pred_region
    _
  $region49: #{deep_rgcn_forward.1} parent=0 // pred_fallthru
    _
  // Predicated region
  $region50: #{deep_rgcn_forward.1} parent=0 // pred_check
    _
  $region51: #{deep_rgcn_forward.1} parent=0 // pred_check_branch
    %3511 = sbr.rel (0) target = $region53
  $region52: #{deep_rgcn_forward.1} parent=0 // pred_region
    _
  $region53: #{deep_rgcn_forward.1} parent=0 // pred_fallthru
    _

</llo_original>
